<compile_context>
chip_gen: v6e
topology: v6e:2x2x1
jax: 0.10.0
libtpu: 0.0.40
codegen_flags: <defaults>
</compile_context>

<pallas_src>
import functools

import jax
import jax.numpy as jnp
from jax.experimental import pallas as pl
from jax.experimental.pallas import tpu as pltpu

INPUT_SIZE = 28
SEQ_LEN = 28
HIDDEN = 32
NUM_LAYERS = 2
NUM_CLASSES = 10
FC1_OUT = NUM_CLASSES * 2
BATCH = 8          # one full sublane tile; the kernel grids over batch blocks
BATCH_BLOCK = 8


def rnn_fc_kernel(x_ref,      # (1, S*BB, I)  rows ordered (t, b_local)
                  w0_ref,     # (I, H)        = W_ih_l0^T
                  b0_ref,     # (1, H)        = b_ih_l0 + b_hh_l0
                  whh0_ref,   # (H, H)        = W_hh_l0^T
                  w1_ref,     # (2H, H)       = [W_ih_l1^T ; W_hh_l1^T]
                  b1_ref,     # (1, H)        = b_ih_l1 + b_hh_l1
                  fc1w_ref,   # (S*H, FC1_OUT) = fc1.weight^T
                  fc1b_ref,   # (1, FC1_OUT)
                  fc2w_ref,   # (FC1_OUT, C)  = fc2.weight^T
                  fc2b_ref,   # (1, C)
                  out_ref):   # (BB, C)
    BB = out_ref.shape[0]
    S = x_ref.shape[1] // BB
    H = whh0_ref.shape[0]

    # Hoist all loop-invariant loads / broadcasts (one vld each, not per step).
    w0 = w0_ref[...]
    whh0 = whh0_ref[...]
    w1 = w1_ref[...]
    b1 = jnp.broadcast_to(b1_ref[...], (BB, H))

    # Layer-0 input projection for every time step in ONE batched matmul
    # (M = S*BB = 224): removes 28 dependent matmuls from the serial chain.
    x2 = x_ref[0]                                               # (S*BB, I)
    xw0 = jnp.dot(x2, w0, preferred_element_type=jnp.float32) + b0_ref[...]

    h1 = jnp.zeros((BB, H), jnp.float32)
    h2 = jnp.zeros((BB, H), jnp.float32)
    outs = []
    # Fully unrolled: S is static, slices below are static & 8-row aligned.
    for t in range(S):
        # layer 0: only the recurrent matmul remains on the serial chain.
        h1 = jnp.tanh(xw0[t * BB:(t + 1) * BB, :]
                      + jnp.dot(h1, whh0, preferred_element_type=jnp.float32))
        # layer 1: both matmuls fused along K (K = 2H = 64, one MXU tile).
        h12 = jnp.concatenate([h1, h2], axis=1)                 # (BB, 2H)
        h2 = jnp.tanh(jnp.dot(h12, w1, preferred_element_type=jnp.float32) + b1)
        outs.append(h2)

    # fc1 on the flattened sequence output: single K = S*H = 896 matmul.
    seq_flat = jnp.concatenate(outs, axis=1)                    # (BB, S*H)
    fc1 = (jnp.dot(seq_flat, fc1w_ref[...], preferred_element_type=jnp.float32)
           + fc1b_ref[...])
    out_ref[...] = (jnp.dot(fc1, fc2w_ref[...], preferred_element_type=jnp.float32)
                    + fc2b_ref[...])


@functools.partial(jax.jit, static_argnames=("batch_block",))
def rnn_forward(x, params, *, batch_block=BATCH_BLOCK):
    """x: (batch, seq, input) f32 -- same layout as the PyTorch batch_first RNN."""
    B, S, I = x.shape
    H = HIDDEN
    BB = batch_block
    B_pad = ((B + BB - 1) // BB) * BB
    if B_pad != B:
        x = jnp.pad(x, ((0, B_pad - B), (0, 0), (0, 0)))
    nb = B_pad // BB

    # Per batch-block, rows ordered (t, b_local): (nb, S*BB, I).
    xb = (x.reshape(nb, BB, S, I)
           .transpose(0, 2, 1, 3)
           .reshape(nb, S * BB, I))

    # Pre-transposed / pre-fused parameters (layout-only work, no extra GEMMs).
    w0 = params["w_ih_l0"].T                                    # (I, H)
    b0 = (params["b_ih_l0"] + params["b_hh_l0"]).reshape(1, -1)
    whh0 = params["w_hh_l0"].T                                  # (H, H)
    w1 = jnp.concatenate([params["w_ih_l1"].T, params["w_hh_l1"].T], axis=0)
    b1 = (params["b_ih_l1"] + params["b_hh_l1"]).reshape(1, -1)
    fc1w = params["fc1_w"].T                                    # (S*H, FC1_OUT)
    fc1b = params["fc1_b"].reshape(1, -1)
    fc2w = params["fc2_w"].T                                    # (FC1_OUT, C)
    fc2b = params["fc2_b"].reshape(1, -1)

    def full(shape):
        return pl.BlockSpec(shape, lambda i, _s=shape: (0,) * len(_s))

    out = pl.pallas_call(
        rnn_fc_kernel,
        out_shape=jax.ShapeDtypeStruct((B_pad, NUM_CLASSES), jnp.float32),
        grid=(nb,),
        in_specs=[
            pl.BlockSpec((1, S * BB, I), lambda i: (i, 0, 0)),  # x batch block
            full((I, H)),
            full((1, H)),
            full((H, H)),
            full((2 * H, H)),
            full((1, H)),
            full((S * H, FC1_OUT)),
            full((1, FC1_OUT)),
            full((FC1_OUT, NUM_CLASSES)),
            full((1, NUM_CLASSES)),
        ],
        out_specs=pl.BlockSpec((BB, NUM_CLASSES), lambda i: (i, 0)),
        compiler_params=pltpu.CompilerParams(
            dimension_semantics=("parallel",)),   # batch blocks shard on v7x
    )(xb, w0, b0, whh0, w1, b1, fc1w, fc1b, fc2w, fc2b)
    return out[:B]


def init_params(key):
    """Deterministic init mirroring PyTorch's default uniform(-1/sqrt(fan), 1/sqrt(fan))."""
    ks = jax.random.split(key, 12)
    k_rnn = 1.0 / jnp.sqrt(HIDDEN)
    k_fc1 = 1.0 / jnp.sqrt(SEQ_LEN * HIDDEN)
    k_fc2 = 1.0 / jnp.sqrt(FC1_OUT)
    u = lambda k, shape, lim: jax.random.uniform(k, shape, jnp.float32, -lim, lim)
    return {
        "w_ih_l0": u(ks[0], (HIDDEN, INPUT_SIZE), k_rnn),
        "w_hh_l0": u(ks[1], (HIDDEN, HIDDEN), k_rnn),
        "b_ih_l0": u(ks[2], (HIDDEN,), k_rnn),
        "b_hh_l0": u(ks[3], (HIDDEN,), k_rnn),
        "w_ih_l1": u(ks[4], (HIDDEN, HIDDEN), k_rnn),
        "w_hh_l1": u(ks[5], (HIDDEN, HIDDEN), k_rnn),
        "b_ih_l1": u(ks[6], (HIDDEN,), k_rnn),
        "b_hh_l1": u(ks[7], (HIDDEN,), k_rnn),
        "fc1_w": u(ks[8], (FC1_OUT, SEQ_LEN * HIDDEN), k_fc1),
        "fc1_b": u(ks[9], (FC1_OUT,), k_fc1),
        "fc2_w": u(ks[10], (NUM_CLASSES, FC1_OUT), k_fc2),
        "fc2_b": u(ks[11], (FC1_OUT // 2 * 0 + NUM_CLASSES,), k_fc2),
    }


def reference_forward(x, p):
    """Pure-JAX reference matching torch.nn.RNN(batch_first=True) + fc1 + fc2."""
    B, S, I = x.shape
    h1 = jnp.zeros((B, HIDDEN), jnp.float32)
    h2 = jnp.zeros((B, HIDDEN), jnp.float32)
    outs = []
    for t in range(S):
        xt = x[:, t, :]
        h1 = jnp.tanh(xt @ p["w_ih_l0"].T + p["b_ih_l0"]
                      + h1 @ p["w_hh_l0"].T + p["b_hh_l0"])
        h2 = jnp.tanh(h1 @ p["w_ih_l1"].T + p["b_ih_l1"]
                      + h2 @ p["w_hh_l1"].T + p["b_hh_l1"])
        outs.append(h2)
    out = jnp.stack(outs, axis=1).reshape(B, -1)                # (B, S*H)
    out = out @ p["fc1_w"].T + p["fc1_b"]
    out = out @ p["fc2_w"].T + p["fc2_b"]
    return out


if __name__ == "__main__":
    key = jax.random.PRNGKey(0)
    k_x, k_p = jax.random.split(key)
    x = jax.random.normal(k_x, (BATCH, SEQ_LEN, INPUT_SIZE), jnp.float32)
    params = init_params(k_p)

    y = rnn_forward(x, params)
    jax.block_until_ready(y)

    y_ref = reference_forward(x, params)
    assert y.shape == (BATCH, NUM_CLASSES)
    assert jnp.allclose(y, y_ref, rtol=1e-4, atol=1e-4), (y, y_ref)
    print("KERNEL_OK")
</pallas_src>

<mosaic_0001>
module attributes {stable_mosaic.version = 11 : i64} {
  func.func @rnn_fc_kernel(%arg0: i32, %arg1: memref<1x224x28xf32, #tpu.memory_space<vmem>>, %arg2: memref<28x32xf32, #tpu.memory_space<vmem>>, %arg3: memref<1x32xf32, #tpu.memory_space<vmem>>, %arg4: memref<32x32xf32, #tpu.memory_space<vmem>>, %arg5: memref<64x32xf32, #tpu.memory_space<vmem>>, %arg6: memref<1x32xf32, #tpu.memory_space<vmem>>, %arg7: memref<896x20xf32, #tpu.memory_space<vmem>>, %arg8: memref<1x20xf32, #tpu.memory_space<vmem>>, %arg9: memref<20x10xf32, #tpu.memory_space<vmem>>, %arg10: memref<1x10xf32, #tpu.memory_space<vmem>>, %arg11: memref<8x10xf32, #tpu.memory_space<vmem>>) attributes {dimension_semantics = [#tpu.dimension_semantics<parallel>], iteration_bounds = array<i64: 1>, scalar_prefetch = 0 : i64, scratch_operands = 0 : i64, tpu.core_type = #tpu.core_type<tc>, window_params = [{transform_indices = @transform_0, window_bounds = array<i64: 1, 224, 28>}, {pipeline_mode = #tpu.pipeline_mode<synchronous>, transform_indices = @transform_1, window_bounds = array<i64: 28, 32>}, {pipeline_mode = #tpu.pipeline_mode<synchronous>, transform_indices = @transform_2, window_bounds = array<i64: 1, 32>}, {pipeline_mode = #tpu.pipeline_mode<synchronous>, transform_indices = @transform_3, window_bounds = array<i64: 32, 32>}, {pipeline_mode = #tpu.pipeline_mode<synchronous>, transform_indices = @transform_4, window_bounds = array<i64: 64, 32>}, {pipeline_mode = #tpu.pipeline_mode<synchronous>, transform_indices = @transform_5, window_bounds = array<i64: 1, 32>}, {pipeline_mode = #tpu.pipeline_mode<synchronous>, transform_indices = @transform_6, window_bounds = array<i64: 896, 20>}, {pipeline_mode = #tpu.pipeline_mode<synchronous>, transform_indices = @transform_7, window_bounds = array<i64: 1, 20>}, {pipeline_mode = #tpu.pipeline_mode<synchronous>, transform_indices = @transform_8, window_bounds = array<i64: 20, 10>}, {pipeline_mode = #tpu.pipeline_mode<synchronous>, transform_indices = @transform_9, window_bounds = array<i64: 1, 10>}, {transform_indices = @transform_10, window_bounds = array<i64: 8, 10>}]} {
    %c0 = arith.constant 0 : index
    %c0_0 = arith.constant 0 : index
    %0 = vector.load %arg2[%c0, %c0_0] : memref<28x32xf32, #tpu.memory_space<vmem>>, vector<28x32xf32>
    %c0_1 = arith.constant 0 : index
    %c0_2 = arith.constant 0 : index
    %1 = vector.load %arg4[%c0_1, %c0_2] : memref<32x32xf32, #tpu.memory_space<vmem>>, vector<32x32xf32>
    %c0_3 = arith.constant 0 : index
    %c0_4 = arith.constant 0 : index
    %2 = vector.load %arg5[%c0_3, %c0_4] : memref<64x32xf32, #tpu.memory_space<vmem>>, vector<64x32xf32>
    %c0_5 = arith.constant 0 : index
    %c0_6 = arith.constant 0 : index
    %3 = vector.load %arg6[%c0_5, %c0_6] : memref<1x32xf32, #tpu.memory_space<vmem>>, vector<1x32xf32>
    %4 = vector.shape_cast %3 : vector<1x32xf32> to vector<1x32xf32>
    %5 = vector.broadcast %4 : vector<1x32xf32> to vector<8x32xf32>
    %c0_7 = arith.constant 0 : index
    %c0_8 = arith.constant 0 : index
    %c0_9 = arith.constant 0 : index
    %6 = vector.load %arg1[%c0_7, %c0_8, %c0_9] : memref<1x224x28xf32, #tpu.memory_space<vmem>>, vector<1x224x28xf32>
    %7 = vector.shape_cast %6 : vector<1x224x28xf32> to vector<224x28xf32>
    %cst = arith.constant dense<0.000000e+00> : vector<224x32xf32>
    %8 = tpu.matmul %7, %0, %cst {dimension_numbers = #tpu.dot_dimension_numbers<[1], [0], [0], [1], [0, 0, 1, 1], [], []>} : vector<224x28xf32>, vector<28x32xf32>, vector<224x32xf32> -> vector<224x32xf32>
    %c0_10 = arith.constant 0 : index
    %c0_11 = arith.constant 0 : index
    %9 = vector.load %arg3[%c0_10, %c0_11] : memref<1x32xf32, #tpu.memory_space<vmem>>, vector<1x32xf32>
    %10 = vector.broadcast %9 : vector<1x32xf32> to vector<224x32xf32>
    %11 = arith.addf %8, %10 : vector<224x32xf32>
    %cst_12 = arith.constant 0.000000e+00 : f32
    %12 = vector.broadcast %cst_12 : f32 to vector<8x32xf32>
    %cst_13 = arith.constant 0.000000e+00 : f32
    %13 = vector.broadcast %cst_13 : f32 to vector<8x32xf32>
    %14 = vector.extract_strided_slice %11 {offsets = [0, 0], sizes = [8, 32], strides = [1, 1]} : vector<224x32xf32> to vector<8x32xf32>
    %cst_14 = arith.constant dense<0.000000e+00> : vector<8x32xf32>
    %15 = tpu.matmul %12, %1, %cst_14 {dimension_numbers = #tpu.dot_dimension_numbers<[1], [0], [0], [1], [0, 0, 1, 1], [], []>} : vector<8x32xf32>, vector<32x32xf32>, vector<8x32xf32> -> vector<8x32xf32>
    %16 = arith.addf %14, %15 : vector<8x32xf32>
    %17 = math.tanh %16 : vector<8x32xf32>
    %18 = tpu.concatenate %17, %13 in 1 : vector<8x32xf32>, vector<8x32xf32> -> vector<8x64xf32>
    %cst_15 = arith.constant dense<0.000000e+00> : vector<8x32xf32>
    %19 = tpu.matmul %18, %2, %cst_15 {dimension_numbers = #tpu.dot_dimension_numbers<[1], [0], [0], [1], [0, 0, 1, 1], [], []>} : vector<8x64xf32>, vector<64x32xf32>, vector<8x32xf32> -> vector<8x32xf32>
    %20 = arith.addf %19, %5 : vector<8x32xf32>
    %21 = math.tanh %20 : vector<8x32xf32>
    %22 = vector.extract_strided_slice %11 {offsets = [8, 0], sizes = [8, 32], strides = [1, 1]} : vector<224x32xf32> to vector<8x32xf32>
    %cst_16 = arith.constant dense<0.000000e+00> : vector<8x32xf32>
    %23 = tpu.matmul %17, %1, %cst_16 {dimension_numbers = #tpu.dot_dimension_numbers<[1], [0], [0], [1], [0, 0, 1, 1], [], []>} : vector<8x32xf32>, vector<32x32xf32>, vector<8x32xf32> -> vector<8x32xf32>
    %24 = arith.addf %22, %23 : vector<8x32xf32>
    %25 = math.tanh %24 : vector<8x32xf32>
    %26 = tpu.concatenate %25, %21 in 1 : vector<8x32xf32>, vector<8x32xf32> -> vector<8x64xf32>
    %cst_17 = arith.constant dense<0.000000e+00> : vector<8x32xf32>
    %27 = tpu.matmul %26, %2, %cst_17 {dimension_numbers = #tpu.dot_dimension_numbers<[1], [0], [0], [1], [0, 0, 1, 1], [], []>} : vector<8x64xf32>, vector<64x32xf32>, vector<8x32xf32> -> vector<8x32xf32>
    %28 = arith.addf %27, %5 : vector<8x32xf32>
    %29 = math.tanh %28 : vector<8x32xf32>
    %30 = vector.extract_strided_slice %11 {offsets = [16, 0], sizes = [8, 32], strides = [1, 1]} : vector<224x32xf32> to vector<8x32xf32>
    %cst_18 = arith.constant dense<0.000000e+00> : vector<8x32xf32>
    %31 = tpu.matmul %25, %1, %cst_18 {dimension_numbers = #tpu.dot_dimension_numbers<[1], [0], [0], [1], [0, 0, 1, 1], [], []>} : vector<8x32xf32>, vector<32x32xf32>, vector<8x32xf32> -> vector<8x32xf32>
    %32 = arith.addf %30, %31 : vector<8x32xf32>
    %33 = math.tanh %32 : vector<8x32xf32>
    %34 = tpu.concatenate %33, %29 in 1 : vector<8x32xf32>, vector<8x32xf32> -> vector<8x64xf32>
    %cst_19 = arith.constant dense<0.000000e+00> : vector<8x32xf32>
    %35 = tpu.matmul %34, %2, %cst_19 {dimension_numbers = #tpu.dot_dimension_numbers<[1], [0], [0], [1], [0, 0, 1, 1], [], []>} : vector<8x64xf32>, vector<64x32xf32>, vector<8x32xf32> -> vector<8x32xf32>
    %36 = arith.addf %35, %5 : vector<8x32xf32>
    %37 = math.tanh %36 : vector<8x32xf32>
    %38 = vector.extract_strided_slice %11 {offsets = [24, 0], sizes = [8, 32], strides = [1, 1]} : vector<224x32xf32> to vector<8x32xf32>
    %cst_20 = arith.constant dense<0.000000e+00> : vector<8x32xf32>
    %39 = tpu.matmul %33, %1, %cst_20 {dimension_numbers = #tpu.dot_dimension_numbers<[1], [0], [0], [1], [0, 0, 1, 1], [], []>} : vector<8x32xf32>, vector<32x32xf32>, vector<8x32xf32> -> vector<8x32xf32>
    %40 = arith.addf %38, %39 : vector<8x32xf32>
    %41 = math.tanh %40 : vector<8x32xf32>
    %42 = tpu.concatenate %41, %37 in 1 : vector<8x32xf32>, vector<8x32xf32> -> vector<8x64xf32>
    %cst_21 = arith.constant dense<0.000000e+00> : vector<8x32xf32>
    %43 = tpu.matmul %42, %2, %cst_21 {dimension_numbers = #tpu.dot_dimension_numbers<[1], [0], [0], [1], [0, 0, 1, 1], [], []>} : vector<8x64xf32>, vector<64x32xf32>, vector<8x32xf32> -> vector<8x32xf32>
    %44 = arith.addf %43, %5 : vector<8x32xf32>
    %45 = math.tanh %44 : vector<8x32xf32>
    %46 = vector.extract_strided_slice %11 {offsets = [32, 0], sizes = [8, 32], strides = [1, 1]} : vector<224x32xf32> to vector<8x32xf32>
    %cst_22 = arith.constant dense<0.000000e+00> : vector<8x32xf32>
    %47 = tpu.matmul %41, %1, %cst_22 {dimension_numbers = #tpu.dot_dimension_numbers<[1], [0], [0], [1], [0, 0, 1, 1], [], []>} : vector<8x32xf32>, vector<32x32xf32>, vector<8x32xf32> -> vector<8x32xf32>
    %48 = arith.addf %46, %47 : vector<8x32xf32>
    %49 = math.tanh %48 : vector<8x32xf32>
    %50 = tpu.concatenate %49, %45 in 1 : vector<8x32xf32>, vector<8x32xf32> -> vector<8x64xf32>
    %cst_23 = arith.constant dense<0.000000e+00> : vector<8x32xf32>
    %51 = tpu.matmul %50, %2, %cst_23 {dimension_numbers = #tpu.dot_dimension_numbers<[1], [0], [0], [1], [0, 0, 1, 1], [], []>} : vector<8x64xf32>, vector<64x32xf32>, vector<8x32xf32> -> vector<8x32xf32>
    %52 = arith.addf %51, %5 : vector<8x32xf32>
    %53 = math.tanh %52 : vector<8x32xf32>
    %54 = vector.extract_strided_slice %11 {offsets = [40, 0], sizes = [8, 32], strides = [1, 1]} : vector<224x32xf32> to vector<8x32xf32>
    %cst_24 = arith.constant dense<0.000000e+00> : vector<8x32xf32>
    %55 = tpu.matmul %49, %1, %cst_24 {dimension_numbers = #tpu.dot_dimension_numbers<[1], [0], [0], [1], [0, 0, 1, 1], [], []>} : vector<8x32xf32>, vector<32x32xf32>, vector<8x32xf32> -> vector<8x32xf32>
    %56 = arith.addf %54, %55 : vector<8x32xf32>
    %57 = math.tanh %56 : vector<8x32xf32>
    %58 = tpu.concatenate %57, %53 in 1 : vector<8x32xf32>, vector<8x32xf32> -> vector<8x64xf32>
    %cst_25 = arith.constant dense<0.000000e+00> : vector<8x32xf32>
    %59 = tpu.matmul %58, %2, %cst_25 {dimension_numbers = #tpu.dot_dimension_numbers<[1], [0], [0], [1], [0, 0, 1, 1], [], []>} : vector<8x64xf32>, vector<64x32xf32>, vector<8x32xf32> -> vector<8x32xf32>
    %60 = arith.addf %59, %5 : vector<8x32xf32>
    %61 = math.tanh %60 : vector<8x32xf32>
    %62 = vector.extract_strided_slice %11 {offsets = [48, 0], sizes = [8, 32], strides = [1, 1]} : vector<224x32xf32> to vector<8x32xf32>
    %cst_26 = arith.constant dense<0.000000e+00> : vector<8x32xf32>
    %63 = tpu.matmul %57, %1, %cst_26 {dimension_numbers = #tpu.dot_dimension_numbers<[1], [0], [0], [1], [0, 0, 1, 1], [], []>} : vector<8x32xf32>, vector<32x32xf32>, vector<8x32xf32> -> vector<8x32xf32>
    %64 = arith.addf %62, %63 : vector<8x32xf32>
    %65 = math.tanh %64 : vector<8x32xf32>
    %66 = tpu.concatenate %65, %61 in 1 : vector<8x32xf32>, vector<8x32xf32> -> vector<8x64xf32>
    %cst_27 = arith.constant dense<0.000000e+00> : vector<8x32xf32>
    %67 = tpu.matmul %66, %2, %cst_27 {dimension_numbers = #tpu.dot_dimension_numbers<[1], [0], [0], [1], [0, 0, 1, 1], [], []>} : vector<8x64xf32>, vector<64x32xf32>, vector<8x32xf32> -> vector<8x32xf32>
    %68 = arith.addf %67, %5 : vector<8x32xf32>
    %69 = math.tanh %68 : vector<8x32xf32>
    %70 = vector.extract_strided_slice %11 {offsets = [56, 0], sizes = [8, 32], strides = [1, 1]} : vector<224x32xf32> to vector<8x32xf32>
    %cst_28 = arith.constant dense<0.000000e+00> : vector<8x32xf32>
    %71 = tpu.matmul %65, %1, %cst_28 {dimension_numbers = #tpu.dot_dimension_numbers<[1], [0], [0], [1], [0, 0, 1, 1], [], []>} : vector<8x32xf32>, vector<32x32xf32>, vector<8x32xf32> -> vector<8x32xf32>
    %72 = arith.addf %70, %71 : vector<8x32xf32>
    %73 = math.tanh %72 : vector<8x32xf32>
    %74 = tpu.concatenate %73, %69 in 1 : vector<8x32xf32>, vector<8x32xf32> -> vector<8x64xf32>
    %cst_29 = arith.constant dense<0.000000e+00> : vector<8x32xf32>
    %75 = tpu.matmul %74, %2, %cst_29 {dimension_numbers = #tpu.dot_dimension_numbers<[1], [0], [0], [1], [0, 0, 1, 1], [], []>} : vector<8x64xf32>, vector<64x32xf32>, vector<8x32xf32> -> vector<8x32xf32>
    %76 = arith.addf %75, %5 : vector<8x32xf32>
    %77 = math.tanh %76 : vector<8x32xf32>
    %78 = vector.extract_strided_slice %11 {offsets = [64, 0], sizes = [8, 32], strides = [1, 1]} : vector<224x32xf32> to vector<8x32xf32>
    %cst_30 = arith.constant dense<0.000000e+00> : vector<8x32xf32>
    %79 = tpu.matmul %73, %1, %cst_30 {dimension_numbers = #tpu.dot_dimension_numbers<[1], [0], [0], [1], [0, 0, 1, 1], [], []>} : vector<8x32xf32>, vector<32x32xf32>, vector<8x32xf32> -> vector<8x32xf32>
    %80 = arith.addf %78, %79 : vector<8x32xf32>
    %81 = math.tanh %80 : vector<8x32xf32>
    %82 = tpu.concatenate %81, %77 in 1 : vector<8x32xf32>, vector<8x32xf32> -> vector<8x64xf32>
    %cst_31 = arith.constant dense<0.000000e+00> : vector<8x32xf32>
    %83 = tpu.matmul %82, %2, %cst_31 {dimension_numbers = #tpu.dot_dimension_numbers<[1], [0], [0], [1], [0, 0, 1, 1], [], []>} : vector<8x64xf32>, vector<64x32xf32>, vector<8x32xf32> -> vector<8x32xf32>
    %84 = arith.addf %83, %5 : vector<8x32xf32>
    %85 = math.tanh %84 : vector<8x32xf32>
    %86 = vector.extract_strided_slice %11 {offsets = [72, 0], sizes = [8, 32], strides = [1, 1]} : vector<224x32xf32> to vector<8x32xf32>
    %cst_32 = arith.constant dense<0.000000e+00> : vector<8x32xf32>
    %87 = tpu.matmul %81, %1, %cst_32 {dimension_numbers = #tpu.dot_dimension_numbers<[1], [0], [0], [1], [0, 0, 1, 1], [], []>} : vector<8x32xf32>, vector<32x32xf32>, vector<8x32xf32> -> vector<8x32xf32>
    %88 = arith.addf %86, %87 : vector<8x32xf32>
    %89 = math.tanh %88 : vector<8x32xf32>
    %90 = tpu.concatenate %89, %85 in 1 : vector<8x32xf32>, vector<8x32xf32> -> vector<8x64xf32>
    %cst_33 = arith.constant dense<0.000000e+00> : vector<8x32xf32>
    %91 = tpu.matmul %90, %2, %cst_33 {dimension_numbers = #tpu.dot_dimension_numbers<[1], [0], [0], [1], [0, 0, 1, 1], [], []>} : vector<8x64xf32>, vector<64x32xf32>, vector<8x32xf32> -> vector<8x32xf32>
    %92 = arith.addf %91, %5 : vector<8x32xf32>
    %93 = math.tanh %92 : vector<8x32xf32>
    %94 = vector.extract_strided_slice %11 {offsets = [80, 0], sizes = [8, 32], strides = [1, 1]} : vector<224x32xf32> to vector<8x32xf32>
    %cst_34 = arith.constant dense<0.000000e+00> : vector<8x32xf32>
    %95 = tpu.matmul %89, %1, %cst_34 {dimension_numbers = #tpu.dot_dimension_numbers<[1], [0], [0], [1], [0, 0, 1, 1], [], []>} : vector<8x32xf32>, vector<32x32xf32>, vector<8x32xf32> -> vector<8x32xf32>
    %96 = arith.addf %94, %95 : vector<8x32xf32>
    %97 = math.tanh %96 : vector<8x32xf32>
    %98 = tpu.concatenate %97, %93 in 1 : vector<8x32xf32>, vector<8x32xf32> -> vector<8x64xf32>
    %cst_35 = arith.constant dense<0.000000e+00> : vector<8x32xf32>
    %99 = tpu.matmul %98, %2, %cst_35 {dimension_numbers = #tpu.dot_dimension_numbers<[1], [0], [0], [1], [0, 0, 1, 1], [], []>} : vector<8x64xf32>, vector<64x32xf32>, vector<8x32xf32> -> vector<8x32xf32>
    %100 = arith.addf %99, %5 : vector<8x32xf32>
    %101 = math.tanh %100 : vector<8x32xf32>
    %102 = vector.extract_strided_slice %11 {offsets = [88, 0], sizes = [8, 32], strides = [1, 1]} : vector<224x32xf32> to vector<8x32xf32>
    %cst_36 = arith.constant dense<0.000000e+00> : vector<8x32xf32>
    %103 = tpu.matmul %97, %1, %cst_36 {dimension_numbers = #tpu.dot_dimension_numbers<[1], [0], [0], [1], [0, 0, 1, 1], [], []>} : vector<8x32xf32>, vector<32x32xf32>, vector<8x32xf32> -> vector<8x32xf32>
    %104 = arith.addf %102, %103 : vector<8x32xf32>
    %105 = math.tanh %104 : vector<8x32xf32>
    %106 = tpu.concatenate %105, %101 in 1 : vector<8x32xf32>, vector<8x32xf32> -> vector<8x64xf32>
    %cst_37 = arith.constant dense<0.000000e+00> : vector<8x32xf32>
    %107 = tpu.matmul %106, %2, %cst_37 {dimension_numbers = #tpu.dot_dimension_numbers<[1], [0], [0], [1], [0, 0, 1, 1], [], []>} : vector<8x64xf32>, vector<64x32xf32>, vector<8x32xf32> -> vector<8x32xf32>
    %108 = arith.addf %107, %5 : vector<8x32xf32>
    %109 = math.tanh %108 : vector<8x32xf32>
    %110 = vector.extract_strided_slice %11 {offsets = [96, 0], sizes = [8, 32], strides = [1, 1]} : vector<224x32xf32> to vector<8x32xf32>
    %cst_38 = arith.constant dense<0.000000e+00> : vector<8x32xf32>
    %111 = tpu.matmul %105, %1, %cst_38 {dimension_numbers = #tpu.dot_dimension_numbers<[1], [0], [0], [1], [0, 0, 1, 1], [], []>} : vector<8x32xf32>, vector<32x32xf32>, vector<8x32xf32> -> vector<8x32xf32>
    %112 = arith.addf %110, %111 : vector<8x32xf32>
    %113 = math.tanh %112 : vector<8x32xf32>
    %114 = tpu.concatenate %113, %109 in 1 : vector<8x32xf32>, vector<8x32xf32> -> vector<8x64xf32>
    %cst_39 = arith.constant dense<0.000000e+00> : vector<8x32xf32>
    %115 = tpu.matmul %114, %2, %cst_39 {dimension_numbers = #tpu.dot_dimension_numbers<[1], [0], [0], [1], [0, 0, 1, 1], [], []>} : vector<8x64xf32>, vector<64x32xf32>, vector<8x32xf32> -> vector<8x32xf32>
    %116 = arith.addf %115, %5 : vector<8x32xf32>
    %117 = math.tanh %116 : vector<8x32xf32>
    %118 = vector.extract_strided_slice %11 {offsets = [104, 0], sizes = [8, 32], strides = [1, 1]} : vector<224x32xf32> to vector<8x32xf32>
    %cst_40 = arith.constant dense<0.000000e+00> : vector<8x32xf32>
    %119 = tpu.matmul %113, %1, %cst_40 {dimension_numbers = #tpu.dot_dimension_numbers<[1], [0], [0], [1], [0, 0, 1, 1], [], []>} : vector<8x32xf32>, vector<32x32xf32>, vector<8x32xf32> -> vector<8x32xf32>
    %120 = arith.addf %118, %119 : vector<8x32xf32>
    %121 = math.tanh %120 : vector<8x32xf32>
    %122 = tpu.concatenate %121, %117 in 1 : vector<8x32xf32>, vector<8x32xf32> -> vector<8x64xf32>
    %cst_41 = arith.constant dense<0.000000e+00> : vector<8x32xf32>
    %123 = tpu.matmul %122, %2, %cst_41 {dimension_numbers = #tpu.dot_dimension_numbers<[1], [0], [0], [1], [0, 0, 1, 1], [], []>} : vector<8x64xf32>, vector<64x32xf32>, vector<8x32xf32> -> vector<8x32xf32>
    %124 = arith.addf %123, %5 : vector<8x32xf32>
    %125 = math.tanh %124 : vector<8x32xf32>
    %126 = vector.extract_strided_slice %11 {offsets = [112, 0], sizes = [8, 32], strides = [1, 1]} : vector<224x32xf32> to vector<8x32xf32>
    %cst_42 = arith.constant dense<0.000000e+00> : vector<8x32xf32>
    %127 = tpu.matmul %121, %1, %cst_42 {dimension_numbers = #tpu.dot_dimension_numbers<[1], [0], [0], [1], [0, 0, 1, 1], [], []>} : vector<8x32xf32>, vector<32x32xf32>, vector<8x32xf32> -> vector<8x32xf32>
    %128 = arith.addf %126, %127 : vector<8x32xf32>
    %129 = math.tanh %128 : vector<8x32xf32>
    %130 = tpu.concatenate %129, %125 in 1 : vector<8x32xf32>, vector<8x32xf32> -> vector<8x64xf32>
    %cst_43 = arith.constant dense<0.000000e+00> : vector<8x32xf32>
    %131 = tpu.matmul %130, %2, %cst_43 {dimension_numbers = #tpu.dot_dimension_numbers<[1], [0], [0], [1], [0, 0, 1, 1], [], []>} : vector<8x64xf32>, vector<64x32xf32>, vector<8x32xf32> -> vector<8x32xf32>
    %132 = arith.addf %131, %5 : vector<8x32xf32>
    %133 = math.tanh %132 : vector<8x32xf32>
    %134 = vector.extract_strided_slice %11 {offsets = [120, 0], sizes = [8, 32], strides = [1, 1]} : vector<224x32xf32> to vector<8x32xf32>
    %cst_44 = arith.constant dense<0.000000e+00> : vector<8x32xf32>
    %135 = tpu.matmul %129, %1, %cst_44 {dimension_numbers = #tpu.dot_dimension_numbers<[1], [0], [0], [1], [0, 0, 1, 1], [], []>} : vector<8x32xf32>, vector<32x32xf32>, vector<8x32xf32> -> vector<8x32xf32>
    %136 = arith.addf %134, %135 : vector<8x32xf32>
    %137 = math.tanh %136 : vector<8x32xf32>
    %138 = tpu.concatenate %137, %133 in 1 : vector<8x32xf32>, vector<8x32xf32> -> vector<8x64xf32>
    %cst_45 = arith.constant dense<0.000000e+00> : vector<8x32xf32>
    %139 = tpu.matmul %138, %2, %cst_45 {dimension_numbers = #tpu.dot_dimension_numbers<[1], [0], [0], [1], [0, 0, 1, 1], [], []>} : vector<8x64xf32>, vector<64x32xf32>, vector<8x32xf32> -> vector<8x32xf32>
    %140 = arith.addf %139, %5 : vector<8x32xf32>
    %141 = math.tanh %140 : vector<8x32xf32>
    %142 = vector.extract_strided_slice %11 {offsets = [128, 0], sizes = [8, 32], strides = [1, 1]} : vector<224x32xf32> to vector<8x32xf32>
    %cst_46 = arith.constant dense<0.000000e+00> : vector<8x32xf32>
    %143 = tpu.matmul %137, %1, %cst_46 {dimension_numbers = #tpu.dot_dimension_numbers<[1], [0], [0], [1], [0, 0, 1, 1], [], []>} : vector<8x32xf32>, vector<32x32xf32>, vector<8x32xf32> -> vector<8x32xf32>
    %144 = arith.addf %142, %143 : vector<8x32xf32>
    %145 = math.tanh %144 : vector<8x32xf32>
    %146 = tpu.concatenate %145, %141 in 1 : vector<8x32xf32>, vector<8x32xf32> -> vector<8x64xf32>
    %cst_47 = arith.constant dense<0.000000e+00> : vector<8x32xf32>
    %147 = tpu.matmul %146, %2, %cst_47 {dimension_numbers = #tpu.dot_dimension_numbers<[1], [0], [0], [1], [0, 0, 1, 1], [], []>} : vector<8x64xf32>, vector<64x32xf32>, vector<8x32xf32> -> vector<8x32xf32>
    %148 = arith.addf %147, %5 : vector<8x32xf32>
    %149 = math.tanh %148 : vector<8x32xf32>
    %150 = vector.extract_strided_slice %11 {offsets = [136, 0], sizes = [8, 32], strides = [1, 1]} : vector<224x32xf32> to vector<8x32xf32>
    %cst_48 = arith.constant dense<0.000000e+00> : vector<8x32xf32>
    %151 = tpu.matmul %145, %1, %cst_48 {dimension_numbers = #tpu.dot_dimension_numbers<[1], [0], [0], [1], [0, 0, 1, 1], [], []>} : vector<8x32xf32>, vector<32x32xf32>, vector<8x32xf32> -> vector<8x32xf32>
    %152 = arith.addf %150, %151 : vector<8x32xf32>
    %153 = math.tanh %152 : vector<8x32xf32>
    %154 = tpu.concatenate %153, %149 in 1 : vector<8x32xf32>, vector<8x32xf32> -> vector<8x64xf32>
    %cst_49 = arith.constant dense<0.000000e+00> : vector<8x32xf32>
    %155 = tpu.matmul %154, %2, %cst_49 {dimension_numbers = #tpu.dot_dimension_numbers<[1], [0], [0], [1], [0, 0, 1, 1], [], []>} : vector<8x64xf32>, vector<64x32xf32>, vector<8x32xf32> -> vector<8x32xf32>
    %156 = arith.addf %155, %5 : vector<8x32xf32>
    %157 = math.tanh %156 : vector<8x32xf32>
    %158 = vector.extract_strided_slice %11 {offsets = [144, 0], sizes = [8, 32], strides = [1, 1]} : vector<224x32xf32> to vector<8x32xf32>
    %cst_50 = arith.constant dense<0.000000e+00> : vector<8x32xf32>
    %159 = tpu.matmul %153, %1, %cst_50 {dimension_numbers = #tpu.dot_dimension_numbers<[1], [0], [0], [1], [0, 0, 1, 1], [], []>} : vector<8x32xf32>, vector<32x32xf32>, vector<8x32xf32> -> vector<8x32xf32>
    %160 = arith.addf %158, %159 : vector<8x32xf32>
    %161 = math.tanh %160 : vector<8x32xf32>
    %162 = tpu.concatenate %161, %157 in 1 : vector<8x32xf32>, vector<8x32xf32> -> vector<8x64xf32>
    %cst_51 = arith.constant dense<0.000000e+00> : vector<8x32xf32>
    %163 = tpu.matmul %162, %2, %cst_51 {dimension_numbers = #tpu.dot_dimension_numbers<[1], [0], [0], [1], [0, 0, 1, 1], [], []>} : vector<8x64xf32>, vector<64x32xf32>, vector<8x32xf32> -> vector<8x32xf32>
    %164 = arith.addf %163, %5 : vector<8x32xf32>
    %165 = math.tanh %164 : vector<8x32xf32>
    %166 = vector.extract_strided_slice %11 {offsets = [152, 0], sizes = [8, 32], strides = [1, 1]} : vector<224x32xf32> to vector<8x32xf32>
    %cst_52 = arith.constant dense<0.000000e+00> : vector<8x32xf32>
    %167 = tpu.matmul %161, %1, %cst_52 {dimension_numbers = #tpu.dot_dimension_numbers<[1], [0], [0], [1], [0, 0, 1, 1], [], []>} : vector<8x32xf32>, vector<32x32xf32>, vector<8x32xf32> -> vector<8x32xf32>
    %168 = arith.addf %166, %167 : vector<8x32xf32>
    %169 = math.tanh %168 : vector<8x32xf32>
    %170 = tpu.concatenate %169, %165 in 1 : vector<8x32xf32>, vector<8x32xf32> -> vector<8x64xf32>
    %cst_53 = arith.constant dense<0.000000e+00> : vector<8x32xf32>
    %171 = tpu.matmul %170, %2, %cst_53 {dimension_numbers = #tpu.dot_dimension_numbers<[1], [0], [0], [1], [0, 0, 1, 1], [], []>} : vector<8x64xf32>, vector<64x32xf32>, vector<8x32xf32> -> vector<8x32xf32>
    %172 = arith.addf %171, %5 : vector<8x32xf32>
    %173 = math.tanh %172 : vector<8x32xf32>
    %174 = vector.extract_strided_slice %11 {offsets = [160, 0], sizes = [8, 32], strides = [1, 1]} : vector<224x32xf32> to vector<8x32xf32>
    %cst_54 = arith.constant dense<0.000000e+00> : vector<8x32xf32>
    %175 = tpu.matmul %169, %1, %cst_54 {dimension_numbers = #tpu.dot_dimension_numbers<[1], [0], [0], [1], [0, 0, 1, 1], [], []>} : vector<8x32xf32>, vector<32x32xf32>, vector<8x32xf32> -> vector<8x32xf32>
    %176 = arith.addf %174, %175 : vector<8x32xf32>
    %177 = math.tanh %176 : vector<8x32xf32>
    %178 = tpu.concatenate %177, %173 in 1 : vector<8x32xf32>, vector<8x32xf32> -> vector<8x64xf32>
    %cst_55 = arith.constant dense<0.000000e+00> : vector<8x32xf32>
    %179 = tpu.matmul %178, %2, %cst_55 {dimension_numbers = #tpu.dot_dimension_numbers<[1], [0], [0], [1], [0, 0, 1, 1], [], []>} : vector<8x64xf32>, vector<64x32xf32>, vector<8x32xf32> -> vector<8x32xf32>
    %180 = arith.addf %179, %5 : vector<8x32xf32>
    %181 = math.tanh %180 : vector<8x32xf32>
    %182 = vector.extract_strided_slice %11 {offsets = [168, 0], sizes = [8, 32], strides = [1, 1]} : vector<224x32xf32> to vector<8x32xf32>
    %cst_56 = arith.constant dense<0.000000e+00> : vector<8x32xf32>
    %183 = tpu.matmul %177, %1, %cst_56 {dimension_numbers = #tpu.dot_dimension_numbers<[1], [0], [0], [1], [0, 0, 1, 1], [], []>} : vector<8x32xf32>, vector<32x32xf32>, vector<8x32xf32> -> vector<8x32xf32>
    %184 = arith.addf %182, %183 : vector<8x32xf32>
    %185 = math.tanh %184 : vector<8x32xf32>
    %186 = tpu.concatenate %185, %181 in 1 : vector<8x32xf32>, vector<8x32xf32> -> vector<8x64xf32>
    %cst_57 = arith.constant dense<0.000000e+00> : vector<8x32xf32>
    %187 = tpu.matmul %186, %2, %cst_57 {dimension_numbers = #tpu.dot_dimension_numbers<[1], [0], [0], [1], [0, 0, 1, 1], [], []>} : vector<8x64xf32>, vector<64x32xf32>, vector<8x32xf32> -> vector<8x32xf32>
    %188 = arith.addf %187, %5 : vector<8x32xf32>
    %189 = math.tanh %188 : vector<8x32xf32>
    %190 = vector.extract_strided_slice %11 {offsets = [176, 0], sizes = [8, 32], strides = [1, 1]} : vector<224x32xf32> to vector<8x32xf32>
    %cst_58 = arith.constant dense<0.000000e+00> : vector<8x32xf32>
    %191 = tpu.matmul %185, %1, %cst_58 {dimension_numbers = #tpu.dot_dimension_numbers<[1], [0], [0], [1], [0, 0, 1, 1], [], []>} : vector<8x32xf32>, vector<32x32xf32>, vector<8x32xf32> -> vector<8x32xf32>
    %192 = arith.addf %190, %191 : vector<8x32xf32>
    %193 = math.tanh %192 : vector<8x32xf32>
    %194 = tpu.concatenate %193, %189 in 1 : vector<8x32xf32>, vector<8x32xf32> -> vector<8x64xf32>
    %cst_59 = arith.constant dense<0.000000e+00> : vector<8x32xf32>
    %195 = tpu.matmul %194, %2, %cst_59 {dimension_numbers = #tpu.dot_dimension_numbers<[1], [0], [0], [1], [0, 0, 1, 1], [], []>} : vector<8x64xf32>, vector<64x32xf32>, vector<8x32xf32> -> vector<8x32xf32>
    %196 = arith.addf %195, %5 : vector<8x32xf32>
    %197 = math.tanh %196 : vector<8x32xf32>
    %198 = vector.extract_strided_slice %11 {offsets = [184, 0], sizes = [8, 32], strides = [1, 1]} : vector<224x32xf32> to vector<8x32xf32>
    %cst_60 = arith.constant dense<0.000000e+00> : vector<8x32xf32>
    %199 = tpu.matmul %193, %1, %cst_60 {dimension_numbers = #tpu.dot_dimension_numbers<[1], [0], [0], [1], [0, 0, 1, 1], [], []>} : vector<8x32xf32>, vector<32x32xf32>, vector<8x32xf32> -> vector<8x32xf32>
    %200 = arith.addf %198, %199 : vector<8x32xf32>
    %201 = math.tanh %200 : vector<8x32xf32>
    %202 = tpu.concatenate %201, %197 in 1 : vector<8x32xf32>, vector<8x32xf32> -> vector<8x64xf32>
    %cst_61 = arith.constant dense<0.000000e+00> : vector<8x32xf32>
    %203 = tpu.matmul %202, %2, %cst_61 {dimension_numbers = #tpu.dot_dimension_numbers<[1], [0], [0], [1], [0, 0, 1, 1], [], []>} : vector<8x64xf32>, vector<64x32xf32>, vector<8x32xf32> -> vector<8x32xf32>
    %204 = arith.addf %203, %5 : vector<8x32xf32>
    %205 = math.tanh %204 : vector<8x32xf32>
    %206 = vector.extract_strided_slice %11 {offsets = [192, 0], sizes = [8, 32], strides = [1, 1]} : vector<224x32xf32> to vector<8x32xf32>
    %cst_62 = arith.constant dense<0.000000e+00> : vector<8x32xf32>
    %207 = tpu.matmul %201, %1, %cst_62 {dimension_numbers = #tpu.dot_dimension_numbers<[1], [0], [0], [1], [0, 0, 1, 1], [], []>} : vector<8x32xf32>, vector<32x32xf32>, vector<8x32xf32> -> vector<8x32xf32>
    %208 = arith.addf %206, %207 : vector<8x32xf32>
    %209 = math.tanh %208 : vector<8x32xf32>
    %210 = tpu.concatenate %209, %205 in 1 : vector<8x32xf32>, vector<8x32xf32> -> vector<8x64xf32>
    %cst_63 = arith.constant dense<0.000000e+00> : vector<8x32xf32>
    %211 = tpu.matmul %210, %2, %cst_63 {dimension_numbers = #tpu.dot_dimension_numbers<[1], [0], [0], [1], [0, 0, 1, 1], [], []>} : vector<8x64xf32>, vector<64x32xf32>, vector<8x32xf32> -> vector<8x32xf32>
    %212 = arith.addf %211, %5 : vector<8x32xf32>
    %213 = math.tanh %212 : vector<8x32xf32>
    %214 = vector.extract_strided_slice %11 {offsets = [200, 0], sizes = [8, 32], strides = [1, 1]} : vector<224x32xf32> to vector<8x32xf32>
    %cst_64 = arith.constant dense<0.000000e+00> : vector<8x32xf32>
    %215 = tpu.matmul %209, %1, %cst_64 {dimension_numbers = #tpu.dot_dimension_numbers<[1], [0], [0], [1], [0, 0, 1, 1], [], []>} : vector<8x32xf32>, vector<32x32xf32>, vector<8x32xf32> -> vector<8x32xf32>
    %216 = arith.addf %214, %215 : vector<8x32xf32>
    %217 = math.tanh %216 : vector<8x32xf32>
    %218 = tpu.concatenate %217, %213 in 1 : vector<8x32xf32>, vector<8x32xf32> -> vector<8x64xf32>
    %cst_65 = arith.constant dense<0.000000e+00> : vector<8x32xf32>
    %219 = tpu.matmul %218, %2, %cst_65 {dimension_numbers = #tpu.dot_dimension_numbers<[1], [0], [0], [1], [0, 0, 1, 1], [], []>} : vector<8x64xf32>, vector<64x32xf32>, vector<8x32xf32> -> vector<8x32xf32>
    %220 = arith.addf %219, %5 : vector<8x32xf32>
    %221 = math.tanh %220 : vector<8x32xf32>
    %222 = vector.extract_strided_slice %11 {offsets = [208, 0], sizes = [8, 32], strides = [1, 1]} : vector<224x32xf32> to vector<8x32xf32>
    %cst_66 = arith.constant dense<0.000000e+00> : vector<8x32xf32>
    %223 = tpu.matmul %217, %1, %cst_66 {dimension_numbers = #tpu.dot_dimension_numbers<[1], [0], [0], [1], [0, 0, 1, 1], [], []>} : vector<8x32xf32>, vector<32x32xf32>, vector<8x32xf32> -> vector<8x32xf32>
    %224 = arith.addf %222, %223 : vector<8x32xf32>
    %225 = math.tanh %224 : vector<8x32xf32>
    %226 = tpu.concatenate %225, %221 in 1 : vector<8x32xf32>, vector<8x32xf32> -> vector<8x64xf32>
    %cst_67 = arith.constant dense<0.000000e+00> : vector<8x32xf32>
    %227 = tpu.matmul %226, %2, %cst_67 {dimension_numbers = #tpu.dot_dimension_numbers<[1], [0], [0], [1], [0, 0, 1, 1], [], []>} : vector<8x64xf32>, vector<64x32xf32>, vector<8x32xf32> -> vector<8x32xf32>
    %228 = arith.addf %227, %5 : vector<8x32xf32>
    %229 = math.tanh %228 : vector<8x32xf32>
    %230 = vector.extract_strided_slice %11 {offsets = [216, 0], sizes = [8, 32], strides = [1, 1]} : vector<224x32xf32> to vector<8x32xf32>
    %cst_68 = arith.constant dense<0.000000e+00> : vector<8x32xf32>
    %231 = tpu.matmul %225, %1, %cst_68 {dimension_numbers = #tpu.dot_dimension_numbers<[1], [0], [0], [1], [0, 0, 1, 1], [], []>} : vector<8x32xf32>, vector<32x32xf32>, vector<8x32xf32> -> vector<8x32xf32>
    %232 = arith.addf %230, %231 : vector<8x32xf32>
    %233 = math.tanh %232 : vector<8x32xf32>
    %234 = tpu.concatenate %233, %229 in 1 : vector<8x32xf32>, vector<8x32xf32> -> vector<8x64xf32>
    %cst_69 = arith.constant dense<0.000000e+00> : vector<8x32xf32>
    %235 = tpu.matmul %234, %2, %cst_69 {dimension_numbers = #tpu.dot_dimension_numbers<[1], [0], [0], [1], [0, 0, 1, 1], [], []>} : vector<8x64xf32>, vector<64x32xf32>, vector<8x32xf32> -> vector<8x32xf32>
    %236 = arith.addf %235, %5 : vector<8x32xf32>
    %237 = math.tanh %236 : vector<8x32xf32>
    %238 = tpu.concatenate %21, %29, %37, %45, %53, %61, %69, %77, %85, %93, %101, %109, %117, %125, %133, %141 in 1 : vector<8x32xf32>, vector<8x32xf32>, vector<8x32xf32>, vector<8x32xf32>, vector<8x32xf32>, vector<8x32xf32>, vector<8x32xf32>, vector<8x32xf32>, vector<8x32xf32>, vector<8x32xf32>, vector<8x32xf32>, vector<8x32xf32>, vector<8x32xf32>, vector<8x32xf32>, vector<8x32xf32>, vector<8x32xf32> -> vector<8x512xf32>
    %239 = tpu.concatenate %149, %157, %165, %173, %181, %189, %197, %205, %213, %221, %229, %237 in 1 : vector<8x32xf32>, vector<8x32xf32>, vector<8x32xf32>, vector<8x32xf32>, vector<8x32xf32>, vector<8x32xf32>, vector<8x32xf32>, vector<8x32xf32>, vector<8x32xf32>, vector<8x32xf32>, vector<8x32xf32>, vector<8x32xf32> -> vector<8x384xf32>
    %240 = tpu.concatenate %238, %239 in 1 : vector<8x512xf32>, vector<8x384xf32> -> vector<8x896xf32>
    %c0_70 = arith.constant 0 : index
    %c0_71 = arith.constant 0 : index
    %241 = vector.load %arg7[%c0_70, %c0_71] : memref<896x20xf32, #tpu.memory_space<vmem>>, vector<896x20xf32>
    %cst_72 = arith.constant dense<0.000000e+00> : vector<8x20xf32>
    %242 = tpu.matmul %240, %241, %cst_72 {dimension_numbers = #tpu.dot_dimension_numbers<[1], [0], [0], [1], [0, 0, 1, 1], [], []>} : vector<8x896xf32>, vector<896x20xf32>, vector<8x20xf32> -> vector<8x20xf32>
    %c0_73 = arith.constant 0 : index
    %c0_74 = arith.constant 0 : index
    %243 = vector.load %arg8[%c0_73, %c0_74] : memref<1x20xf32, #tpu.memory_space<vmem>>, vector<1x20xf32>
    %244 = vector.broadcast %243 : vector<1x20xf32> to vector<8x20xf32>
    %245 = arith.addf %242, %244 : vector<8x20xf32>
    %c0_75 = arith.constant 0 : index
    %c0_76 = arith.constant 0 : index
    %246 = vector.load %arg9[%c0_75, %c0_76] : memref<20x10xf32, #tpu.memory_space<vmem>>, vector<20x10xf32>
    %cst_77 = arith.constant dense<0.000000e+00> : vector<8x10xf32>
    %247 = tpu.matmul %245, %246, %cst_77 {dimension_numbers = #tpu.dot_dimension_numbers<[1], [0], [0], [1], [0, 0, 1, 1], [], []>} : vector<8x20xf32>, vector<20x10xf32>, vector<8x10xf32> -> vector<8x10xf32>
    %c0_78 = arith.constant 0 : index
    %c0_79 = arith.constant 0 : index
    %248 = vector.load %arg10[%c0_78, %c0_79] : memref<1x10xf32, #tpu.memory_space<vmem>>, vector<1x10xf32>
    %249 = vector.broadcast %248 : vector<1x10xf32> to vector<8x10xf32>
    %250 = arith.addf %247, %249 : vector<8x10xf32>
    %c0_80 = arith.constant 0 : index
    %c0_81 = arith.constant 0 : index
    %251 = vector.load %arg11[%c0_80, %c0_81] : memref<8x10xf32, #tpu.memory_space<vmem>>, vector<8x10xf32>
    tpu.vector_store %arg11[%c0_80, %c0_81], %250 {strides = array<i32>} : memref<8x10xf32, #tpu.memory_space<vmem>>, vector<8x10xf32>,
    return
  }
  func.func @transform_0(%arg0: i32) -> (i32, i32, i32) {
    %c0_i32 = arith.constant 0 : i32
    %c0_i32_0 = arith.constant 0 : i32
    %c0_i32_1 = arith.constant 0 : i32
    return %arg0, %c0_i32, %c0_i32_0 : i32, i32, i32
  }
  func.func @transform_1(%arg0: i32) -> (i32, i32) {
    %c0_i32 = arith.constant 0 : i32
    %c0_i32_0 = arith.constant 0 : i32
    %c0_i32_1 = arith.constant 0 : i32
    return %c0_i32, %c0_i32_0 : i32, i32
  }
  func.func @transform_2(%arg0: i32) -> (i32, i32) {
    %c0_i32 = arith.constant 0 : i32
    %c0_i32_0 = arith.constant 0 : i32
    %c0_i32_1 = arith.constant 0 : i32
    return %c0_i32, %c0_i32_0 : i32, i32
  }
  func.func @transform_3(%arg0: i32) -> (i32, i32) {
    %c0_i32 = arith.constant 0 : i32
    %c0_i32_0 = arith.constant 0 : i32
    %c0_i32_1 = arith.constant 0 : i32
    return %c0_i32, %c0_i32_0 : i32, i32
  }
  func.func @transform_4(%arg0: i32) -> (i32, i32) {
    %c0_i32 = arith.constant 0 : i32
    %c0_i32_0 = arith.constant 0 : i32
    %c0_i32_1 = arith.constant 0 : i32
    return %c0_i32, %c0_i32_0 : i32, i32
  }
  func.func @transform_5(%arg0: i32) -> (i32, i32) {
    %c0_i32 = arith.constant 0 : i32
    %c0_i32_0 = arith.constant 0 : i32
    %c0_i32_1 = arith.constant 0 : i32
    return %c0_i32, %c0_i32_0 : i32, i32
  }
  func.func @transform_6(%arg0: i32) -> (i32, i32) {
    %c0_i32 = arith.constant 0 : i32
    %c0_i32_0 = arith.constant 0 : i32
    %c0_i32_1 = arith.constant 0 : i32
    return %c0_i32, %c0_i32_0 : i32, i32
  }
  func.func @transform_7(%arg0: i32) -> (i32, i32) {
    %c0_i32 = arith.constant 0 : i32
    %c0_i32_0 = arith.constant 0 : i32
    %c0_i32_1 = arith.constant 0 : i32
    return %c0_i32, %c0_i32_0 : i32, i32
  }
  func.func @transform_8(%arg0: i32) -> (i32, i32) {
    %c0_i32 = arith.constant 0 : i32
    %c0_i32_0 = arith.constant 0 : i32
    %c0_i32_1 = arith.constant 0 : i32
    return %c0_i32, %c0_i32_0 : i32, i32
  }
  func.func @transform_9(%arg0: i32) -> (i32, i32) {
    %c0_i32 = arith.constant 0 : i32
    %c0_i32_0 = arith.constant 0 : i32
    %c0_i32_1 = arith.constant 0 : i32
    return %c0_i32, %c0_i32_0 : i32, i32
  }
  func.func @transform_10(%arg0: i32) -> (i32, i32) {
    %c0_i32 = arith.constant 0 : i32
    %c0_i32_0 = arith.constant 0 : i32
    return %arg0, %c0_i32 : i32, i32
  }
}

</mosaic_0001>

<llo_original>
// kernel: rnn_forward.1
$region0: #{rnn_forward.1}
  #allocation0 [shape = 'u32[]', space=smem, size = 0x4, offset = 0x4, fixed_abs, tag = 'smem constant byte address 0x4 - core index']
  #allocation1 [shape = 'u32[144,128]{1,0:T(1,128)}', space=vmem, size = 0x12000, scoped, tag = 'internal scratch']
  %s0 = inlined_call_operand.vmem [shape: f32[1,224,28], index: 0, kind: input, shape index: {}]
  %s1 = inlined_call_operand.vmem [shape: f32[28,32], index: 1, kind: input, shape index: {}]
  %s2 = inlined_call_operand.vmem [shape: f32[1,32], index: 2, kind: input, shape index: {}]
  %s3 = inlined_call_operand.vmem [shape: f32[32,32], index: 3, kind: input, shape index: {}]
  %s4 = inlined_call_operand.vmem [shape: f32[64,32], index: 4, kind: input, shape index: {}]
  %s5 = inlined_call_operand.vmem [shape: f32[1,32], index: 5, kind: input, shape index: {}]
  %s6 = inlined_call_operand.vmem [shape: f32[896,20], index: 6, kind: input, shape index: {}]
  %s7 = inlined_call_operand.vmem [shape: f32[1,20], index: 7, kind: input, shape index: {}]
  %s8 = inlined_call_operand.vmem [shape: f32[20,10], index: 8, kind: input, shape index: {}]
  %s9 = inlined_call_operand.vmem [shape: f32[1,10], index: 9, kind: input, shape index: {}]
  %s10 = inlined_call_operand.hbm [shape: f32[8,10], index: 10, kind: output, shape index: {}]
  %s11 = sld [smem:[#allocation0]]
  $region50: #{rnn_forward.1} parent=0
    _
  %s13 = ssub.s32 1, %s11
  %s14 = scalar_select 0, %s13, %s11
  $region1: #{rnn_forward.1} parent=0
    #allocation2 [shape = 'u8[4096]{0}', space=vmem, size = 0x1000, scoped, tag = 'output window, operand 0, single buffered']
    #allocation3 [shape = 's32[1]{0}', space=sflag, size = 0x4, scoped, tag = 'scoped memory for rnn_forward.1']
    %15 = vsyncpa [#allocation3], 0
    // Predicated region
    $region2: #{rnn_forward.1} parent=1 // pred_check
      _
    $region3: #{rnn_forward.1} parent=1 // pred_check_branch
      %17 = sbr.rel (0) target = $region5
    $region4: #{rnn_forward.1} parent=1 // pred_region
      _
    $region5: #{rnn_forward.1} parent=1 // pred_fallthru
      _
    // Predicated region
    $region6: #{rnn_forward.1} parent=1 // pred_check
      _
    $region7: #{rnn_forward.1} parent=1 // pred_check_branch
      %19 = sbr.rel (0) target = $region9
    $region8: #{rnn_forward.1} parent=1 // pred_region
      _
    $region9: #{rnn_forward.1} parent=1 // pred_fallthru
      _
    // Predicated region
    $region10: #{rnn_forward.1} parent=1 // pred_check
      _
    $region11: #{rnn_forward.1} parent=1 // pred_check_branch
      %21 = sbr.rel (0) target = $region13
    $region12: #{rnn_forward.1} parent=1 // pred_region
      _
    $region13: #{rnn_forward.1} parent=1 // pred_fallthru
      _
    // Predicated region
    $region14: #{rnn_forward.1} parent=1 // pred_check
      _
    $region15: #{rnn_forward.1} parent=1 // pred_check_branch
      %23 = sbr.rel (0) target = $region17
    $region16: #{rnn_forward.1} parent=1 // pred_region
      _
    $region17: #{rnn_forward.1} parent=1 // pred_fallthru
      _
    // Predicated region
    $region18: #{rnn_forward.1} parent=1 // pred_check
      _
    $region19: #{rnn_forward.1} parent=1 // pred_check_branch
      %25 = sbr.rel (0) target = $region21
    $region20: #{rnn_forward.1} parent=1 // pred_region
      _
    $region21: #{rnn_forward.1} parent=1 // pred_fallthru
      _
    // Predicated region
    $region22: #{rnn_forward.1} parent=1 // pred_check
      _
    $region23: #{rnn_forward.1} parent=1 // pred_check_branch
      %27 = sbr.rel (0) target = $region25
    $region24: #{rnn_forward.1} parent=1 // pred_region
      _
    $region25: #{rnn_forward.1} parent=1 // pred_fallthru
      _
    // Predicated region
    $region26: #{rnn_forward.1} parent=1 // pred_check
      _
    $region27: #{rnn_forward.1} parent=1 // pred_check_branch
      %29 = sbr.rel (0) target = $region29
    $region28: #{rnn_forward.1} parent=1 // pred_region
      _
    $region29: #{rnn_forward.1} parent=1 // pred_fallthru
      _
    // Predicated region
    $region30: #{rnn_forward.1} parent=1 // pred_check
      _
    $region31: #{rnn_forward.1} parent=1 // pred_check_branch
      %31 = sbr.rel (0) target = $region33
    $region32: #{rnn_forward.1} parent=1 // pred_region
      _
    $region33: #{rnn_forward.1} parent=1 // pred_fallthru
      _
    // Predicated region
    $region34: #{rnn_forward.1} parent=1 // pred_check
      _
    $region35: #{rnn_forward.1} parent=1 // pred_check_branch
      %33 = sbr.rel (0) target = $region37
    $region36: #{rnn_forward.1} parent=1 // pred_region
      _
    $region37: #{rnn_forward.1} parent=1 // pred_fallthru
      _
    // Predicated region
    $region38: #{rnn_forward.1} parent=1 // pred_check
      _
    $region39: #{rnn_forward.1} parent=1 // pred_check_branch
      %35 = sbr.rel (0) target = $region41
    $region40: #{rnn_forward.1} parent=1 // pred_region
      _
    $region41: #{rnn_forward.1} parent=1 // pred_fallthru
      _
    %v36 = vld [vmem:[%s1] sm:$0xff]
    %v37 = vld [vmem:[%s1 + $0x8] sm:$0xff]
    %v38 = vld [vmem:[%s1 + $0x10] sm:$0xff]
    %v39 = vld [vmem:[%s1 + $0x18] sm:$0xf]
    %v40 = vld [vmem:[%s3] sm:$0xff]
    %v41 = vld [vmem:[%s3 + $0x8] sm:$0xff]
    %v42 = vld [vmem:[%s3 + $0x10] sm:$0xff]
    %v43 = vld [vmem:[%s3 + $0x18] sm:$0xff]
    %v44 = vld [vmem:[%s4] sm:$0xff]
    %v45 = vld [vmem:[%s4 + $0x8] sm:$0xff]
    %v46 = vld [vmem:[%s4 + $0x10] sm:$0xff]
    %v47 = vld [vmem:[%s4 + $0x18] sm:$0xff]
    %v48 = vld [vmem:[%s4 + $0x20] sm:$0xff]
    %v49 = vld [vmem:[%s4 + $0x28] sm:$0xff]
    %v50 = vld [vmem:[%s4 + $0x30] sm:$0xff]
    %v51 = vld [vmem:[%s4 + $0x38] sm:$0xff]
    %v52 = vld [vmem:[%s5] sm:$0x1]
    %v54 = vlaneseq
    %v55 = vshrl.u32 %v54, 7
    %v56 = vsub.s32 0, %v55
    %v57 = vrot.slane %v52, %v56
    %v59 = vld [vmem:[%s0] sm:$0xff]
    %v60 = vld [vmem:[%s0 + $0x8] sm:$0xff]
    %v61 = vld [vmem:[%s0 + $0x10] sm:$0xff]
    %v62 = vld [vmem:[%s0 + $0x18] sm:$0xff]
    %v63 = vld [vmem:[%s0 + $0x20] sm:$0xff]
    %v64 = vld [vmem:[%s0 + $0x28] sm:$0xff]
    %v65 = vld [vmem:[%s0 + $0x30] sm:$0xff]
    %v66 = vld [vmem:[%s0 + $0x38] sm:$0xff]
    %v67 = vld [vmem:[%s0 + $0x40] sm:$0xff]
    %v68 = vld [vmem:[%s0 + $0x48] sm:$0xff]
    %v69 = vld [vmem:[%s0 + $0x50] sm:$0xff]
    %v70 = vld [vmem:[%s0 + $0x58] sm:$0xff]
    %v71 = vld [vmem:[%s0 + $0x60] sm:$0xff]
    %v72 = vld [vmem:[%s0 + $0x68] sm:$0xff]
    %v73 = vld [vmem:[%s0 + $0x70] sm:$0xff]
    %v74 = vld [vmem:[%s0 + $0x78] sm:$0xff]
    %v75 = vld [vmem:[%s0 + $0x80] sm:$0xff]
    %v76 = vld [vmem:[%s0 + $0x88] sm:$0xff]
    %v77 = vld [vmem:[%s0 + $0x90] sm:$0xff]
    %v78 = vld [vmem:[%s0 + $0x98] sm:$0xff]
    %v79 = vld [vmem:[%s0 + $0xa0] sm:$0xff]
    %v80 = vld [vmem:[%s0 + $0xa8] sm:$0xff]
    %v81 = vld [vmem:[%s0 + $0xb0] sm:$0xff]
    %v82 = vld [vmem:[%s0 + $0xb8] sm:$0xff]
    %v83 = vld [vmem:[%s0 + $0xc0] sm:$0xff]
    %v84 = vld [vmem:[%s0 + $0xc8] sm:$0xff]
    %v85 = vld [vmem:[%s0 + $0xd0] sm:$0xff]
    %v86 = vld [vmem:[%s0 + $0xd8] sm:$0xff]
    %v87 = vld [vmem:[%s2] sm:$0x1]
    %v89 = vlaneseq
    %v90 = vshrl.u32 %v89, 7
    %v91 = vsub.s32 0, %v90
    %v92 = vrot.slane %v87, %v91
    %vm94 = vcmask 228352
    %v96 = vsel %vm94, %v59, 0
    %v99 = vsel %vm94, %v60, 0
    %v102 = vsel %vm94, %v61, 0
    %v105 = vsel %vm94, %v62, 0
    %v108 = vsel %vm94, %v63, 0
    %v111 = vsel %vm94, %v64, 0
    %v114 = vsel %vm94, %v65, 0
    %v117 = vsel %vm94, %v66, 0
    %v120 = vsel %vm94, %v67, 0
    %v123 = vsel %vm94, %v68, 0
    %v126 = vsel %vm94, %v69, 0
    %v129 = vsel %vm94, %v70, 0
    %v132 = vsel %vm94, %v71, 0
    %v135 = vsel %vm94, %v72, 0
    %v138 = vsel %vm94, %v73, 0
    %v141 = vsel %vm94, %v74, 0
    %v144 = vsel %vm94, %v75, 0
    %v147 = vsel %vm94, %v76, 0
    %v150 = vsel %vm94, %v77, 0
    %v153 = vsel %vm94, %v78, 0
    %v156 = vsel %vm94, %v79, 0
    %v159 = vsel %vm94, %v80, 0
    %v162 = vsel %vm94, %v81, 0
    %v165 = vsel %vm94, %v82, 0
    %v168 = vsel %vm94, %v83, 0
    %v171 = vsel %vm94, %v84, 0
    %v174 = vsel %vm94, %v85, 0
    %v177 = vsel %vm94, %v86, 0
    %vm179 = vcmask 1043456
    %v181 = vsel %vm179, %v39, 0
    %183 = vmatprep.subr.mxu0 0.0
    %184 = vmatpush1.msra.mxu0 0.0
    %185 = vmatprep.subr.mxu0 0.0
    %186 = vmatpush1.msra.mxu0 0.0
    %187 = vmatprep.subr.mxu0 0.0
    %188 = vmatpush1.msra.mxu0 0.0
    %189 = vmatprep.subr.mxu0 0.0
    %190 = vmatpush1.msra.mxu0 0.0
    %191 = vmatprep.subr.mxu0 0.0
    %192 = vmatpush1.msra.mxu0 0.0
    %193 = vmatprep.subr.mxu0 0.0
    %194 = vmatpush1.msra.mxu0 0.0
    %195 = vmatprep.subr.mxu0 0.0
    %196 = vmatpush1.msra.mxu0 0.0
    %197 = vmatprep.subr.mxu0 0.0
    %198 = vmatpush1.msra.mxu0 0.0
    %199 = vmatprep.subr.mxu0 0.0
    %200 = vmatpush1.msra.mxu0 0.0
    %201 = vmatprep.subr.mxu0 0.0
    %202 = vmatpush1.msra.mxu0 0.0
    %203 = vmatprep.subr.mxu0 0.0
    %204 = vmatpush1.msra.mxu0 0.0
    %205 = vmatprep.subr.mxu0 0.0
    %206 = vmatpush1.msra.mxu0 0.0
    %207 = vmatprep.subr.mxu0 0.0
    %208 = vmatpush1.msra.mxu0 %v181
    %209 = vmatprep.subr.mxu0 0.0
    %210 = vmatpush1.msra.mxu0 %v38
    %211 = vmatprep.subr.mxu0 0.0
    %212 = vmatpush1.msra.mxu0 %v37
    %213 = vmatprep.subr.mxu0 0.0
    %214 = vmatpush1.msra.mxu0 %v36
    %215 = vmatprep.subr.mxu0 0.0
    %216 = vmatpush2.msra.mxu0 0.0
    %217 = vmatprep.subr.mxu0 0.0
    %218 = vmatpush2.msra.mxu0 0.0
    %219 = vmatprep.subr.mxu0 0.0
    %220 = vmatpush2.msra.mxu0 0.0
    %221 = vmatprep.subr.mxu0 0.0
    %222 = vmatpush2.msra.mxu0 0.0
    %223 = vmatprep.subr.mxu0 0.0
    %224 = vmatpush2.msra.mxu0 0.0
    %225 = vmatprep.subr.mxu0 0.0
    %226 = vmatpush2.msra.mxu0 0.0
    %227 = vmatprep.subr.mxu0 0.0
    %228 = vmatpush2.msra.mxu0 0.0
    %229 = vmatprep.subr.mxu0 0.0
    %230 = vmatpush2.msra.mxu0 0.0
    %231 = vmatprep.subr.mxu0 0.0
    %232 = vmatpush2.msra.mxu0 0.0
    %233 = vmatprep.subr.mxu0 0.0
    %234 = vmatpush2.msra.mxu0 0.0
    %235 = vmatprep.subr.mxu0 0.0
    %236 = vmatpush2.msra.mxu0 0.0
    %237 = vmatprep.subr.mxu0 0.0
    %238 = vmatpush2.msra.mxu0 0.0
    %239 = vmatprep.subr.mxu0 0.0
    %240 = vmatpush2.msra.mxu0 0.0
    %241 = vmatprep.subr.mxu0 0.0
    %242 = vmatpush2.msra.mxu0 0.0
    %243 = vmatprep.subr.mxu0 0.0
    %244 = vmatpush2.msra.mxu0 0.0
    %245 = vmatprep.subr.mxu0 0.0
    %246 = vmatpush2.msra.mxu0 0.0
    %247 = vmatprep.mubr.f32.mxu0 0.0
    %248 = vmatmul.mubr.f32.gmra.mxu0 %v96
    %v249 = vpop.f32.mrf.mxu0
    %v250 = vadd.f32 %v92, %v249
    %v251 = vpop.f32.mrf.mxu0
    %252 = vmatprep.mubr.f32.mxu0 0.0
    %253 = vmatmul.mubr.f32.gmra.mxu0 %v99
    %v254 = vpop.f32.mrf.mxu0
    %v255 = vadd.f32 %v92, %v254
    %v256 = vpop.f32.mrf.mxu0
    %257 = vmatprep.mubr.f32.mxu0 0.0
    %258 = vmatmul.mubr.f32.gmra.mxu0 %v102
    %v259 = vpop.f32.mrf.mxu0
    %v260 = vadd.f32 %v92, %v259
    %v261 = vpop.f32.mrf.mxu0
    %262 = vmatprep.mubr.f32.mxu0 0.0
    %263 = vmatmul.mubr.f32.gmra.mxu0 %v105
    %v264 = vpop.f32.mrf.mxu0
    %v265 = vadd.f32 %v92, %v264
    %v266 = vpop.f32.mrf.mxu0
    %267 = vmatprep.mubr.f32.mxu0 0.0
    %268 = vmatmul.mubr.f32.gmra.mxu0 %v108
    %v269 = vpop.f32.mrf.mxu0
    %v270 = vadd.f32 %v92, %v269
    %v271 = vpop.f32.mrf.mxu0
    %272 = vmatprep.mubr.f32.mxu0 0.0
    %273 = vmatmul.mubr.f32.gmra.mxu0 %v111
    %v274 = vpop.f32.mrf.mxu0
    %v275 = vadd.f32 %v92, %v274
    %v276 = vpop.f32.mrf.mxu0
    %277 = vmatprep.mubr.f32.mxu0 0.0
    %278 = vmatmul.mubr.f32.gmra.mxu0 %v114
    %v279 = vpop.f32.mrf.mxu0
    %v280 = vadd.f32 %v92, %v279
    %v281 = vpop.f32.mrf.mxu0
    %282 = vmatprep.mubr.f32.mxu0 0.0
    %283 = vmatmul.mubr.f32.gmra.mxu0 %v117
    %v284 = vpop.f32.mrf.mxu0
    %v285 = vadd.f32 %v92, %v284
    %v286 = vpop.f32.mrf.mxu0
    %287 = vmatprep.mubr.f32.mxu0 0.0
    %288 = vmatmul.mubr.f32.gmra.mxu0 %v120
    %v289 = vpop.f32.mrf.mxu0
    %v290 = vadd.f32 %v92, %v289
    %v291 = vpop.f32.mrf.mxu0
    %292 = vmatprep.mubr.f32.mxu0 0.0
    %293 = vmatmul.mubr.f32.gmra.mxu0 %v123
    %v294 = vpop.f32.mrf.mxu0
    %v295 = vadd.f32 %v92, %v294
    %v296 = vpop.f32.mrf.mxu0
    %297 = vmatprep.mubr.f32.mxu0 0.0
    %298 = vmatmul.mubr.f32.gmra.mxu0 %v126
    %v299 = vpop.f32.mrf.mxu0
    %v300 = vadd.f32 %v92, %v299
    %v301 = vpop.f32.mrf.mxu0
    %302 = vmatprep.mubr.f32.mxu0 0.0
    %303 = vmatmul.mubr.f32.gmra.mxu0 %v129
    %v304 = vpop.f32.mrf.mxu0
    %v305 = vadd.f32 %v92, %v304
    %v306 = vpop.f32.mrf.mxu0
    %307 = vmatprep.mubr.f32.mxu0 0.0
    %308 = vmatmul.mubr.f32.gmra.mxu0 %v132
    %v309 = vpop.f32.mrf.mxu0
    %v310 = vadd.f32 %v92, %v309
    %v311 = vpop.f32.mrf.mxu0
    %312 = vmatprep.mubr.f32.mxu0 0.0
    %313 = vmatmul.mubr.f32.gmra.mxu0 %v135
    %v314 = vpop.f32.mrf.mxu0
    %v315 = vadd.f32 %v92, %v314
    %v316 = vpop.f32.mrf.mxu0
    %317 = vmatprep.mubr.f32.mxu0 0.0
    %318 = vmatmul.mubr.f32.gmra.mxu0 %v138
    %v319 = vpop.f32.mrf.mxu0
    %v320 = vadd.f32 %v92, %v319
    %v321 = vpop.f32.mrf.mxu0
    %322 = vmatprep.mubr.f32.mxu0 0.0
    %323 = vmatmul.mubr.f32.gmra.mxu0 %v141
    %v324 = vpop.f32.mrf.mxu0
    %v325 = vadd.f32 %v92, %v324
    %v326 = vpop.f32.mrf.mxu0
    %327 = vmatprep.mubr.f32.mxu0 0.0
    %328 = vmatmul.mubr.f32.gmra.mxu0 %v144
    %v329 = vpop.f32.mrf.mxu0
    %v330 = vadd.f32 %v92, %v329
    %v331 = vpop.f32.mrf.mxu0
    %332 = vmatprep.mubr.f32.mxu0 0.0
    %333 = vmatmul.mubr.f32.gmra.mxu0 %v147
    %v334 = vpop.f32.mrf.mxu0
    %v335 = vadd.f32 %v92, %v334
    %v336 = vpop.f32.mrf.mxu0
    %337 = vmatprep.mubr.f32.mxu0 0.0
    %338 = vmatmul.mubr.f32.gmra.mxu0 %v150
    %v339 = vpop.f32.mrf.mxu0
    %v340 = vadd.f32 %v92, %v339
    %v341 = vpop.f32.mrf.mxu0
    %342 = vmatprep.mubr.f32.mxu0 0.0
    %343 = vmatmul.mubr.f32.gmra.mxu0 %v153
    %v344 = vpop.f32.mrf.mxu0
    %v345 = vadd.f32 %v92, %v344
    %v346 = vpop.f32.mrf.mxu0
    %347 = vmatprep.mubr.f32.mxu0 0.0
    %348 = vmatmul.mubr.f32.gmra.mxu0 %v156
    %v349 = vpop.f32.mrf.mxu0
    %v350 = vadd.f32 %v92, %v349
    %v351 = vpop.f32.mrf.mxu0
    %352 = vmatprep.mubr.f32.mxu0 0.0
    %353 = vmatmul.mubr.f32.gmra.mxu0 %v159
    %v354 = vpop.f32.mrf.mxu0
    %v355 = vadd.f32 %v92, %v354
    %v356 = vpop.f32.mrf.mxu0
    %357 = vmatprep.mubr.f32.mxu0 0.0
    %358 = vmatmul.mubr.f32.gmra.mxu0 %v162
    %v359 = vpop.f32.mrf.mxu0
    %v360 = vadd.f32 %v92, %v359
    %v361 = vpop.f32.mrf.mxu0
    %362 = vmatprep.mubr.f32.mxu0 0.0
    %363 = vmatmul.mubr.f32.gmra.mxu0 %v165
    %v364 = vpop.f32.mrf.mxu0
    %v365 = vadd.f32 %v92, %v364
    %v366 = vpop.f32.mrf.mxu0
    %367 = vmatprep.mubr.f32.mxu0 0.0
    %368 = vmatmul.mubr.f32.gmra.mxu0 %v168
    %v369 = vpop.f32.mrf.mxu0
    %v370 = vadd.f32 %v92, %v369
    %v371 = vpop.f32.mrf.mxu0
    %372 = vmatprep.mubr.f32.mxu0 0.0
    %373 = vmatmul.mubr.f32.gmra.mxu0 %v171
    %v374 = vpop.f32.mrf.mxu0
    %v375 = vadd.f32 %v92, %v374
    %v376 = vpop.f32.mrf.mxu0
    %377 = vmatprep.mubr.f32.mxu0 0.0
    %378 = vmatmul.mubr.f32.gmra.mxu0 %v174
    %v379 = vpop.f32.mrf.mxu0
    %v380 = vadd.f32 %v92, %v379
    %v381 = vpop.f32.mrf.mxu0
    %382 = vmatprep.mubr.f32.mxu0 0.0
    %383 = vmatmul.mubr.f32.gmra.mxu0 %v177
    %v384 = vpop.f32.mrf.mxu0
    %v385 = vadd.f32 %v92, %v384
    %v386 = vpop.f32.mrf.mxu0
    %387 = vdwg.mxu0
    %vm388 = vcmask 261120
    %v390 = vsel %vm388, 0.0, 0
    %392 = vmatprep.subr.mxu0 0.0
    %393 = vmatpush1.msra.mxu0 0.0
    %394 = vmatprep.subr.mxu0 0.0
    %395 = vmatpush1.msra.mxu0 0.0
    %396 = vmatprep.subr.mxu0 0.0
    %397 = vmatpush1.msra.mxu0 0.0
    %398 = vmatprep.subr.mxu0 0.0
    %399 = vmatpush1.msra.mxu0 0.0
    %400 = vmatprep.subr.mxu0 0.0
    %401 = vmatpush1.msra.mxu0 0.0
    %402 = vmatprep.subr.mxu0 0.0
    %403 = vmatpush1.msra.mxu0 0.0
    %404 = vmatprep.subr.mxu0 0.0
    %405 = vmatpush1.msra.mxu0 0.0
    %406 = vmatprep.subr.mxu0 0.0
    %407 = vmatpush1.msra.mxu0 0.0
    %408 = vmatprep.subr.mxu0 0.0
    %409 = vmatpush1.msra.mxu0 0.0
    %410 = vmatprep.subr.mxu0 0.0
    %411 = vmatpush1.msra.mxu0 0.0
    %412 = vmatprep.subr.mxu0 0.0
    %413 = vmatpush1.msra.mxu0 0.0
    %414 = vmatprep.subr.mxu0 0.0
    %415 = vmatpush1.msra.mxu0 0.0
    %416 = vmatprep.subr.mxu0 0.0
    %417 = vmatpush1.msra.mxu0 %v43
    %418 = vmatprep.subr.mxu0 0.0
    %419 = vmatpush1.msra.mxu0 %v42
    %420 = vmatprep.subr.mxu0 0.0
    %421 = vmatpush1.msra.mxu0 %v41
    %422 = vmatprep.subr.mxu0 0.0
    %423 = vmatpush1.msra.mxu0 %v40
    %424 = vmatprep.subr.mxu0 0.0
    %425 = vmatpush2.msra.mxu0 0.0
    %426 = vmatprep.subr.mxu0 0.0
    %427 = vmatpush2.msra.mxu0 0.0
    %428 = vmatprep.subr.mxu0 0.0
    %429 = vmatpush2.msra.mxu0 0.0
    %430 = vmatprep.subr.mxu0 0.0
    %431 = vmatpush2.msra.mxu0 0.0
    %432 = vmatprep.subr.mxu0 0.0
    %433 = vmatpush2.msra.mxu0 0.0
    %434 = vmatprep.subr.mxu0 0.0
    %435 = vmatpush2.msra.mxu0 0.0
    %436 = vmatprep.subr.mxu0 0.0
    %437 = vmatpush2.msra.mxu0 0.0
    %438 = vmatprep.subr.mxu0 0.0
    %439 = vmatpush2.msra.mxu0 0.0
    %440 = vmatprep.subr.mxu0 0.0
    %441 = vmatpush2.msra.mxu0 0.0
    %442 = vmatprep.subr.mxu0 0.0
    %443 = vmatpush2.msra.mxu0 0.0
    %444 = vmatprep.subr.mxu0 0.0
    %445 = vmatpush2.msra.mxu0 0.0
    %446 = vmatprep.subr.mxu0 0.0
    %447 = vmatpush2.msra.mxu0 0.0
    %448 = vmatprep.subr.mxu0 0.0
    %449 = vmatpush2.msra.mxu0 0.0
    %450 = vmatprep.subr.mxu0 0.0
    %451 = vmatpush2.msra.mxu0 0.0
    %452 = vmatprep.subr.mxu0 0.0
    %453 = vmatpush2.msra.mxu0 0.0
    %454 = vmatprep.subr.mxu0 0.0
    %455 = vmatpush2.msra.mxu0 0.0
    %456 = vmatprep.mubr.f32.mxu0 0.0
    %457 = vmatmul.mubr.f32.gmra.mxu0 %v390
    %v458 = vpop.f32.mrf.mxu0
    %v459 = vadd.f32 0.0, %v458
    %v460 = vpop.f32.mrf.mxu0
    %461 = vdwg.mxu0
    %v462 = vadd.f32 %v250, %v459
    %v463 = vtanh.pop %v462
    %v464 = vsel %vm388, %v463, 0.0
    %vm465 = vcmask 523264
    %v467 = vsel %vm465, %v464, 0
    %469 = vmatprep.subr.mxu0 0.0
    %470 = vmatpush1.msra.mxu0 0.0
    %471 = vmatprep.subr.mxu0 0.0
    %472 = vmatpush1.msra.mxu0 0.0
    %473 = vmatprep.subr.mxu0 0.0
    %474 = vmatpush1.msra.mxu0 0.0
    %475 = vmatprep.subr.mxu0 0.0
    %476 = vmatpush1.msra.mxu0 0.0
    %477 = vmatprep.subr.mxu0 0.0
    %478 = vmatpush1.msra.mxu0 0.0
    %479 = vmatprep.subr.mxu0 0.0
    %480 = vmatpush1.msra.mxu0 0.0
    %481 = vmatprep.subr.mxu0 0.0
    %482 = vmatpush1.msra.mxu0 0.0
    %483 = vmatprep.subr.mxu0 0.0
    %484 = vmatpush1.msra.mxu0 0.0
    %485 = vmatprep.subr.mxu0 0.0
    %486 = vmatpush1.msra.mxu0 %v51
    %487 = vmatprep.subr.mxu0 0.0
    %488 = vmatpush1.msra.mxu0 %v50
    %489 = vmatprep.subr.mxu0 0.0
    %490 = vmatpush1.msra.mxu0 %v49
    %491 = vmatprep.subr.mxu0 0.0
    %492 = vmatpush1.msra.mxu0 %v48
    %493 = vmatprep.subr.mxu0 0.0
    %494 = vmatpush1.msra.mxu0 %v47
    %495 = vmatprep.subr.mxu0 0.0
    %496 = vmatpush1.msra.mxu0 %v46
    %497 = vmatprep.subr.mxu0 0.0
    %498 = vmatpush1.msra.mxu0 %v45
    %499 = vmatprep.subr.mxu0 0.0
    %500 = vmatpush1.msra.mxu0 %v44
    %501 = vmatprep.subr.mxu0 0.0
    %502 = vmatpush2.msra.mxu0 0.0
    %503 = vmatprep.subr.mxu0 0.0
    %504 = vmatpush2.msra.mxu0 0.0
    %505 = vmatprep.subr.mxu0 0.0
    %506 = vmatpush2.msra.mxu0 0.0
    %507 = vmatprep.subr.mxu0 0.0
    %508 = vmatpush2.msra.mxu0 0.0
    %509 = vmatprep.subr.mxu0 0.0
    %510 = vmatpush2.msra.mxu0 0.0
    %511 = vmatprep.subr.mxu0 0.0
    %512 = vmatpush2.msra.mxu0 0.0
    %513 = vmatprep.subr.mxu0 0.0
    %514 = vmatpush2.msra.mxu0 0.0
    %515 = vmatprep.subr.mxu0 0.0
    %516 = vmatpush2.msra.mxu0 0.0
    %517 = vmatprep.subr.mxu0 0.0
    %518 = vmatpush2.msra.mxu0 0.0
    %519 = vmatprep.subr.mxu0 0.0
    %520 = vmatpush2.msra.mxu0 0.0
    %521 = vmatprep.subr.mxu0 0.0
    %522 = vmatpush2.msra.mxu0 0.0
    %523 = vmatprep.subr.mxu0 0.0
    %524 = vmatpush2.msra.mxu0 0.0
    %525 = vmatprep.subr.mxu0 0.0
    %526 = vmatpush2.msra.mxu0 0.0
    %527 = vmatprep.subr.mxu0 0.0
    %528 = vmatpush2.msra.mxu0 0.0
    %529 = vmatprep.subr.mxu0 0.0
    %530 = vmatpush2.msra.mxu0 0.0
    %531 = vmatprep.subr.mxu0 0.0
    %532 = vmatpush2.msra.mxu0 0.0
    %533 = vmatprep.mubr.f32.mxu0 0.0
    %534 = vmatmul.mubr.f32.gmra.mxu0 %v467
    %v535 = vpop.f32.mrf.mxu0
    %v536 = vadd.f32 %v57, %v535
    %v537 = vpop.f32.mrf.mxu0
    %538 = vdwg.mxu0
    %v539 = vtanh.pop %v536
    %v541 = vsel %vm388, %v463, 0
    %543 = vmatprep.subr.mxu0 0.0
    %544 = vmatpush1.msra.mxu0 0.0
    %545 = vmatprep.subr.mxu0 0.0
    %546 = vmatpush1.msra.mxu0 0.0
    %547 = vmatprep.subr.mxu0 0.0
    %548 = vmatpush1.msra.mxu0 0.0
    %549 = vmatprep.subr.mxu0 0.0
    %550 = vmatpush1.msra.mxu0 0.0
    %551 = vmatprep.subr.mxu0 0.0
    %552 = vmatpush1.msra.mxu0 0.0
    %553 = vmatprep.subr.mxu0 0.0
    %554 = vmatpush1.msra.mxu0 0.0
    %555 = vmatprep.subr.mxu0 0.0
    %556 = vmatpush1.msra.mxu0 0.0
    %557 = vmatprep.subr.mxu0 0.0
    %558 = vmatpush1.msra.mxu0 0.0
    %559 = vmatprep.subr.mxu0 0.0
    %560 = vmatpush1.msra.mxu0 0.0
    %561 = vmatprep.subr.mxu0 0.0
    %562 = vmatpush1.msra.mxu0 0.0
    %563 = vmatprep.subr.mxu0 0.0
    %564 = vmatpush1.msra.mxu0 0.0
    %565 = vmatprep.subr.mxu0 0.0
    %566 = vmatpush1.msra.mxu0 0.0
    %567 = vmatprep.subr.mxu0 0.0
    %568 = vmatpush1.msra.mxu0 %v43
    %569 = vmatprep.subr.mxu0 0.0
    %570 = vmatpush1.msra.mxu0 %v42
    %571 = vmatprep.subr.mxu0 0.0
    %572 = vmatpush1.msra.mxu0 %v41
    %573 = vmatprep.subr.mxu0 0.0
    %574 = vmatpush1.msra.mxu0 %v40
    %575 = vmatprep.subr.mxu0 0.0
    %576 = vmatpush2.msra.mxu0 0.0
    %577 = vmatprep.subr.mxu0 0.0
    %578 = vmatpush2.msra.mxu0 0.0
    %579 = vmatprep.subr.mxu0 0.0
    %580 = vmatpush2.msra.mxu0 0.0
    %581 = vmatprep.subr.mxu0 0.0
    %582 = vmatpush2.msra.mxu0 0.0
    %583 = vmatprep.subr.mxu0 0.0
    %584 = vmatpush2.msra.mxu0 0.0
    %585 = vmatprep.subr.mxu0 0.0
    %586 = vmatpush2.msra.mxu0 0.0
    %587 = vmatprep.subr.mxu0 0.0
    %588 = vmatpush2.msra.mxu0 0.0
    %589 = vmatprep.subr.mxu0 0.0
    %590 = vmatpush2.msra.mxu0 0.0
    %591 = vmatprep.subr.mxu0 0.0
    %592 = vmatpush2.msra.mxu0 0.0
    %593 = vmatprep.subr.mxu0 0.0
    %594 = vmatpush2.msra.mxu0 0.0
    %595 = vmatprep.subr.mxu0 0.0
    %596 = vmatpush2.msra.mxu0 0.0
    %597 = vmatprep.subr.mxu0 0.0
    %598 = vmatpush2.msra.mxu0 0.0
    %599 = vmatprep.subr.mxu0 0.0
    %600 = vmatpush2.msra.mxu0 0.0
    %601 = vmatprep.subr.mxu0 0.0
    %602 = vmatpush2.msra.mxu0 0.0
    %603 = vmatprep.subr.mxu0 0.0
    %604 = vmatpush2.msra.mxu0 0.0
    %605 = vmatprep.subr.mxu0 0.0
    %606 = vmatpush2.msra.mxu0 0.0
    %607 = vmatprep.mubr.f32.mxu0 0.0
    %608 = vmatmul.mubr.f32.gmra.mxu0 %v541
    %v609 = vpop.f32.mrf.mxu0
    %v610 = vadd.f32 0.0, %v609
    %v611 = vpop.f32.mrf.mxu0
    %612 = vdwg.mxu0
    %v613 = vadd.f32 %v255, %v610
    %v614 = vtanh.pop %v613
    %616 = vrot.lane.b32.xlu0 %v539, 32
    %v617 = vpop.permute.xlu0 %616
    %v619 = vsel %vm388, %v614, %v617
    %v621 = vsel %vm465, %v619, 0
    %623 = vmatprep.subr.mxu0 0.0
    %624 = vmatpush1.msra.mxu0 0.0
    %625 = vmatprep.subr.mxu0 0.0
    %626 = vmatpush1.msra.mxu0 0.0
    %627 = vmatprep.subr.mxu0 0.0
    %628 = vmatpush1.msra.mxu0 0.0
    %629 = vmatprep.subr.mxu0 0.0
    %630 = vmatpush1.msra.mxu0 0.0
    %631 = vmatprep.subr.mxu0 0.0
    %632 = vmatpush1.msra.mxu0 0.0
    %633 = vmatprep.subr.mxu0 0.0
    %634 = vmatpush1.msra.mxu0 0.0
    %635 = vmatprep.subr.mxu0 0.0
    %636 = vmatpush1.msra.mxu0 0.0
    %637 = vmatprep.subr.mxu0 0.0
    %638 = vmatpush1.msra.mxu0 0.0
    %639 = vmatprep.subr.mxu0 0.0
    %640 = vmatpush1.msra.mxu0 %v51
    %641 = vmatprep.subr.mxu0 0.0
    %642 = vmatpush1.msra.mxu0 %v50
    %643 = vmatprep.subr.mxu0 0.0
    %644 = vmatpush1.msra.mxu0 %v49
    %645 = vmatprep.subr.mxu0 0.0
    %646 = vmatpush1.msra.mxu0 %v48
    %647 = vmatprep.subr.mxu0 0.0
    %648 = vmatpush1.msra.mxu0 %v47
    %649 = vmatprep.subr.mxu0 0.0
    %650 = vmatpush1.msra.mxu0 %v46
    %651 = vmatprep.subr.mxu0 0.0
    %652 = vmatpush1.msra.mxu0 %v45
    %653 = vmatprep.subr.mxu0 0.0
    %654 = vmatpush1.msra.mxu0 %v44
    %655 = vmatprep.subr.mxu0 0.0
    %656 = vmatpush2.msra.mxu0 0.0
    %657 = vmatprep.subr.mxu0 0.0
    %658 = vmatpush2.msra.mxu0 0.0
    %659 = vmatprep.subr.mxu0 0.0
    %660 = vmatpush2.msra.mxu0 0.0
    %661 = vmatprep.subr.mxu0 0.0
    %662 = vmatpush2.msra.mxu0 0.0
    %663 = vmatprep.subr.mxu0 0.0
    %664 = vmatpush2.msra.mxu0 0.0
    %665 = vmatprep.subr.mxu0 0.0
    %666 = vmatpush2.msra.mxu0 0.0
    %667 = vmatprep.subr.mxu0 0.0
    %668 = vmatpush2.msra.mxu0 0.0
    %669 = vmatprep.subr.mxu0 0.0
    %670 = vmatpush2.msra.mxu0 0.0
    %671 = vmatprep.subr.mxu0 0.0
    %672 = vmatpush2.msra.mxu0 0.0
    %673 = vmatprep.subr.mxu0 0.0
    %674 = vmatpush2.msra.mxu0 0.0
    %675 = vmatprep.subr.mxu0 0.0
    %676 = vmatpush2.msra.mxu0 0.0
    %677 = vmatprep.subr.mxu0 0.0
    %678 = vmatpush2.msra.mxu0 0.0
    %679 = vmatprep.subr.mxu0 0.0
    %680 = vmatpush2.msra.mxu0 0.0
    %681 = vmatprep.subr.mxu0 0.0
    %682 = vmatpush2.msra.mxu0 0.0
    %683 = vmatprep.subr.mxu0 0.0
    %684 = vmatpush2.msra.mxu0 0.0
    %685 = vmatprep.subr.mxu0 0.0
    %686 = vmatpush2.msra.mxu0 0.0
    %687 = vmatprep.mubr.f32.mxu0 0.0
    %688 = vmatmul.mubr.f32.gmra.mxu0 %v621
    %v689 = vpop.f32.mrf.mxu0
    %v690 = vadd.f32 %v57, %v689
    %v691 = vpop.f32.mrf.mxu0
    %692 = vdwg.mxu0
    %v693 = vtanh.pop %v690
    %v695 = vsel %vm388, %v614, 0
    %697 = vmatprep.subr.mxu0 0.0
    %698 = vmatpush1.msra.mxu0 0.0
    %699 = vmatprep.subr.mxu0 0.0
    %700 = vmatpush1.msra.mxu0 0.0
    %701 = vmatprep.subr.mxu0 0.0
    %702 = vmatpush1.msra.mxu0 0.0
    %703 = vmatprep.subr.mxu0 0.0
    %704 = vmatpush1.msra.mxu0 0.0
    %705 = vmatprep.subr.mxu0 0.0
    %706 = vmatpush1.msra.mxu0 0.0
    %707 = vmatprep.subr.mxu0 0.0
    %708 = vmatpush1.msra.mxu0 0.0
    %709 = vmatprep.subr.mxu0 0.0
    %710 = vmatpush1.msra.mxu0 0.0
    %711 = vmatprep.subr.mxu0 0.0
    %712 = vmatpush1.msra.mxu0 0.0
    %713 = vmatprep.subr.mxu0 0.0
    %714 = vmatpush1.msra.mxu0 0.0
    %715 = vmatprep.subr.mxu0 0.0
    %716 = vmatpush1.msra.mxu0 0.0
    %717 = vmatprep.subr.mxu0 0.0
    %718 = vmatpush1.msra.mxu0 0.0
    %719 = vmatprep.subr.mxu0 0.0
    %720 = vmatpush1.msra.mxu0 0.0
    %721 = vmatprep.subr.mxu0 0.0
    %722 = vmatpush1.msra.mxu0 %v43
    %723 = vmatprep.subr.mxu0 0.0
    %724 = vmatpush1.msra.mxu0 %v42
    %725 = vmatprep.subr.mxu0 0.0
    %726 = vmatpush1.msra.mxu0 %v41
    %727 = vmatprep.subr.mxu0 0.0
    %728 = vmatpush1.msra.mxu0 %v40
    %729 = vmatprep.subr.mxu0 0.0
    %730 = vmatpush2.msra.mxu0 0.0
    %731 = vmatprep.subr.mxu0 0.0
    %732 = vmatpush2.msra.mxu0 0.0
    %733 = vmatprep.subr.mxu0 0.0
    %734 = vmatpush2.msra.mxu0 0.0
    %735 = vmatprep.subr.mxu0 0.0
    %736 = vmatpush2.msra.mxu0 0.0
    %737 = vmatprep.subr.mxu0 0.0
    %738 = vmatpush2.msra.mxu0 0.0
    %739 = vmatprep.subr.mxu0 0.0
    %740 = vmatpush2.msra.mxu0 0.0
    %741 = vmatprep.subr.mxu0 0.0
    %742 = vmatpush2.msra.mxu0 0.0
    %743 = vmatprep.subr.mxu0 0.0
    %744 = vmatpush2.msra.mxu0 0.0
    %745 = vmatprep.subr.mxu0 0.0
    %746 = vmatpush2.msra.mxu0 0.0
    %747 = vmatprep.subr.mxu0 0.0
    %748 = vmatpush2.msra.mxu0 0.0
    %749 = vmatprep.subr.mxu0 0.0
    %750 = vmatpush2.msra.mxu0 0.0
    %751 = vmatprep.subr.mxu0 0.0
    %752 = vmatpush2.msra.mxu0 0.0
    %753 = vmatprep.subr.mxu0 0.0
    %754 = vmatpush2.msra.mxu0 0.0
    %755 = vmatprep.subr.mxu0 0.0
    %756 = vmatpush2.msra.mxu0 0.0
    %757 = vmatprep.subr.mxu0 0.0
    %758 = vmatpush2.msra.mxu0 0.0
    %759 = vmatprep.subr.mxu0 0.0
    %760 = vmatpush2.msra.mxu0 0.0
    %761 = vmatprep.mubr.f32.mxu0 0.0
    %762 = vmatmul.mubr.f32.gmra.mxu0 %v695
    %v763 = vpop.f32.mrf.mxu0
    %v764 = vadd.f32 0.0, %v763
    %v765 = vpop.f32.mrf.mxu0
    %766 = vdwg.mxu0
    %v767 = vadd.f32 %v260, %v764
    %v768 = vtanh.pop %v767
    %770 = vrot.lane.b32.xlu0 %v693, 32
    %v771 = vpop.permute.xlu0 %770
    %v773 = vsel %vm388, %v768, %v771
    %v775 = vsel %vm465, %v773, 0
    %777 = vmatprep.subr.mxu0 0.0
    %778 = vmatpush1.msra.mxu0 0.0
    %779 = vmatprep.subr.mxu0 0.0
    %780 = vmatpush1.msra.mxu0 0.0
    %781 = vmatprep.subr.mxu0 0.0
    %782 = vmatpush1.msra.mxu0 0.0
    %783 = vmatprep.subr.mxu0 0.0
    %784 = vmatpush1.msra.mxu0 0.0
    %785 = vmatprep.subr.mxu0 0.0
    %786 = vmatpush1.msra.mxu0 0.0
    %787 = vmatprep.subr.mxu0 0.0
    %788 = vmatpush1.msra.mxu0 0.0
    %789 = vmatprep.subr.mxu0 0.0
    %790 = vmatpush1.msra.mxu0 0.0
    %791 = vmatprep.subr.mxu0 0.0
    %792 = vmatpush1.msra.mxu0 0.0
    %793 = vmatprep.subr.mxu0 0.0
    %794 = vmatpush1.msra.mxu0 %v51
    %795 = vmatprep.subr.mxu0 0.0
    %796 = vmatpush1.msra.mxu0 %v50
    %797 = vmatprep.subr.mxu0 0.0
    %798 = vmatpush1.msra.mxu0 %v49
    %799 = vmatprep.subr.mxu0 0.0
    %800 = vmatpush1.msra.mxu0 %v48
    %801 = vmatprep.subr.mxu0 0.0
    %802 = vmatpush1.msra.mxu0 %v47
    %803 = vmatprep.subr.mxu0 0.0
    %804 = vmatpush1.msra.mxu0 %v46
    %805 = vmatprep.subr.mxu0 0.0
    %806 = vmatpush1.msra.mxu0 %v45
    %807 = vmatprep.subr.mxu0 0.0
    %808 = vmatpush1.msra.mxu0 %v44
    %809 = vmatprep.subr.mxu0 0.0
    %810 = vmatpush2.msra.mxu0 0.0
    %811 = vmatprep.subr.mxu0 0.0
    %812 = vmatpush2.msra.mxu0 0.0
    %813 = vmatprep.subr.mxu0 0.0
    %814 = vmatpush2.msra.mxu0 0.0
    %815 = vmatprep.subr.mxu0 0.0
    %816 = vmatpush2.msra.mxu0 0.0
    %817 = vmatprep.subr.mxu0 0.0
    %818 = vmatpush2.msra.mxu0 0.0
    %819 = vmatprep.subr.mxu0 0.0
    %820 = vmatpush2.msra.mxu0 0.0
    %821 = vmatprep.subr.mxu0 0.0
    %822 = vmatpush2.msra.mxu0 0.0
    %823 = vmatprep.subr.mxu0 0.0
    %824 = vmatpush2.msra.mxu0 0.0
    %825 = vmatprep.subr.mxu0 0.0
    %826 = vmatpush2.msra.mxu0 0.0
    %827 = vmatprep.subr.mxu0 0.0
    %828 = vmatpush2.msra.mxu0 0.0
    %829 = vmatprep.subr.mxu0 0.0
    %830 = vmatpush2.msra.mxu0 0.0
    %831 = vmatprep.subr.mxu0 0.0
    %832 = vmatpush2.msra.mxu0 0.0
    %833 = vmatprep.subr.mxu0 0.0
    %834 = vmatpush2.msra.mxu0 0.0
    %835 = vmatprep.subr.mxu0 0.0
    %836 = vmatpush2.msra.mxu0 0.0
    %837 = vmatprep.subr.mxu0 0.0
    %838 = vmatpush2.msra.mxu0 0.0
    %839 = vmatprep.subr.mxu0 0.0
    %840 = vmatpush2.msra.mxu0 0.0
    %841 = vmatprep.mubr.f32.mxu0 0.0
    %842 = vmatmul.mubr.f32.gmra.mxu0 %v775
    %v843 = vpop.f32.mrf.mxu0
    %v844 = vadd.f32 %v57, %v843
    %v845 = vpop.f32.mrf.mxu0
    %846 = vdwg.mxu0
    %v847 = vtanh.pop %v844
    %v849 = vsel %vm388, %v768, 0
    %851 = vmatprep.subr.mxu0 0.0
    %852 = vmatpush1.msra.mxu0 0.0
    %853 = vmatprep.subr.mxu0 0.0
    %854 = vmatpush1.msra.mxu0 0.0
    %855 = vmatprep.subr.mxu0 0.0
    %856 = vmatpush1.msra.mxu0 0.0
    %857 = vmatprep.subr.mxu0 0.0
    %858 = vmatpush1.msra.mxu0 0.0
    %859 = vmatprep.subr.mxu0 0.0
    %860 = vmatpush1.msra.mxu0 0.0
    %861 = vmatprep.subr.mxu0 0.0
    %862 = vmatpush1.msra.mxu0 0.0
    %863 = vmatprep.subr.mxu0 0.0
    %864 = vmatpush1.msra.mxu0 0.0
    %865 = vmatprep.subr.mxu0 0.0
    %866 = vmatpush1.msra.mxu0 0.0
    %867 = vmatprep.subr.mxu0 0.0
    %868 = vmatpush1.msra.mxu0 0.0
    %869 = vmatprep.subr.mxu0 0.0
    %870 = vmatpush1.msra.mxu0 0.0
    %871 = vmatprep.subr.mxu0 0.0
    %872 = vmatpush1.msra.mxu0 0.0
    %873 = vmatprep.subr.mxu0 0.0
    %874 = vmatpush1.msra.mxu0 0.0
    %875 = vmatprep.subr.mxu0 0.0
    %876 = vmatpush1.msra.mxu0 %v43
    %877 = vmatprep.subr.mxu0 0.0
    %878 = vmatpush1.msra.mxu0 %v42
    %879 = vmatprep.subr.mxu0 0.0
    %880 = vmatpush1.msra.mxu0 %v41
    %881 = vmatprep.subr.mxu0 0.0
    %882 = vmatpush1.msra.mxu0 %v40
    %883 = vmatprep.subr.mxu0 0.0
    %884 = vmatpush2.msra.mxu0 0.0
    %885 = vmatprep.subr.mxu0 0.0
    %886 = vmatpush2.msra.mxu0 0.0
    %887 = vmatprep.subr.mxu0 0.0
    %888 = vmatpush2.msra.mxu0 0.0
    %889 = vmatprep.subr.mxu0 0.0
    %890 = vmatpush2.msra.mxu0 0.0
    %891 = vmatprep.subr.mxu0 0.0
    %892 = vmatpush2.msra.mxu0 0.0
    %893 = vmatprep.subr.mxu0 0.0
    %894 = vmatpush2.msra.mxu0 0.0
    %895 = vmatprep.subr.mxu0 0.0
    %896 = vmatpush2.msra.mxu0 0.0
    %897 = vmatprep.subr.mxu0 0.0
    %898 = vmatpush2.msra.mxu0 0.0
    %899 = vmatprep.subr.mxu0 0.0
    %900 = vmatpush2.msra.mxu0 0.0
    %901 = vmatprep.subr.mxu0 0.0
    %902 = vmatpush2.msra.mxu0 0.0
    %903 = vmatprep.subr.mxu0 0.0
    %904 = vmatpush2.msra.mxu0 0.0
    %905 = vmatprep.subr.mxu0 0.0
    %906 = vmatpush2.msra.mxu0 0.0
    %907 = vmatprep.subr.mxu0 0.0
    %908 = vmatpush2.msra.mxu0 0.0
    %909 = vmatprep.subr.mxu0 0.0
    %910 = vmatpush2.msra.mxu0 0.0
    %911 = vmatprep.subr.mxu0 0.0
    %912 = vmatpush2.msra.mxu0 0.0
    %913 = vmatprep.subr.mxu0 0.0
    %914 = vmatpush2.msra.mxu0 0.0
    %915 = vmatprep.mubr.f32.mxu0 0.0
    %916 = vmatmul.mubr.f32.gmra.mxu0 %v849
    %v917 = vpop.f32.mrf.mxu0
    %v918 = vadd.f32 0.0, %v917
    %v919 = vpop.f32.mrf.mxu0
    %920 = vdwg.mxu0
    %v921 = vadd.f32 %v265, %v918
    %v922 = vtanh.pop %v921
    %924 = vrot.lane.b32.xlu0 %v847, 32
    %v925 = vpop.permute.xlu0 %924
    %v927 = vsel %vm388, %v922, %v925
    %v929 = vsel %vm465, %v927, 0
    %931 = vmatprep.subr.mxu0 0.0
    %932 = vmatpush1.msra.mxu0 0.0
    %933 = vmatprep.subr.mxu0 0.0
    %934 = vmatpush1.msra.mxu0 0.0
    %935 = vmatprep.subr.mxu0 0.0
    %936 = vmatpush1.msra.mxu0 0.0
    %937 = vmatprep.subr.mxu0 0.0
    %938 = vmatpush1.msra.mxu0 0.0
    %939 = vmatprep.subr.mxu0 0.0
    %940 = vmatpush1.msra.mxu0 0.0
    %941 = vmatprep.subr.mxu0 0.0
    %942 = vmatpush1.msra.mxu0 0.0
    %943 = vmatprep.subr.mxu0 0.0
    %944 = vmatpush1.msra.mxu0 0.0
    %945 = vmatprep.subr.mxu0 0.0
    %946 = vmatpush1.msra.mxu0 0.0
    %947 = vmatprep.subr.mxu0 0.0
    %948 = vmatpush1.msra.mxu0 %v51
    %949 = vmatprep.subr.mxu0 0.0
    %950 = vmatpush1.msra.mxu0 %v50
    %951 = vmatprep.subr.mxu0 0.0
    %952 = vmatpush1.msra.mxu0 %v49
    %953 = vmatprep.subr.mxu0 0.0
    %954 = vmatpush1.msra.mxu0 %v48
    %955 = vmatprep.subr.mxu0 0.0
    %956 = vmatpush1.msra.mxu0 %v47
    %957 = vmatprep.subr.mxu0 0.0
    %958 = vmatpush1.msra.mxu0 %v46
    %959 = vmatprep.subr.mxu0 0.0
    %960 = vmatpush1.msra.mxu0 %v45
    %961 = vmatprep.subr.mxu0 0.0
    %962 = vmatpush1.msra.mxu0 %v44
    %963 = vmatprep.subr.mxu0 0.0
    %964 = vmatpush2.msra.mxu0 0.0
    %965 = vmatprep.subr.mxu0 0.0
    %966 = vmatpush2.msra.mxu0 0.0
    %967 = vmatprep.subr.mxu0 0.0
    %968 = vmatpush2.msra.mxu0 0.0
    %969 = vmatprep.subr.mxu0 0.0
    %970 = vmatpush2.msra.mxu0 0.0
    %971 = vmatprep.subr.mxu0 0.0
    %972 = vmatpush2.msra.mxu0 0.0
    %973 = vmatprep.subr.mxu0 0.0
    %974 = vmatpush2.msra.mxu0 0.0
    %975 = vmatprep.subr.mxu0 0.0
    %976 = vmatpush2.msra.mxu0 0.0
    %977 = vmatprep.subr.mxu0 0.0
    %978 = vmatpush2.msra.mxu0 0.0
    %979 = vmatprep.subr.mxu0 0.0
    %980 = vmatpush2.msra.mxu0 0.0
    %981 = vmatprep.subr.mxu0 0.0
    %982 = vmatpush2.msra.mxu0 0.0
    %983 = vmatprep.subr.mxu0 0.0
    %984 = vmatpush2.msra.mxu0 0.0
    %985 = vmatprep.subr.mxu0 0.0
    %986 = vmatpush2.msra.mxu0 0.0
    %987 = vmatprep.subr.mxu0 0.0
    %988 = vmatpush2.msra.mxu0 0.0
    %989 = vmatprep.subr.mxu0 0.0
    %990 = vmatpush2.msra.mxu0 0.0
    %991 = vmatprep.subr.mxu0 0.0
    %992 = vmatpush2.msra.mxu0 0.0
    %993 = vmatprep.subr.mxu0 0.0
    %994 = vmatpush2.msra.mxu0 0.0
    %995 = vmatprep.mubr.f32.mxu0 0.0
    %996 = vmatmul.mubr.f32.gmra.mxu0 %v929
    %v997 = vpop.f32.mrf.mxu0
    %v998 = vadd.f32 %v57, %v997
    %v999 = vpop.f32.mrf.mxu0
    %1000 = vdwg.mxu0
    %v1001 = vtanh.pop %v998
    %v1003 = vsel %vm388, %v922, 0
    %1005 = vmatprep.subr.mxu0 0.0
    %1006 = vmatpush1.msra.mxu0 0.0
    %1007 = vmatprep.subr.mxu0 0.0
    %1008 = vmatpush1.msra.mxu0 0.0
    %1009 = vmatprep.subr.mxu0 0.0
    %1010 = vmatpush1.msra.mxu0 0.0
    %1011 = vmatprep.subr.mxu0 0.0
    %1012 = vmatpush1.msra.mxu0 0.0
    %1013 = vmatprep.subr.mxu0 0.0
    %1014 = vmatpush1.msra.mxu0 0.0
    %1015 = vmatprep.subr.mxu0 0.0
    %1016 = vmatpush1.msra.mxu0 0.0
    %1017 = vmatprep.subr.mxu0 0.0
    %1018 = vmatpush1.msra.mxu0 0.0
    %1019 = vmatprep.subr.mxu0 0.0
    %1020 = vmatpush1.msra.mxu0 0.0
    %1021 = vmatprep.subr.mxu0 0.0
    %1022 = vmatpush1.msra.mxu0 0.0
    %1023 = vmatprep.subr.mxu0 0.0
    %1024 = vmatpush1.msra.mxu0 0.0
    %1025 = vmatprep.subr.mxu0 0.0
    %1026 = vmatpush1.msra.mxu0 0.0
    %1027 = vmatprep.subr.mxu0 0.0
    %1028 = vmatpush1.msra.mxu0 0.0
    %1029 = vmatprep.subr.mxu0 0.0
    %1030 = vmatpush1.msra.mxu0 %v43
    %1031 = vmatprep.subr.mxu0 0.0
    %1032 = vmatpush1.msra.mxu0 %v42
    %1033 = vmatprep.subr.mxu0 0.0
    %1034 = vmatpush1.msra.mxu0 %v41
    %1035 = vmatprep.subr.mxu0 0.0
    %1036 = vmatpush1.msra.mxu0 %v40
    %1037 = vmatprep.subr.mxu0 0.0
    %1038 = vmatpush2.msra.mxu0 0.0
    %1039 = vmatprep.subr.mxu0 0.0
    %1040 = vmatpush2.msra.mxu0 0.0
    %1041 = vmatprep.subr.mxu0 0.0
    %1042 = vmatpush2.msra.mxu0 0.0
    %1043 = vmatprep.subr.mxu0 0.0
    %1044 = vmatpush2.msra.mxu0 0.0
    %1045 = vmatprep.subr.mxu0 0.0
    %1046 = vmatpush2.msra.mxu0 0.0
    %1047 = vmatprep.subr.mxu0 0.0
    %1048 = vmatpush2.msra.mxu0 0.0
    %1049 = vmatprep.subr.mxu0 0.0
    %1050 = vmatpush2.msra.mxu0 0.0
    %1051 = vmatprep.subr.mxu0 0.0
    %1052 = vmatpush2.msra.mxu0 0.0
    %1053 = vmatprep.subr.mxu0 0.0
    %1054 = vmatpush2.msra.mxu0 0.0
    %1055 = vmatprep.subr.mxu0 0.0
    %1056 = vmatpush2.msra.mxu0 0.0
    %1057 = vmatprep.subr.mxu0 0.0
    %1058 = vmatpush2.msra.mxu0 0.0
    %1059 = vmatprep.subr.mxu0 0.0
    %1060 = vmatpush2.msra.mxu0 0.0
    %1061 = vmatprep.subr.mxu0 0.0
    %1062 = vmatpush2.msra.mxu0 0.0
    %1063 = vmatprep.subr.mxu0 0.0
    %1064 = vmatpush2.msra.mxu0 0.0
    %1065 = vmatprep.subr.mxu0 0.0
    %1066 = vmatpush2.msra.mxu0 0.0
    %1067 = vmatprep.subr.mxu0 0.0
    %1068 = vmatpush2.msra.mxu0 0.0
    %1069 = vmatprep.mubr.f32.mxu0 0.0
    %1070 = vmatmul.mubr.f32.gmra.mxu0 %v1003
    %v1071 = vpop.f32.mrf.mxu0
    %v1072 = vadd.f32 0.0, %v1071
    %v1073 = vpop.f32.mrf.mxu0
    %1074 = vdwg.mxu0
    %v1075 = vadd.f32 %v270, %v1072
    %v1076 = vtanh.pop %v1075
    %1078 = vrot.lane.b32.xlu0 %v1001, 32
    %v1079 = vpop.permute.xlu0 %1078
    %v1081 = vsel %vm388, %v1076, %v1079
    %v1083 = vsel %vm465, %v1081, 0
    %1085 = vmatprep.subr.mxu0 0.0
    %1086 = vmatpush1.msra.mxu0 0.0
    %1087 = vmatprep.subr.mxu0 0.0
    %1088 = vmatpush1.msra.mxu0 0.0
    %1089 = vmatprep.subr.mxu0 0.0
    %1090 = vmatpush1.msra.mxu0 0.0
    %1091 = vmatprep.subr.mxu0 0.0
    %1092 = vmatpush1.msra.mxu0 0.0
    %1093 = vmatprep.subr.mxu0 0.0
    %1094 = vmatpush1.msra.mxu0 0.0
    %1095 = vmatprep.subr.mxu0 0.0
    %1096 = vmatpush1.msra.mxu0 0.0
    %1097 = vmatprep.subr.mxu0 0.0
    %1098 = vmatpush1.msra.mxu0 0.0
    %1099 = vmatprep.subr.mxu0 0.0
    %1100 = vmatpush1.msra.mxu0 0.0
    %1101 = vmatprep.subr.mxu0 0.0
    %1102 = vmatpush1.msra.mxu0 %v51
    %1103 = vmatprep.subr.mxu0 0.0
    %1104 = vmatpush1.msra.mxu0 %v50
    %1105 = vmatprep.subr.mxu0 0.0
    %1106 = vmatpush1.msra.mxu0 %v49
    %1107 = vmatprep.subr.mxu0 0.0
    %1108 = vmatpush1.msra.mxu0 %v48
    %1109 = vmatprep.subr.mxu0 0.0
    %1110 = vmatpush1.msra.mxu0 %v47
    %1111 = vmatprep.subr.mxu0 0.0
    %1112 = vmatpush1.msra.mxu0 %v46
    %1113 = vmatprep.subr.mxu0 0.0
    %1114 = vmatpush1.msra.mxu0 %v45
    %1115 = vmatprep.subr.mxu0 0.0
    %1116 = vmatpush1.msra.mxu0 %v44
    %1117 = vmatprep.subr.mxu0 0.0
    %1118 = vmatpush2.msra.mxu0 0.0
    %1119 = vmatprep.subr.mxu0 0.0
    %1120 = vmatpush2.msra.mxu0 0.0
    %1121 = vmatprep.subr.mxu0 0.0
    %1122 = vmatpush2.msra.mxu0 0.0
    %1123 = vmatprep.subr.mxu0 0.0
    %1124 = vmatpush2.msra.mxu0 0.0
    %1125 = vmatprep.subr.mxu0 0.0
    %1126 = vmatpush2.msra.mxu0 0.0
    %1127 = vmatprep.subr.mxu0 0.0
    %1128 = vmatpush2.msra.mxu0 0.0
    %1129 = vmatprep.subr.mxu0 0.0
    %1130 = vmatpush2.msra.mxu0 0.0
    %1131 = vmatprep.subr.mxu0 0.0
    %1132 = vmatpush2.msra.mxu0 0.0
    %1133 = vmatprep.subr.mxu0 0.0
    %1134 = vmatpush2.msra.mxu0 0.0
    %1135 = vmatprep.subr.mxu0 0.0
    %1136 = vmatpush2.msra.mxu0 0.0
    %1137 = vmatprep.subr.mxu0 0.0
    %1138 = vmatpush2.msra.mxu0 0.0
    %1139 = vmatprep.subr.mxu0 0.0
    %1140 = vmatpush2.msra.mxu0 0.0
    %1141 = vmatprep.subr.mxu0 0.0
    %1142 = vmatpush2.msra.mxu0 0.0
    %1143 = vmatprep.subr.mxu0 0.0
    %1144 = vmatpush2.msra.mxu0 0.0
    %1145 = vmatprep.subr.mxu0 0.0
    %1146 = vmatpush2.msra.mxu0 0.0
    %1147 = vmatprep.subr.mxu0 0.0
    %1148 = vmatpush2.msra.mxu0 0.0
    %1149 = vmatprep.mubr.f32.mxu0 0.0
    %1150 = vmatmul.mubr.f32.gmra.mxu0 %v1083
    %v1151 = vpop.f32.mrf.mxu0
    %v1152 = vadd.f32 %v57, %v1151
    %v1153 = vpop.f32.mrf.mxu0
    %1154 = vdwg.mxu0
    %v1155 = vtanh.pop %v1152
    %v1157 = vsel %vm388, %v1076, 0
    %1159 = vmatprep.subr.mxu0 0.0
    %1160 = vmatpush1.msra.mxu0 0.0
    %1161 = vmatprep.subr.mxu0 0.0
    %1162 = vmatpush1.msra.mxu0 0.0
    %1163 = vmatprep.subr.mxu0 0.0
    %1164 = vmatpush1.msra.mxu0 0.0
    %1165 = vmatprep.subr.mxu0 0.0
    %1166 = vmatpush1.msra.mxu0 0.0
    %1167 = vmatprep.subr.mxu0 0.0
    %1168 = vmatpush1.msra.mxu0 0.0
    %1169 = vmatprep.subr.mxu0 0.0
    %1170 = vmatpush1.msra.mxu0 0.0
    %1171 = vmatprep.subr.mxu0 0.0
    %1172 = vmatpush1.msra.mxu0 0.0
    %1173 = vmatprep.subr.mxu0 0.0
    %1174 = vmatpush1.msra.mxu0 0.0
    %1175 = vmatprep.subr.mxu0 0.0
    %1176 = vmatpush1.msra.mxu0 0.0
    %1177 = vmatprep.subr.mxu0 0.0
    %1178 = vmatpush1.msra.mxu0 0.0
    %1179 = vmatprep.subr.mxu0 0.0
    %1180 = vmatpush1.msra.mxu0 0.0
    %1181 = vmatprep.subr.mxu0 0.0
    %1182 = vmatpush1.msra.mxu0 0.0
    %1183 = vmatprep.subr.mxu0 0.0
    %1184 = vmatpush1.msra.mxu0 %v43
    %1185 = vmatprep.subr.mxu0 0.0
    %1186 = vmatpush1.msra.mxu0 %v42
    %1187 = vmatprep.subr.mxu0 0.0
    %1188 = vmatpush1.msra.mxu0 %v41
    %1189 = vmatprep.subr.mxu0 0.0
    %1190 = vmatpush1.msra.mxu0 %v40
    %1191 = vmatprep.subr.mxu0 0.0
    %1192 = vmatpush2.msra.mxu0 0.0
    %1193 = vmatprep.subr.mxu0 0.0
    %1194 = vmatpush2.msra.mxu0 0.0
    %1195 = vmatprep.subr.mxu0 0.0
    %1196 = vmatpush2.msra.mxu0 0.0
    %1197 = vmatprep.subr.mxu0 0.0
    %1198 = vmatpush2.msra.mxu0 0.0
    %1199 = vmatprep.subr.mxu0 0.0
    %1200 = vmatpush2.msra.mxu0 0.0
    %1201 = vmatprep.subr.mxu0 0.0
    %1202 = vmatpush2.msra.mxu0 0.0
    %1203 = vmatprep.subr.mxu0 0.0
    %1204 = vmatpush2.msra.mxu0 0.0
    %1205 = vmatprep.subr.mxu0 0.0
    %1206 = vmatpush2.msra.mxu0 0.0
    %1207 = vmatprep.subr.mxu0 0.0
    %1208 = vmatpush2.msra.mxu0 0.0
    %1209 = vmatprep.subr.mxu0 0.0
    %1210 = vmatpush2.msra.mxu0 0.0
    %1211 = vmatprep.subr.mxu0 0.0
    %1212 = vmatpush2.msra.mxu0 0.0
    %1213 = vmatprep.subr.mxu0 0.0
    %1214 = vmatpush2.msra.mxu0 0.0
    %1215 = vmatprep.subr.mxu0 0.0
    %1216 = vmatpush2.msra.mxu0 0.0
    %1217 = vmatprep.subr.mxu0 0.0
    %1218 = vmatpush2.msra.mxu0 0.0
    %1219 = vmatprep.subr.mxu0 0.0
    %1220 = vmatpush2.msra.mxu0 0.0
    %1221 = vmatprep.subr.mxu0 0.0
    %1222 = vmatpush2.msra.mxu0 0.0
    %1223 = vmatprep.mubr.f32.mxu0 0.0
    %1224 = vmatmul.mubr.f32.gmra.mxu0 %v1157
    %v1225 = vpop.f32.mrf.mxu0
    %v1226 = vadd.f32 0.0, %v1225
    %v1227 = vpop.f32.mrf.mxu0
    %1228 = vdwg.mxu0
    %v1229 = vadd.f32 %v275, %v1226
    %v1230 = vtanh.pop %v1229
    %1232 = vrot.lane.b32.xlu0 %v1155, 32
    %v1233 = vpop.permute.xlu0 %1232
    %v1235 = vsel %vm388, %v1230, %v1233
    %v1237 = vsel %vm465, %v1235, 0
    %1239 = vmatprep.subr.mxu0 0.0
    %1240 = vmatpush1.msra.mxu0 0.0
    %1241 = vmatprep.subr.mxu0 0.0
    %1242 = vmatpush1.msra.mxu0 0.0
    %1243 = vmatprep.subr.mxu0 0.0
    %1244 = vmatpush1.msra.mxu0 0.0
    %1245 = vmatprep.subr.mxu0 0.0
    %1246 = vmatpush1.msra.mxu0 0.0
    %1247 = vmatprep.subr.mxu0 0.0
    %1248 = vmatpush1.msra.mxu0 0.0
    %1249 = vmatprep.subr.mxu0 0.0
    %1250 = vmatpush1.msra.mxu0 0.0
    %1251 = vmatprep.subr.mxu0 0.0
    %1252 = vmatpush1.msra.mxu0 0.0
    %1253 = vmatprep.subr.mxu0 0.0
    %1254 = vmatpush1.msra.mxu0 0.0
    %1255 = vmatprep.subr.mxu0 0.0
    %1256 = vmatpush1.msra.mxu0 %v51
    %1257 = vmatprep.subr.mxu0 0.0
    %1258 = vmatpush1.msra.mxu0 %v50
    %1259 = vmatprep.subr.mxu0 0.0
    %1260 = vmatpush1.msra.mxu0 %v49
    %1261 = vmatprep.subr.mxu0 0.0
    %1262 = vmatpush1.msra.mxu0 %v48
    %1263 = vmatprep.subr.mxu0 0.0
    %1264 = vmatpush1.msra.mxu0 %v47
    %1265 = vmatprep.subr.mxu0 0.0
    %1266 = vmatpush1.msra.mxu0 %v46
    %1267 = vmatprep.subr.mxu0 0.0
    %1268 = vmatpush1.msra.mxu0 %v45
    %1269 = vmatprep.subr.mxu0 0.0
    %1270 = vmatpush1.msra.mxu0 %v44
    %1271 = vmatprep.subr.mxu0 0.0
    %1272 = vmatpush2.msra.mxu0 0.0
    %1273 = vmatprep.subr.mxu0 0.0
    %1274 = vmatpush2.msra.mxu0 0.0
    %1275 = vmatprep.subr.mxu0 0.0
    %1276 = vmatpush2.msra.mxu0 0.0
    %1277 = vmatprep.subr.mxu0 0.0
    %1278 = vmatpush2.msra.mxu0 0.0
    %1279 = vmatprep.subr.mxu0 0.0
    %1280 = vmatpush2.msra.mxu0 0.0
    %1281 = vmatprep.subr.mxu0 0.0
    %1282 = vmatpush2.msra.mxu0 0.0
    %1283 = vmatprep.subr.mxu0 0.0
    %1284 = vmatpush2.msra.mxu0 0.0
    %1285 = vmatprep.subr.mxu0 0.0
    %1286 = vmatpush2.msra.mxu0 0.0
    %1287 = vmatprep.subr.mxu0 0.0
    %1288 = vmatpush2.msra.mxu0 0.0
    %1289 = vmatprep.subr.mxu0 0.0
    %1290 = vmatpush2.msra.mxu0 0.0
    %1291 = vmatprep.subr.mxu0 0.0
    %1292 = vmatpush2.msra.mxu0 0.0
    %1293 = vmatprep.subr.mxu0 0.0
    %1294 = vmatpush2.msra.mxu0 0.0
    %1295 = vmatprep.subr.mxu0 0.0
    %1296 = vmatpush2.msra.mxu0 0.0
    %1297 = vmatprep.subr.mxu0 0.0
    %1298 = vmatpush2.msra.mxu0 0.0
    %1299 = vmatprep.subr.mxu0 0.0
    %1300 = vmatpush2.msra.mxu0 0.0
    %1301 = vmatprep.subr.mxu0 0.0
    %1302 = vmatpush2.msra.mxu0 0.0
    %1303 = vmatprep.mubr.f32.mxu0 0.0
    %1304 = vmatmul.mubr.f32.gmra.mxu0 %v1237
    %v1305 = vpop.f32.mrf.mxu0
    %v1306 = vadd.f32 %v57, %v1305
    %v1307 = vpop.f32.mrf.mxu0
    %1308 = vdwg.mxu0
    %v1309 = vtanh.pop %v1306
    %v1311 = vsel %vm388, %v1230, 0
    %1313 = vmatprep.subr.mxu0 0.0
    %1314 = vmatpush1.msra.mxu0 0.0
    %1315 = vmatprep.subr.mxu0 0.0
    %1316 = vmatpush1.msra.mxu0 0.0
    %1317 = vmatprep.subr.mxu0 0.0
    %1318 = vmatpush1.msra.mxu0 0.0
    %1319 = vmatprep.subr.mxu0 0.0
    %1320 = vmatpush1.msra.mxu0 0.0
    %1321 = vmatprep.subr.mxu0 0.0
    %1322 = vmatpush1.msra.mxu0 0.0
    %1323 = vmatprep.subr.mxu0 0.0
    %1324 = vmatpush1.msra.mxu0 0.0
    %1325 = vmatprep.subr.mxu0 0.0
    %1326 = vmatpush1.msra.mxu0 0.0
    %1327 = vmatprep.subr.mxu0 0.0
    %1328 = vmatpush1.msra.mxu0 0.0
    %1329 = vmatprep.subr.mxu0 0.0
    %1330 = vmatpush1.msra.mxu0 0.0
    %1331 = vmatprep.subr.mxu0 0.0
    %1332 = vmatpush1.msra.mxu0 0.0
    %1333 = vmatprep.subr.mxu0 0.0
    %1334 = vmatpush1.msra.mxu0 0.0
    %1335 = vmatprep.subr.mxu0 0.0
    %1336 = vmatpush1.msra.mxu0 0.0
    %1337 = vmatprep.subr.mxu0 0.0
    %1338 = vmatpush1.msra.mxu0 %v43
    %1339 = vmatprep.subr.mxu0 0.0
    %1340 = vmatpush1.msra.mxu0 %v42
    %1341 = vmatprep.subr.mxu0 0.0
    %1342 = vmatpush1.msra.mxu0 %v41
    %1343 = vmatprep.subr.mxu0 0.0
    %1344 = vmatpush1.msra.mxu0 %v40
    %1345 = vmatprep.subr.mxu0 0.0
    %1346 = vmatpush2.msra.mxu0 0.0
    %1347 = vmatprep.subr.mxu0 0.0
    %1348 = vmatpush2.msra.mxu0 0.0
    %1349 = vmatprep.subr.mxu0 0.0
    %1350 = vmatpush2.msra.mxu0 0.0
    %1351 = vmatprep.subr.mxu0 0.0
    %1352 = vmatpush2.msra.mxu0 0.0
    %1353 = vmatprep.subr.mxu0 0.0
    %1354 = vmatpush2.msra.mxu0 0.0
    %1355 = vmatprep.subr.mxu0 0.0
    %1356 = vmatpush2.msra.mxu0 0.0
    %1357 = vmatprep.subr.mxu0 0.0
    %1358 = vmatpush2.msra.mxu0 0.0
    %1359 = vmatprep.subr.mxu0 0.0
    %1360 = vmatpush2.msra.mxu0 0.0
    %1361 = vmatprep.subr.mxu0 0.0
    %1362 = vmatpush2.msra.mxu0 0.0
    %1363 = vmatprep.subr.mxu0 0.0
    %1364 = vmatpush2.msra.mxu0 0.0
    %1365 = vmatprep.subr.mxu0 0.0
    %1366 = vmatpush2.msra.mxu0 0.0
    %1367 = vmatprep.subr.mxu0 0.0
    %1368 = vmatpush2.msra.mxu0 0.0
    %1369 = vmatprep.subr.mxu0 0.0
    %1370 = vmatpush2.msra.mxu0 0.0
    %1371 = vmatprep.subr.mxu0 0.0
    %1372 = vmatpush2.msra.mxu0 0.0
    %1373 = vmatprep.subr.mxu0 0.0
    %1374 = vmatpush2.msra.mxu0 0.0
    %1375 = vmatprep.subr.mxu0 0.0
    %1376 = vmatpush2.msra.mxu0 0.0
    %1377 = vmatprep.mubr.f32.mxu0 0.0
    %1378 = vmatmul.mubr.f32.gmra.mxu0 %v1311
    %v1379 = vpop.f32.mrf.mxu0
    %v1380 = vadd.f32 0.0, %v1379
    %v1381 = vpop.f32.mrf.mxu0
    %1382 = vdwg.mxu0
    %v1383 = vadd.f32 %v280, %v1380
    %v1384 = vtanh.pop %v1383
    %1386 = vrot.lane.b32.xlu0 %v1309, 32
    %v1387 = vpop.permute.xlu0 %1386
    %v1389 = vsel %vm388, %v1384, %v1387
    %v1391 = vsel %vm465, %v1389, 0
    %1393 = vmatprep.subr.mxu0 0.0
    %1394 = vmatpush1.msra.mxu0 0.0
    %1395 = vmatprep.subr.mxu0 0.0
    %1396 = vmatpush1.msra.mxu0 0.0
    %1397 = vmatprep.subr.mxu0 0.0
    %1398 = vmatpush1.msra.mxu0 0.0
    %1399 = vmatprep.subr.mxu0 0.0
    %1400 = vmatpush1.msra.mxu0 0.0
    %1401 = vmatprep.subr.mxu0 0.0
    %1402 = vmatpush1.msra.mxu0 0.0
    %1403 = vmatprep.subr.mxu0 0.0
    %1404 = vmatpush1.msra.mxu0 0.0
    %1405 = vmatprep.subr.mxu0 0.0
    %1406 = vmatpush1.msra.mxu0 0.0
    %1407 = vmatprep.subr.mxu0 0.0
    %1408 = vmatpush1.msra.mxu0 0.0
    %1409 = vmatprep.subr.mxu0 0.0
    %1410 = vmatpush1.msra.mxu0 %v51
    %1411 = vmatprep.subr.mxu0 0.0
    %1412 = vmatpush1.msra.mxu0 %v50
    %1413 = vmatprep.subr.mxu0 0.0
    %1414 = vmatpush1.msra.mxu0 %v49
    %1415 = vmatprep.subr.mxu0 0.0
    %1416 = vmatpush1.msra.mxu0 %v48
    %1417 = vmatprep.subr.mxu0 0.0
    %1418 = vmatpush1.msra.mxu0 %v47
    %1419 = vmatprep.subr.mxu0 0.0
    %1420 = vmatpush1.msra.mxu0 %v46
    %1421 = vmatprep.subr.mxu0 0.0
    %1422 = vmatpush1.msra.mxu0 %v45
    %1423 = vmatprep.subr.mxu0 0.0
    %1424 = vmatpush1.msra.mxu0 %v44
    %1425 = vmatprep.subr.mxu0 0.0
    %1426 = vmatpush2.msra.mxu0 0.0
    %1427 = vmatprep.subr.mxu0 0.0
    %1428 = vmatpush2.msra.mxu0 0.0
    %1429 = vmatprep.subr.mxu0 0.0
    %1430 = vmatpush2.msra.mxu0 0.0
    %1431 = vmatprep.subr.mxu0 0.0
    %1432 = vmatpush2.msra.mxu0 0.0
    %1433 = vmatprep.subr.mxu0 0.0
    %1434 = vmatpush2.msra.mxu0 0.0
    %1435 = vmatprep.subr.mxu0 0.0
    %1436 = vmatpush2.msra.mxu0 0.0
    %1437 = vmatprep.subr.mxu0 0.0
    %1438 = vmatpush2.msra.mxu0 0.0
    %1439 = vmatprep.subr.mxu0 0.0
    %1440 = vmatpush2.msra.mxu0 0.0
    %1441 = vmatprep.subr.mxu0 0.0
    %1442 = vmatpush2.msra.mxu0 0.0
    %1443 = vmatprep.subr.mxu0 0.0
    %1444 = vmatpush2.msra.mxu0 0.0
    %1445 = vmatprep.subr.mxu0 0.0
    %1446 = vmatpush2.msra.mxu0 0.0
    %1447 = vmatprep.subr.mxu0 0.0
    %1448 = vmatpush2.msra.mxu0 0.0
    %1449 = vmatprep.subr.mxu0 0.0
    %1450 = vmatpush2.msra.mxu0 0.0
    %1451 = vmatprep.subr.mxu0 0.0
    %1452 = vmatpush2.msra.mxu0 0.0
    %1453 = vmatprep.subr.mxu0 0.0
    %1454 = vmatpush2.msra.mxu0 0.0
    %1455 = vmatprep.subr.mxu0 0.0
    %1456 = vmatpush2.msra.mxu0 0.0
    %1457 = vmatprep.mubr.f32.mxu0 0.0
    %1458 = vmatmul.mubr.f32.gmra.mxu0 %v1391
    %v1459 = vpop.f32.mrf.mxu0
    %v1460 = vadd.f32 %v57, %v1459
    %v1461 = vpop.f32.mrf.mxu0
    %1462 = vdwg.mxu0
    %v1463 = vtanh.pop %v1460
    %v1465 = vsel %vm388, %v1384, 0
    %1467 = vmatprep.subr.mxu0 0.0
    %1468 = vmatpush1.msra.mxu0 0.0
    %1469 = vmatprep.subr.mxu0 0.0
    %1470 = vmatpush1.msra.mxu0 0.0
    %1471 = vmatprep.subr.mxu0 0.0
    %1472 = vmatpush1.msra.mxu0 0.0
    %1473 = vmatprep.subr.mxu0 0.0
    %1474 = vmatpush1.msra.mxu0 0.0
    %1475 = vmatprep.subr.mxu0 0.0
    %1476 = vmatpush1.msra.mxu0 0.0
    %1477 = vmatprep.subr.mxu0 0.0
    %1478 = vmatpush1.msra.mxu0 0.0
    %1479 = vmatprep.subr.mxu0 0.0
    %1480 = vmatpush1.msra.mxu0 0.0
    %1481 = vmatprep.subr.mxu0 0.0
    %1482 = vmatpush1.msra.mxu0 0.0
    %1483 = vmatprep.subr.mxu0 0.0
    %1484 = vmatpush1.msra.mxu0 0.0
    %1485 = vmatprep.subr.mxu0 0.0
    %1486 = vmatpush1.msra.mxu0 0.0
    %1487 = vmatprep.subr.mxu0 0.0
    %1488 = vmatpush1.msra.mxu0 0.0
    %1489 = vmatprep.subr.mxu0 0.0
    %1490 = vmatpush1.msra.mxu0 0.0
    %1491 = vmatprep.subr.mxu0 0.0
    %1492 = vmatpush1.msra.mxu0 %v43
    %1493 = vmatprep.subr.mxu0 0.0
    %1494 = vmatpush1.msra.mxu0 %v42
    %1495 = vmatprep.subr.mxu0 0.0
    %1496 = vmatpush1.msra.mxu0 %v41
    %1497 = vmatprep.subr.mxu0 0.0
    %1498 = vmatpush1.msra.mxu0 %v40
    %1499 = vmatprep.subr.mxu0 0.0
    %1500 = vmatpush2.msra.mxu0 0.0
    %1501 = vmatprep.subr.mxu0 0.0
    %1502 = vmatpush2.msra.mxu0 0.0
    %1503 = vmatprep.subr.mxu0 0.0
    %1504 = vmatpush2.msra.mxu0 0.0
    %1505 = vmatprep.subr.mxu0 0.0
    %1506 = vmatpush2.msra.mxu0 0.0
    %1507 = vmatprep.subr.mxu0 0.0
    %1508 = vmatpush2.msra.mxu0 0.0
    %1509 = vmatprep.subr.mxu0 0.0
    %1510 = vmatpush2.msra.mxu0 0.0
    %1511 = vmatprep.subr.mxu0 0.0
    %1512 = vmatpush2.msra.mxu0 0.0
    %1513 = vmatprep.subr.mxu0 0.0
    %1514 = vmatpush2.msra.mxu0 0.0
    %1515 = vmatprep.subr.mxu0 0.0
    %1516 = vmatpush2.msra.mxu0 0.0
    %1517 = vmatprep.subr.mxu0 0.0
    %1518 = vmatpush2.msra.mxu0 0.0
    %1519 = vmatprep.subr.mxu0 0.0
    %1520 = vmatpush2.msra.mxu0 0.0
    %1521 = vmatprep.subr.mxu0 0.0
    %1522 = vmatpush2.msra.mxu0 0.0
    %1523 = vmatprep.subr.mxu0 0.0
    %1524 = vmatpush2.msra.mxu0 0.0
    %1525 = vmatprep.subr.mxu0 0.0
    %1526 = vmatpush2.msra.mxu0 0.0
    %1527 = vmatprep.subr.mxu0 0.0
    %1528 = vmatpush2.msra.mxu0 0.0
    %1529 = vmatprep.subr.mxu0 0.0
    %1530 = vmatpush2.msra.mxu0 0.0
    %1531 = vmatprep.mubr.f32.mxu0 0.0
    %1532 = vmatmul.mubr.f32.gmra.mxu0 %v1465
    %v1533 = vpop.f32.mrf.mxu0
    %v1534 = vadd.f32 0.0, %v1533
    %v1535 = vpop.f32.mrf.mxu0
    %1536 = vdwg.mxu0
    %v1537 = vadd.f32 %v285, %v1534
    %v1538 = vtanh.pop %v1537
    %1540 = vrot.lane.b32.xlu0 %v1463, 32
    %v1541 = vpop.permute.xlu0 %1540
    %v1543 = vsel %vm388, %v1538, %v1541
    %v1545 = vsel %vm465, %v1543, 0
    %1547 = vmatprep.subr.mxu0 0.0
    %1548 = vmatpush1.msra.mxu0 0.0
    %1549 = vmatprep.subr.mxu0 0.0
    %1550 = vmatpush1.msra.mxu0 0.0
    %1551 = vmatprep.subr.mxu0 0.0
    %1552 = vmatpush1.msra.mxu0 0.0
    %1553 = vmatprep.subr.mxu0 0.0
    %1554 = vmatpush1.msra.mxu0 0.0
    %1555 = vmatprep.subr.mxu0 0.0
    %1556 = vmatpush1.msra.mxu0 0.0
    %1557 = vmatprep.subr.mxu0 0.0
    %1558 = vmatpush1.msra.mxu0 0.0
    %1559 = vmatprep.subr.mxu0 0.0
    %1560 = vmatpush1.msra.mxu0 0.0
    %1561 = vmatprep.subr.mxu0 0.0
    %1562 = vmatpush1.msra.mxu0 0.0
    %1563 = vmatprep.subr.mxu0 0.0
    %1564 = vmatpush1.msra.mxu0 %v51
    %1565 = vmatprep.subr.mxu0 0.0
    %1566 = vmatpush1.msra.mxu0 %v50
    %1567 = vmatprep.subr.mxu0 0.0
    %1568 = vmatpush1.msra.mxu0 %v49
    %1569 = vmatprep.subr.mxu0 0.0
    %1570 = vmatpush1.msra.mxu0 %v48
    %1571 = vmatprep.subr.mxu0 0.0
    %1572 = vmatpush1.msra.mxu0 %v47
    %1573 = vmatprep.subr.mxu0 0.0
    %1574 = vmatpush1.msra.mxu0 %v46
    %1575 = vmatprep.subr.mxu0 0.0
    %1576 = vmatpush1.msra.mxu0 %v45
    %1577 = vmatprep.subr.mxu0 0.0
    %1578 = vmatpush1.msra.mxu0 %v44
    %1579 = vmatprep.subr.mxu0 0.0
    %1580 = vmatpush2.msra.mxu0 0.0
    %1581 = vmatprep.subr.mxu0 0.0
    %1582 = vmatpush2.msra.mxu0 0.0
    %1583 = vmatprep.subr.mxu0 0.0
    %1584 = vmatpush2.msra.mxu0 0.0
    %1585 = vmatprep.subr.mxu0 0.0
    %1586 = vmatpush2.msra.mxu0 0.0
    %1587 = vmatprep.subr.mxu0 0.0
    %1588 = vmatpush2.msra.mxu0 0.0
    %1589 = vmatprep.subr.mxu0 0.0
    %1590 = vmatpush2.msra.mxu0 0.0
    %1591 = vmatprep.subr.mxu0 0.0
    %1592 = vmatpush2.msra.mxu0 0.0
    %1593 = vmatprep.subr.mxu0 0.0
    %1594 = vmatpush2.msra.mxu0 0.0
    %1595 = vmatprep.subr.mxu0 0.0
    %1596 = vmatpush2.msra.mxu0 0.0
    %1597 = vmatprep.subr.mxu0 0.0
    %1598 = vmatpush2.msra.mxu0 0.0
    %1599 = vmatprep.subr.mxu0 0.0
    %1600 = vmatpush2.msra.mxu0 0.0
    %1601 = vmatprep.subr.mxu0 0.0
    %1602 = vmatpush2.msra.mxu0 0.0
    %1603 = vmatprep.subr.mxu0 0.0
    %1604 = vmatpush2.msra.mxu0 0.0
    %1605 = vmatprep.subr.mxu0 0.0
    %1606 = vmatpush2.msra.mxu0 0.0
    %1607 = vmatprep.subr.mxu0 0.0
    %1608 = vmatpush2.msra.mxu0 0.0
    %1609 = vmatprep.subr.mxu0 0.0
    %1610 = vmatpush2.msra.mxu0 0.0
    %1611 = vmatprep.mubr.f32.mxu0 0.0
    %1612 = vmatmul.mubr.f32.gmra.mxu0 %v1545
    %v1613 = vpop.f32.mrf.mxu0
    %v1614 = vadd.f32 %v57, %v1613
    %v1615 = vpop.f32.mrf.mxu0
    %1616 = vdwg.mxu0
    %v1617 = vtanh.pop %v1614
    %v1619 = vsel %vm388, %v1538, 0
    %1621 = vmatprep.subr.mxu0 0.0
    %1622 = vmatpush1.msra.mxu0 0.0
    %1623 = vmatprep.subr.mxu0 0.0
    %1624 = vmatpush1.msra.mxu0 0.0
    %1625 = vmatprep.subr.mxu0 0.0
    %1626 = vmatpush1.msra.mxu0 0.0
    %1627 = vmatprep.subr.mxu0 0.0
    %1628 = vmatpush1.msra.mxu0 0.0
    %1629 = vmatprep.subr.mxu0 0.0
    %1630 = vmatpush1.msra.mxu0 0.0
    %1631 = vmatprep.subr.mxu0 0.0
    %1632 = vmatpush1.msra.mxu0 0.0
    %1633 = vmatprep.subr.mxu0 0.0
    %1634 = vmatpush1.msra.mxu0 0.0
    %1635 = vmatprep.subr.mxu0 0.0
    %1636 = vmatpush1.msra.mxu0 0.0
    %1637 = vmatprep.subr.mxu0 0.0
    %1638 = vmatpush1.msra.mxu0 0.0
    %1639 = vmatprep.subr.mxu0 0.0
    %1640 = vmatpush1.msra.mxu0 0.0
    %1641 = vmatprep.subr.mxu0 0.0
    %1642 = vmatpush1.msra.mxu0 0.0
    %1643 = vmatprep.subr.mxu0 0.0
    %1644 = vmatpush1.msra.mxu0 0.0
    %1645 = vmatprep.subr.mxu0 0.0
    %1646 = vmatpush1.msra.mxu0 %v43
    %1647 = vmatprep.subr.mxu0 0.0
    %1648 = vmatpush1.msra.mxu0 %v42
    %1649 = vmatprep.subr.mxu0 0.0
    %1650 = vmatpush1.msra.mxu0 %v41
    %1651 = vmatprep.subr.mxu0 0.0
    %1652 = vmatpush1.msra.mxu0 %v40
    %1653 = vmatprep.subr.mxu0 0.0
    %1654 = vmatpush2.msra.mxu0 0.0
    %1655 = vmatprep.subr.mxu0 0.0
    %1656 = vmatpush2.msra.mxu0 0.0
    %1657 = vmatprep.subr.mxu0 0.0
    %1658 = vmatpush2.msra.mxu0 0.0
    %1659 = vmatprep.subr.mxu0 0.0
    %1660 = vmatpush2.msra.mxu0 0.0
    %1661 = vmatprep.subr.mxu0 0.0
    %1662 = vmatpush2.msra.mxu0 0.0
    %1663 = vmatprep.subr.mxu0 0.0
    %1664 = vmatpush2.msra.mxu0 0.0
    %1665 = vmatprep.subr.mxu0 0.0
    %1666 = vmatpush2.msra.mxu0 0.0
    %1667 = vmatprep.subr.mxu0 0.0
    %1668 = vmatpush2.msra.mxu0 0.0
    %1669 = vmatprep.subr.mxu0 0.0
    %1670 = vmatpush2.msra.mxu0 0.0
    %1671 = vmatprep.subr.mxu0 0.0
    %1672 = vmatpush2.msra.mxu0 0.0
    %1673 = vmatprep.subr.mxu0 0.0
    %1674 = vmatpush2.msra.mxu0 0.0
    %1675 = vmatprep.subr.mxu0 0.0
    %1676 = vmatpush2.msra.mxu0 0.0
    %1677 = vmatprep.subr.mxu0 0.0
    %1678 = vmatpush2.msra.mxu0 0.0
    %1679 = vmatprep.subr.mxu0 0.0
    %1680 = vmatpush2.msra.mxu0 0.0
    %1681 = vmatprep.subr.mxu0 0.0
    %1682 = vmatpush2.msra.mxu0 0.0
    %1683 = vmatprep.subr.mxu0 0.0
    %1684 = vmatpush2.msra.mxu0 0.0
    %1685 = vmatprep.mubr.f32.mxu0 0.0
    %1686 = vmatmul.mubr.f32.gmra.mxu0 %v1619
    %v1687 = vpop.f32.mrf.mxu0
    %v1688 = vadd.f32 0.0, %v1687
    %v1689 = vpop.f32.mrf.mxu0
    %1690 = vdwg.mxu0
    %v1691 = vadd.f32 %v290, %v1688
    %v1692 = vtanh.pop %v1691
    %1694 = vrot.lane.b32.xlu0 %v1617, 32
    %v1695 = vpop.permute.xlu0 %1694
    %v1697 = vsel %vm388, %v1692, %v1695
    %v1699 = vsel %vm465, %v1697, 0
    %1701 = vmatprep.subr.mxu0 0.0
    %1702 = vmatpush1.msra.mxu0 0.0
    %1703 = vmatprep.subr.mxu0 0.0
    %1704 = vmatpush1.msra.mxu0 0.0
    %1705 = vmatprep.subr.mxu0 0.0
    %1706 = vmatpush1.msra.mxu0 0.0
    %1707 = vmatprep.subr.mxu0 0.0
    %1708 = vmatpush1.msra.mxu0 0.0
    %1709 = vmatprep.subr.mxu0 0.0
    %1710 = vmatpush1.msra.mxu0 0.0
    %1711 = vmatprep.subr.mxu0 0.0
    %1712 = vmatpush1.msra.mxu0 0.0
    %1713 = vmatprep.subr.mxu0 0.0
    %1714 = vmatpush1.msra.mxu0 0.0
    %1715 = vmatprep.subr.mxu0 0.0
    %1716 = vmatpush1.msra.mxu0 0.0
    %1717 = vmatprep.subr.mxu0 0.0
    %1718 = vmatpush1.msra.mxu0 %v51
    %1719 = vmatprep.subr.mxu0 0.0
    %1720 = vmatpush1.msra.mxu0 %v50
    %1721 = vmatprep.subr.mxu0 0.0
    %1722 = vmatpush1.msra.mxu0 %v49
    %1723 = vmatprep.subr.mxu0 0.0
    %1724 = vmatpush1.msra.mxu0 %v48
    %1725 = vmatprep.subr.mxu0 0.0
    %1726 = vmatpush1.msra.mxu0 %v47
    %1727 = vmatprep.subr.mxu0 0.0
    %1728 = vmatpush1.msra.mxu0 %v46
    %1729 = vmatprep.subr.mxu0 0.0
    %1730 = vmatpush1.msra.mxu0 %v45
    %1731 = vmatprep.subr.mxu0 0.0
    %1732 = vmatpush1.msra.mxu0 %v44
    %1733 = vmatprep.subr.mxu0 0.0
    %1734 = vmatpush2.msra.mxu0 0.0
    %1735 = vmatprep.subr.mxu0 0.0
    %1736 = vmatpush2.msra.mxu0 0.0
    %1737 = vmatprep.subr.mxu0 0.0
    %1738 = vmatpush2.msra.mxu0 0.0
    %1739 = vmatprep.subr.mxu0 0.0
    %1740 = vmatpush2.msra.mxu0 0.0
    %1741 = vmatprep.subr.mxu0 0.0
    %1742 = vmatpush2.msra.mxu0 0.0
    %1743 = vmatprep.subr.mxu0 0.0
    %1744 = vmatpush2.msra.mxu0 0.0
    %1745 = vmatprep.subr.mxu0 0.0
    %1746 = vmatpush2.msra.mxu0 0.0
    %1747 = vmatprep.subr.mxu0 0.0
    %1748 = vmatpush2.msra.mxu0 0.0
    %1749 = vmatprep.subr.mxu0 0.0
    %1750 = vmatpush2.msra.mxu0 0.0
    %1751 = vmatprep.subr.mxu0 0.0
    %1752 = vmatpush2.msra.mxu0 0.0
    %1753 = vmatprep.subr.mxu0 0.0
    %1754 = vmatpush2.msra.mxu0 0.0
    %1755 = vmatprep.subr.mxu0 0.0
    %1756 = vmatpush2.msra.mxu0 0.0
    %1757 = vmatprep.subr.mxu0 0.0
    %1758 = vmatpush2.msra.mxu0 0.0
    %1759 = vmatprep.subr.mxu0 0.0
    %1760 = vmatpush2.msra.mxu0 0.0
    %1761 = vmatprep.subr.mxu0 0.0
    %1762 = vmatpush2.msra.mxu0 0.0
    %1763 = vmatprep.subr.mxu0 0.0
    %1764 = vmatpush2.msra.mxu0 0.0
    %1765 = vmatprep.mubr.f32.mxu0 0.0
    %1766 = vmatmul.mubr.f32.gmra.mxu0 %v1699
    %v1767 = vpop.f32.mrf.mxu0
    %v1768 = vadd.f32 %v57, %v1767
    %v1769 = vpop.f32.mrf.mxu0
    %1770 = vdwg.mxu0
    %v1771 = vtanh.pop %v1768
    %v1773 = vsel %vm388, %v1692, 0
    %1775 = vmatprep.subr.mxu0 0.0
    %1776 = vmatpush1.msra.mxu0 0.0
    %1777 = vmatprep.subr.mxu0 0.0
    %1778 = vmatpush1.msra.mxu0 0.0
    %1779 = vmatprep.subr.mxu0 0.0
    %1780 = vmatpush1.msra.mxu0 0.0
    %1781 = vmatprep.subr.mxu0 0.0
    %1782 = vmatpush1.msra.mxu0 0.0
    %1783 = vmatprep.subr.mxu0 0.0
    %1784 = vmatpush1.msra.mxu0 0.0
    %1785 = vmatprep.subr.mxu0 0.0
    %1786 = vmatpush1.msra.mxu0 0.0
    %1787 = vmatprep.subr.mxu0 0.0
    %1788 = vmatpush1.msra.mxu0 0.0
    %1789 = vmatprep.subr.mxu0 0.0
    %1790 = vmatpush1.msra.mxu0 0.0
    %1791 = vmatprep.subr.mxu0 0.0
    %1792 = vmatpush1.msra.mxu0 0.0
    %1793 = vmatprep.subr.mxu0 0.0
    %1794 = vmatpush1.msra.mxu0 0.0
    %1795 = vmatprep.subr.mxu0 0.0
    %1796 = vmatpush1.msra.mxu0 0.0
    %1797 = vmatprep.subr.mxu0 0.0
    %1798 = vmatpush1.msra.mxu0 0.0
    %1799 = vmatprep.subr.mxu0 0.0
    %1800 = vmatpush1.msra.mxu0 %v43
    %1801 = vmatprep.subr.mxu0 0.0
    %1802 = vmatpush1.msra.mxu0 %v42
    %1803 = vmatprep.subr.mxu0 0.0
    %1804 = vmatpush1.msra.mxu0 %v41
    %1805 = vmatprep.subr.mxu0 0.0
    %1806 = vmatpush1.msra.mxu0 %v40
    %1807 = vmatprep.subr.mxu0 0.0
    %1808 = vmatpush2.msra.mxu0 0.0
    %1809 = vmatprep.subr.mxu0 0.0
    %1810 = vmatpush2.msra.mxu0 0.0
    %1811 = vmatprep.subr.mxu0 0.0
    %1812 = vmatpush2.msra.mxu0 0.0
    %1813 = vmatprep.subr.mxu0 0.0
    %1814 = vmatpush2.msra.mxu0 0.0
    %1815 = vmatprep.subr.mxu0 0.0
    %1816 = vmatpush2.msra.mxu0 0.0
    %1817 = vmatprep.subr.mxu0 0.0
    %1818 = vmatpush2.msra.mxu0 0.0
    %1819 = vmatprep.subr.mxu0 0.0
    %1820 = vmatpush2.msra.mxu0 0.0
    %1821 = vmatprep.subr.mxu0 0.0
    %1822 = vmatpush2.msra.mxu0 0.0
    %1823 = vmatprep.subr.mxu0 0.0
    %1824 = vmatpush2.msra.mxu0 0.0
    %1825 = vmatprep.subr.mxu0 0.0
    %1826 = vmatpush2.msra.mxu0 0.0
    %1827 = vmatprep.subr.mxu0 0.0
    %1828 = vmatpush2.msra.mxu0 0.0
    %1829 = vmatprep.subr.mxu0 0.0
    %1830 = vmatpush2.msra.mxu0 0.0
    %1831 = vmatprep.subr.mxu0 0.0
    %1832 = vmatpush2.msra.mxu0 0.0
    %1833 = vmatprep.subr.mxu0 0.0
    %1834 = vmatpush2.msra.mxu0 0.0
    %1835 = vmatprep.subr.mxu0 0.0
    %1836 = vmatpush2.msra.mxu0 0.0
    %1837 = vmatprep.subr.mxu0 0.0
    %1838 = vmatpush2.msra.mxu0 0.0
    %1839 = vmatprep.mubr.f32.mxu0 0.0
    %1840 = vmatmul.mubr.f32.gmra.mxu0 %v1773
    %v1841 = vpop.f32.mrf.mxu0
    %v1842 = vadd.f32 0.0, %v1841
    %v1843 = vpop.f32.mrf.mxu0
    %1844 = vdwg.mxu0
    %v1845 = vadd.f32 %v295, %v1842
    %v1846 = vtanh.pop %v1845
    %1848 = vrot.lane.b32.xlu0 %v1771, 32
    %v1849 = vpop.permute.xlu0 %1848
    %v1851 = vsel %vm388, %v1846, %v1849
    %v1853 = vsel %vm465, %v1851, 0
    %1855 = vmatprep.subr.mxu0 0.0
    %1856 = vmatpush1.msra.mxu0 0.0
    %1857 = vmatprep.subr.mxu0 0.0
    %1858 = vmatpush1.msra.mxu0 0.0
    %1859 = vmatprep.subr.mxu0 0.0
    %1860 = vmatpush1.msra.mxu0 0.0
    %1861 = vmatprep.subr.mxu0 0.0
    %1862 = vmatpush1.msra.mxu0 0.0
    %1863 = vmatprep.subr.mxu0 0.0
    %1864 = vmatpush1.msra.mxu0 0.0
    %1865 = vmatprep.subr.mxu0 0.0
    %1866 = vmatpush1.msra.mxu0 0.0
    %1867 = vmatprep.subr.mxu0 0.0
    %1868 = vmatpush1.msra.mxu0 0.0
    %1869 = vmatprep.subr.mxu0 0.0
    %1870 = vmatpush1.msra.mxu0 0.0
    %1871 = vmatprep.subr.mxu0 0.0
    %1872 = vmatpush1.msra.mxu0 %v51
    %1873 = vmatprep.subr.mxu0 0.0
    %1874 = vmatpush1.msra.mxu0 %v50
    %1875 = vmatprep.subr.mxu0 0.0
    %1876 = vmatpush1.msra.mxu0 %v49
    %1877 = vmatprep.subr.mxu0 0.0
    %1878 = vmatpush1.msra.mxu0 %v48
    %1879 = vmatprep.subr.mxu0 0.0
    %1880 = vmatpush1.msra.mxu0 %v47
    %1881 = vmatprep.subr.mxu0 0.0
    %1882 = vmatpush1.msra.mxu0 %v46
    %1883 = vmatprep.subr.mxu0 0.0
    %1884 = vmatpush1.msra.mxu0 %v45
    %1885 = vmatprep.subr.mxu0 0.0
    %1886 = vmatpush1.msra.mxu0 %v44
    %1887 = vmatprep.subr.mxu0 0.0
    %1888 = vmatpush2.msra.mxu0 0.0
    %1889 = vmatprep.subr.mxu0 0.0
    %1890 = vmatpush2.msra.mxu0 0.0
    %1891 = vmatprep.subr.mxu0 0.0
    %1892 = vmatpush2.msra.mxu0 0.0
    %1893 = vmatprep.subr.mxu0 0.0
    %1894 = vmatpush2.msra.mxu0 0.0
    %1895 = vmatprep.subr.mxu0 0.0
    %1896 = vmatpush2.msra.mxu0 0.0
    %1897 = vmatprep.subr.mxu0 0.0
    %1898 = vmatpush2.msra.mxu0 0.0
    %1899 = vmatprep.subr.mxu0 0.0
    %1900 = vmatpush2.msra.mxu0 0.0
    %1901 = vmatprep.subr.mxu0 0.0
    %1902 = vmatpush2.msra.mxu0 0.0
    %1903 = vmatprep.subr.mxu0 0.0
    %1904 = vmatpush2.msra.mxu0 0.0
    %1905 = vmatprep.subr.mxu0 0.0
    %1906 = vmatpush2.msra.mxu0 0.0
    %1907 = vmatprep.subr.mxu0 0.0
    %1908 = vmatpush2.msra.mxu0 0.0
    %1909 = vmatprep.subr.mxu0 0.0
    %1910 = vmatpush2.msra.mxu0 0.0
    %1911 = vmatprep.subr.mxu0 0.0
    %1912 = vmatpush2.msra.mxu0 0.0
    %1913 = vmatprep.subr.mxu0 0.0
    %1914 = vmatpush2.msra.mxu0 0.0
    %1915 = vmatprep.subr.mxu0 0.0
    %1916 = vmatpush2.msra.mxu0 0.0
    %1917 = vmatprep.subr.mxu0 0.0
    %1918 = vmatpush2.msra.mxu0 0.0
    %1919 = vmatprep.mubr.f32.mxu0 0.0
    %1920 = vmatmul.mubr.f32.gmra.mxu0 %v1853
    %v1921 = vpop.f32.mrf.mxu0
    %v1922 = vadd.f32 %v57, %v1921
    %v1923 = vpop.f32.mrf.mxu0
    %1924 = vdwg.mxu0
    %v1925 = vtanh.pop %v1922
    %v1927 = vsel %vm388, %v1846, 0
    %1929 = vmatprep.subr.mxu0 0.0
    %1930 = vmatpush1.msra.mxu0 0.0
    %1931 = vmatprep.subr.mxu0 0.0
    %1932 = vmatpush1.msra.mxu0 0.0
    %1933 = vmatprep.subr.mxu0 0.0
    %1934 = vmatpush1.msra.mxu0 0.0
    %1935 = vmatprep.subr.mxu0 0.0
    %1936 = vmatpush1.msra.mxu0 0.0
    %1937 = vmatprep.subr.mxu0 0.0
    %1938 = vmatpush1.msra.mxu0 0.0
    %1939 = vmatprep.subr.mxu0 0.0
    %1940 = vmatpush1.msra.mxu0 0.0
    %1941 = vmatprep.subr.mxu0 0.0
    %1942 = vmatpush1.msra.mxu0 0.0
    %1943 = vmatprep.subr.mxu0 0.0
    %1944 = vmatpush1.msra.mxu0 0.0
    %1945 = vmatprep.subr.mxu0 0.0
    %1946 = vmatpush1.msra.mxu0 0.0
    %1947 = vmatprep.subr.mxu0 0.0
    %1948 = vmatpush1.msra.mxu0 0.0
    %1949 = vmatprep.subr.mxu0 0.0
    %1950 = vmatpush1.msra.mxu0 0.0
    %1951 = vmatprep.subr.mxu0 0.0
    %1952 = vmatpush1.msra.mxu0 0.0
    %1953 = vmatprep.subr.mxu0 0.0
    %1954 = vmatpush1.msra.mxu0 %v43
    %1955 = vmatprep.subr.mxu0 0.0
    %1956 = vmatpush1.msra.mxu0 %v42
    %1957 = vmatprep.subr.mxu0 0.0
    %1958 = vmatpush1.msra.mxu0 %v41
    %1959 = vmatprep.subr.mxu0 0.0
    %1960 = vmatpush1.msra.mxu0 %v40
    %1961 = vmatprep.subr.mxu0 0.0
    %1962 = vmatpush2.msra.mxu0 0.0
    %1963 = vmatprep.subr.mxu0 0.0
    %1964 = vmatpush2.msra.mxu0 0.0
    %1965 = vmatprep.subr.mxu0 0.0
    %1966 = vmatpush2.msra.mxu0 0.0
    %1967 = vmatprep.subr.mxu0 0.0
    %1968 = vmatpush2.msra.mxu0 0.0
    %1969 = vmatprep.subr.mxu0 0.0
    %1970 = vmatpush2.msra.mxu0 0.0
    %1971 = vmatprep.subr.mxu0 0.0
    %1972 = vmatpush2.msra.mxu0 0.0
    %1973 = vmatprep.subr.mxu0 0.0
    %1974 = vmatpush2.msra.mxu0 0.0
    %1975 = vmatprep.subr.mxu0 0.0
    %1976 = vmatpush2.msra.mxu0 0.0
    %1977 = vmatprep.subr.mxu0 0.0
    %1978 = vmatpush2.msra.mxu0 0.0
    %1979 = vmatprep.subr.mxu0 0.0
    %1980 = vmatpush2.msra.mxu0 0.0
    %1981 = vmatprep.subr.mxu0 0.0
    %1982 = vmatpush2.msra.mxu0 0.0
    %1983 = vmatprep.subr.mxu0 0.0
    %1984 = vmatpush2.msra.mxu0 0.0
    %1985 = vmatprep.subr.mxu0 0.0
    %1986 = vmatpush2.msra.mxu0 0.0
    %1987 = vmatprep.subr.mxu0 0.0
    %1988 = vmatpush2.msra.mxu0 0.0
    %1989 = vmatprep.subr.mxu0 0.0
    %1990 = vmatpush2.msra.mxu0 0.0
    %1991 = vmatprep.subr.mxu0 0.0
    %1992 = vmatpush2.msra.mxu0 0.0
    %1993 = vmatprep.mubr.f32.mxu0 0.0
    %1994 = vmatmul.mubr.f32.gmra.mxu0 %v1927
    %v1995 = vpop.f32.mrf.mxu0
    %v1996 = vadd.f32 0.0, %v1995
    %v1997 = vpop.f32.mrf.mxu0
    %1998 = vdwg.mxu0
    %v1999 = vadd.f32 %v300, %v1996
    %v2000 = vtanh.pop %v1999
    %2002 = vrot.lane.b32.xlu0 %v1925, 32
    %v2003 = vpop.permute.xlu0 %2002
    %v2005 = vsel %vm388, %v2000, %v2003
    %v2007 = vsel %vm465, %v2005, 0
    %2009 = vmatprep.subr.mxu0 0.0
    %2010 = vmatpush1.msra.mxu0 0.0
    %2011 = vmatprep.subr.mxu0 0.0
    %2012 = vmatpush1.msra.mxu0 0.0
    %2013 = vmatprep.subr.mxu0 0.0
    %2014 = vmatpush1.msra.mxu0 0.0
    %2015 = vmatprep.subr.mxu0 0.0
    %2016 = vmatpush1.msra.mxu0 0.0
    %2017 = vmatprep.subr.mxu0 0.0
    %2018 = vmatpush1.msra.mxu0 0.0
    %2019 = vmatprep.subr.mxu0 0.0
    %2020 = vmatpush1.msra.mxu0 0.0
    %2021 = vmatprep.subr.mxu0 0.0
    %2022 = vmatpush1.msra.mxu0 0.0
    %2023 = vmatprep.subr.mxu0 0.0
    %2024 = vmatpush1.msra.mxu0 0.0
    %2025 = vmatprep.subr.mxu0 0.0
    %2026 = vmatpush1.msra.mxu0 %v51
    %2027 = vmatprep.subr.mxu0 0.0
    %2028 = vmatpush1.msra.mxu0 %v50
    %2029 = vmatprep.subr.mxu0 0.0
    %2030 = vmatpush1.msra.mxu0 %v49
    %2031 = vmatprep.subr.mxu0 0.0
    %2032 = vmatpush1.msra.mxu0 %v48
    %2033 = vmatprep.subr.mxu0 0.0
    %2034 = vmatpush1.msra.mxu0 %v47
    %2035 = vmatprep.subr.mxu0 0.0
    %2036 = vmatpush1.msra.mxu0 %v46
    %2037 = vmatprep.subr.mxu0 0.0
    %2038 = vmatpush1.msra.mxu0 %v45
    %2039 = vmatprep.subr.mxu0 0.0
    %2040 = vmatpush1.msra.mxu0 %v44
    %2041 = vmatprep.subr.mxu0 0.0
    %2042 = vmatpush2.msra.mxu0 0.0
    %2043 = vmatprep.subr.mxu0 0.0
    %2044 = vmatpush2.msra.mxu0 0.0
    %2045 = vmatprep.subr.mxu0 0.0
    %2046 = vmatpush2.msra.mxu0 0.0
    %2047 = vmatprep.subr.mxu0 0.0
    %2048 = vmatpush2.msra.mxu0 0.0
    %2049 = vmatprep.subr.mxu0 0.0
    %2050 = vmatpush2.msra.mxu0 0.0
    %2051 = vmatprep.subr.mxu0 0.0
    %2052 = vmatpush2.msra.mxu0 0.0
    %2053 = vmatprep.subr.mxu0 0.0
    %2054 = vmatpush2.msra.mxu0 0.0
    %2055 = vmatprep.subr.mxu0 0.0
    %2056 = vmatpush2.msra.mxu0 0.0
    %2057 = vmatprep.subr.mxu0 0.0
    %2058 = vmatpush2.msra.mxu0 0.0
    %2059 = vmatprep.subr.mxu0 0.0
    %2060 = vmatpush2.msra.mxu0 0.0
    %2061 = vmatprep.subr.mxu0 0.0
    %2062 = vmatpush2.msra.mxu0 0.0
    %2063 = vmatprep.subr.mxu0 0.0
    %2064 = vmatpush2.msra.mxu0 0.0
    %2065 = vmatprep.subr.mxu0 0.0
    %2066 = vmatpush2.msra.mxu0 0.0
    %2067 = vmatprep.subr.mxu0 0.0
    %2068 = vmatpush2.msra.mxu0 0.0
    %2069 = vmatprep.subr.mxu0 0.0
    %2070 = vmatpush2.msra.mxu0 0.0
    %2071 = vmatprep.subr.mxu0 0.0
    %2072 = vmatpush2.msra.mxu0 0.0
    %2073 = vmatprep.mubr.f32.mxu0 0.0
    %2074 = vmatmul.mubr.f32.gmra.mxu0 %v2007
    %v2075 = vpop.f32.mrf.mxu0
    %v2076 = vadd.f32 %v57, %v2075
    %v2077 = vpop.f32.mrf.mxu0
    %2078 = vdwg.mxu0
    %v2079 = vtanh.pop %v2076
    %v2081 = vsel %vm388, %v2000, 0
    %2083 = vmatprep.subr.mxu0 0.0
    %2084 = vmatpush1.msra.mxu0 0.0
    %2085 = vmatprep.subr.mxu0 0.0
    %2086 = vmatpush1.msra.mxu0 0.0
    %2087 = vmatprep.subr.mxu0 0.0
    %2088 = vmatpush1.msra.mxu0 0.0
    %2089 = vmatprep.subr.mxu0 0.0
    %2090 = vmatpush1.msra.mxu0 0.0
    %2091 = vmatprep.subr.mxu0 0.0
    %2092 = vmatpush1.msra.mxu0 0.0
    %2093 = vmatprep.subr.mxu0 0.0
    %2094 = vmatpush1.msra.mxu0 0.0
    %2095 = vmatprep.subr.mxu0 0.0
    %2096 = vmatpush1.msra.mxu0 0.0
    %2097 = vmatprep.subr.mxu0 0.0
    %2098 = vmatpush1.msra.mxu0 0.0
    %2099 = vmatprep.subr.mxu0 0.0
    %2100 = vmatpush1.msra.mxu0 0.0
    %2101 = vmatprep.subr.mxu0 0.0
    %2102 = vmatpush1.msra.mxu0 0.0
    %2103 = vmatprep.subr.mxu0 0.0
    %2104 = vmatpush1.msra.mxu0 0.0
    %2105 = vmatprep.subr.mxu0 0.0
    %2106 = vmatpush1.msra.mxu0 0.0
    %2107 = vmatprep.subr.mxu0 0.0
    %2108 = vmatpush1.msra.mxu0 %v43
    %2109 = vmatprep.subr.mxu0 0.0
    %2110 = vmatpush1.msra.mxu0 %v42
    %2111 = vmatprep.subr.mxu0 0.0
    %2112 = vmatpush1.msra.mxu0 %v41
    %2113 = vmatprep.subr.mxu0 0.0
    %2114 = vmatpush1.msra.mxu0 %v40
    %2115 = vmatprep.subr.mxu0 0.0
    %2116 = vmatpush2.msra.mxu0 0.0
    %2117 = vmatprep.subr.mxu0 0.0
    %2118 = vmatpush2.msra.mxu0 0.0
    %2119 = vmatprep.subr.mxu0 0.0
    %2120 = vmatpush2.msra.mxu0 0.0
    %2121 = vmatprep.subr.mxu0 0.0
    %2122 = vmatpush2.msra.mxu0 0.0
    %2123 = vmatprep.subr.mxu0 0.0
    %2124 = vmatpush2.msra.mxu0 0.0
    %2125 = vmatprep.subr.mxu0 0.0
    %2126 = vmatpush2.msra.mxu0 0.0
    %2127 = vmatprep.subr.mxu0 0.0
    %2128 = vmatpush2.msra.mxu0 0.0
    %2129 = vmatprep.subr.mxu0 0.0
    %2130 = vmatpush2.msra.mxu0 0.0
    %2131 = vmatprep.subr.mxu0 0.0
    %2132 = vmatpush2.msra.mxu0 0.0
    %2133 = vmatprep.subr.mxu0 0.0
    %2134 = vmatpush2.msra.mxu0 0.0
    %2135 = vmatprep.subr.mxu0 0.0
    %2136 = vmatpush2.msra.mxu0 0.0
    %2137 = vmatprep.subr.mxu0 0.0
    %2138 = vmatpush2.msra.mxu0 0.0
    %2139 = vmatprep.subr.mxu0 0.0
    %2140 = vmatpush2.msra.mxu0 0.0
    %2141 = vmatprep.subr.mxu0 0.0
    %2142 = vmatpush2.msra.mxu0 0.0
    %2143 = vmatprep.subr.mxu0 0.0
    %2144 = vmatpush2.msra.mxu0 0.0
    %2145 = vmatprep.subr.mxu0 0.0
    %2146 = vmatpush2.msra.mxu0 0.0
    %2147 = vmatprep.mubr.f32.mxu0 0.0
    %2148 = vmatmul.mubr.f32.gmra.mxu0 %v2081
    %v2149 = vpop.f32.mrf.mxu0
    %v2150 = vadd.f32 0.0, %v2149
    %v2151 = vpop.f32.mrf.mxu0
    %2152 = vdwg.mxu0
    %v2153 = vadd.f32 %v305, %v2150
    %v2154 = vtanh.pop %v2153
    %2156 = vrot.lane.b32.xlu0 %v2079, 32
    %v2157 = vpop.permute.xlu0 %2156
    %v2159 = vsel %vm388, %v2154, %v2157
    %v2161 = vsel %vm465, %v2159, 0
    %2163 = vmatprep.subr.mxu0 0.0
    %2164 = vmatpush1.msra.mxu0 0.0
    %2165 = vmatprep.subr.mxu0 0.0
    %2166 = vmatpush1.msra.mxu0 0.0
    %2167 = vmatprep.subr.mxu0 0.0
    %2168 = vmatpush1.msra.mxu0 0.0
    %2169 = vmatprep.subr.mxu0 0.0
    %2170 = vmatpush1.msra.mxu0 0.0
    %2171 = vmatprep.subr.mxu0 0.0
    %2172 = vmatpush1.msra.mxu0 0.0
    %2173 = vmatprep.subr.mxu0 0.0
    %2174 = vmatpush1.msra.mxu0 0.0
    %2175 = vmatprep.subr.mxu0 0.0
    %2176 = vmatpush1.msra.mxu0 0.0
    %2177 = vmatprep.subr.mxu0 0.0
    %2178 = vmatpush1.msra.mxu0 0.0
    %2179 = vmatprep.subr.mxu0 0.0
    %2180 = vmatpush1.msra.mxu0 %v51
    %2181 = vmatprep.subr.mxu0 0.0
    %2182 = vmatpush1.msra.mxu0 %v50
    %2183 = vmatprep.subr.mxu0 0.0
    %2184 = vmatpush1.msra.mxu0 %v49
    %2185 = vmatprep.subr.mxu0 0.0
    %2186 = vmatpush1.msra.mxu0 %v48
    %2187 = vmatprep.subr.mxu0 0.0
    %2188 = vmatpush1.msra.mxu0 %v47
    %2189 = vmatprep.subr.mxu0 0.0
    %2190 = vmatpush1.msra.mxu0 %v46
    %2191 = vmatprep.subr.mxu0 0.0
    %2192 = vmatpush1.msra.mxu0 %v45
    %2193 = vmatprep.subr.mxu0 0.0
    %2194 = vmatpush1.msra.mxu0 %v44
    %2195 = vmatprep.subr.mxu0 0.0
    %2196 = vmatpush2.msra.mxu0 0.0
    %2197 = vmatprep.subr.mxu0 0.0
    %2198 = vmatpush2.msra.mxu0 0.0
    %2199 = vmatprep.subr.mxu0 0.0
    %2200 = vmatpush2.msra.mxu0 0.0
    %2201 = vmatprep.subr.mxu0 0.0
    %2202 = vmatpush2.msra.mxu0 0.0
    %2203 = vmatprep.subr.mxu0 0.0
    %2204 = vmatpush2.msra.mxu0 0.0
    %2205 = vmatprep.subr.mxu0 0.0
    %2206 = vmatpush2.msra.mxu0 0.0
    %2207 = vmatprep.subr.mxu0 0.0
    %2208 = vmatpush2.msra.mxu0 0.0
    %2209 = vmatprep.subr.mxu0 0.0
    %2210 = vmatpush2.msra.mxu0 0.0
    %2211 = vmatprep.subr.mxu0 0.0
    %2212 = vmatpush2.msra.mxu0 0.0
    %2213 = vmatprep.subr.mxu0 0.0
    %2214 = vmatpush2.msra.mxu0 0.0
    %2215 = vmatprep.subr.mxu0 0.0
    %2216 = vmatpush2.msra.mxu0 0.0
    %2217 = vmatprep.subr.mxu0 0.0
    %2218 = vmatpush2.msra.mxu0 0.0
    %2219 = vmatprep.subr.mxu0 0.0
    %2220 = vmatpush2.msra.mxu0 0.0
    %2221 = vmatprep.subr.mxu0 0.0
    %2222 = vmatpush2.msra.mxu0 0.0
    %2223 = vmatprep.subr.mxu0 0.0
    %2224 = vmatpush2.msra.mxu0 0.0
    %2225 = vmatprep.subr.mxu0 0.0
    %2226 = vmatpush2.msra.mxu0 0.0
    %2227 = vmatprep.mubr.f32.mxu0 0.0
    %2228 = vmatmul.mubr.f32.gmra.mxu0 %v2161
    %v2229 = vpop.f32.mrf.mxu0
    %v2230 = vadd.f32 %v57, %v2229
    %v2231 = vpop.f32.mrf.mxu0
    %2232 = vdwg.mxu0
    %v2233 = vtanh.pop %v2230
    %v2235 = vsel %vm388, %v2154, 0
    %2237 = vmatprep.subr.mxu0 0.0
    %2238 = vmatpush1.msra.mxu0 0.0
    %2239 = vmatprep.subr.mxu0 0.0
    %2240 = vmatpush1.msra.mxu0 0.0
    %2241 = vmatprep.subr.mxu0 0.0
    %2242 = vmatpush1.msra.mxu0 0.0
    %2243 = vmatprep.subr.mxu0 0.0
    %2244 = vmatpush1.msra.mxu0 0.0
    %2245 = vmatprep.subr.mxu0 0.0
    %2246 = vmatpush1.msra.mxu0 0.0
    %2247 = vmatprep.subr.mxu0 0.0
    %2248 = vmatpush1.msra.mxu0 0.0
    %2249 = vmatprep.subr.mxu0 0.0
    %2250 = vmatpush1.msra.mxu0 0.0
    %2251 = vmatprep.subr.mxu0 0.0
    %2252 = vmatpush1.msra.mxu0 0.0
    %2253 = vmatprep.subr.mxu0 0.0
    %2254 = vmatpush1.msra.mxu0 0.0
    %2255 = vmatprep.subr.mxu0 0.0
    %2256 = vmatpush1.msra.mxu0 0.0
    %2257 = vmatprep.subr.mxu0 0.0
    %2258 = vmatpush1.msra.mxu0 0.0
    %2259 = vmatprep.subr.mxu0 0.0
    %2260 = vmatpush1.msra.mxu0 0.0
    %2261 = vmatprep.subr.mxu0 0.0
    %2262 = vmatpush1.msra.mxu0 %v43
    %2263 = vmatprep.subr.mxu0 0.0
    %2264 = vmatpush1.msra.mxu0 %v42
    %2265 = vmatprep.subr.mxu0 0.0
    %2266 = vmatpush1.msra.mxu0 %v41
    %2267 = vmatprep.subr.mxu0 0.0
    %2268 = vmatpush1.msra.mxu0 %v40
    %2269 = vmatprep.subr.mxu0 0.0
    %2270 = vmatpush2.msra.mxu0 0.0
    %2271 = vmatprep.subr.mxu0 0.0
    %2272 = vmatpush2.msra.mxu0 0.0
    %2273 = vmatprep.subr.mxu0 0.0
    %2274 = vmatpush2.msra.mxu0 0.0
    %2275 = vmatprep.subr.mxu0 0.0
    %2276 = vmatpush2.msra.mxu0 0.0
    %2277 = vmatprep.subr.mxu0 0.0
    %2278 = vmatpush2.msra.mxu0 0.0
    %2279 = vmatprep.subr.mxu0 0.0
    %2280 = vmatpush2.msra.mxu0 0.0
    %2281 = vmatprep.subr.mxu0 0.0
    %2282 = vmatpush2.msra.mxu0 0.0
    %2283 = vmatprep.subr.mxu0 0.0
    %2284 = vmatpush2.msra.mxu0 0.0
    %2285 = vmatprep.subr.mxu0 0.0
    %2286 = vmatpush2.msra.mxu0 0.0
    %2287 = vmatprep.subr.mxu0 0.0
    %2288 = vmatpush2.msra.mxu0 0.0
    %2289 = vmatprep.subr.mxu0 0.0
    %2290 = vmatpush2.msra.mxu0 0.0
    %2291 = vmatprep.subr.mxu0 0.0
    %2292 = vmatpush2.msra.mxu0 0.0
    %2293 = vmatprep.subr.mxu0 0.0
    %2294 = vmatpush2.msra.mxu0 0.0
    %2295 = vmatprep.subr.mxu0 0.0
    %2296 = vmatpush2.msra.mxu0 0.0
    %2297 = vmatprep.subr.mxu0 0.0
    %2298 = vmatpush2.msra.mxu0 0.0
    %2299 = vmatprep.subr.mxu0 0.0
    %2300 = vmatpush2.msra.mxu0 0.0
    %2301 = vmatprep.mubr.f32.mxu0 0.0
    %2302 = vmatmul.mubr.f32.gmra.mxu0 %v2235
    %v2303 = vpop.f32.mrf.mxu0
    %v2304 = vadd.f32 0.0, %v2303
    %v2305 = vpop.f32.mrf.mxu0
    %2306 = vdwg.mxu0
    %v2307 = vadd.f32 %v310, %v2304
    %v2308 = vtanh.pop %v2307
    %2310 = vrot.lane.b32.xlu0 %v2233, 32
    %v2311 = vpop.permute.xlu0 %2310
    %v2313 = vsel %vm388, %v2308, %v2311
    %v2315 = vsel %vm465, %v2313, 0
    %2317 = vmatprep.subr.mxu0 0.0
    %2318 = vmatpush1.msra.mxu0 0.0
    %2319 = vmatprep.subr.mxu0 0.0
    %2320 = vmatpush1.msra.mxu0 0.0
    %2321 = vmatprep.subr.mxu0 0.0
    %2322 = vmatpush1.msra.mxu0 0.0
    %2323 = vmatprep.subr.mxu0 0.0
    %2324 = vmatpush1.msra.mxu0 0.0
    %2325 = vmatprep.subr.mxu0 0.0
    %2326 = vmatpush1.msra.mxu0 0.0
    %2327 = vmatprep.subr.mxu0 0.0
    %2328 = vmatpush1.msra.mxu0 0.0
    %2329 = vmatprep.subr.mxu0 0.0
    %2330 = vmatpush1.msra.mxu0 0.0
    %2331 = vmatprep.subr.mxu0 0.0
    %2332 = vmatpush1.msra.mxu0 0.0
    %2333 = vmatprep.subr.mxu0 0.0
    %2334 = vmatpush1.msra.mxu0 %v51
    %2335 = vmatprep.subr.mxu0 0.0
    %2336 = vmatpush1.msra.mxu0 %v50
    %2337 = vmatprep.subr.mxu0 0.0
    %2338 = vmatpush1.msra.mxu0 %v49
    %2339 = vmatprep.subr.mxu0 0.0
    %2340 = vmatpush1.msra.mxu0 %v48
    %2341 = vmatprep.subr.mxu0 0.0
    %2342 = vmatpush1.msra.mxu0 %v47
    %2343 = vmatprep.subr.mxu0 0.0
    %2344 = vmatpush1.msra.mxu0 %v46
    %2345 = vmatprep.subr.mxu0 0.0
    %2346 = vmatpush1.msra.mxu0 %v45
    %2347 = vmatprep.subr.mxu0 0.0
    %2348 = vmatpush1.msra.mxu0 %v44
    %2349 = vmatprep.subr.mxu0 0.0
    %2350 = vmatpush2.msra.mxu0 0.0
    %2351 = vmatprep.subr.mxu0 0.0
    %2352 = vmatpush2.msra.mxu0 0.0
    %2353 = vmatprep.subr.mxu0 0.0
    %2354 = vmatpush2.msra.mxu0 0.0
    %2355 = vmatprep.subr.mxu0 0.0
    %2356 = vmatpush2.msra.mxu0 0.0
    %2357 = vmatprep.subr.mxu0 0.0
    %2358 = vmatpush2.msra.mxu0 0.0
    %2359 = vmatprep.subr.mxu0 0.0
    %2360 = vmatpush2.msra.mxu0 0.0
    %2361 = vmatprep.subr.mxu0 0.0
    %2362 = vmatpush2.msra.mxu0 0.0
    %2363 = vmatprep.subr.mxu0 0.0
    %2364 = vmatpush2.msra.mxu0 0.0
    %2365 = vmatprep.subr.mxu0 0.0
    %2366 = vmatpush2.msra.mxu0 0.0
    %2367 = vmatprep.subr.mxu0 0.0
    %2368 = vmatpush2.msra.mxu0 0.0
    %2369 = vmatprep.subr.mxu0 0.0
    %2370 = vmatpush2.msra.mxu0 0.0
    %2371 = vmatprep.subr.mxu0 0.0
    %2372 = vmatpush2.msra.mxu0 0.0
    %2373 = vmatprep.subr.mxu0 0.0
    %2374 = vmatpush2.msra.mxu0 0.0
    %2375 = vmatprep.subr.mxu0 0.0
    %2376 = vmatpush2.msra.mxu0 0.0
    %2377 = vmatprep.subr.mxu0 0.0
    %2378 = vmatpush2.msra.mxu0 0.0
    %2379 = vmatprep.subr.mxu0 0.0
    %2380 = vmatpush2.msra.mxu0 0.0
    %2381 = vmatprep.mubr.f32.mxu0 0.0
    %2382 = vmatmul.mubr.f32.gmra.mxu0 %v2315
    %v2383 = vpop.f32.mrf.mxu0
    %v2384 = vadd.f32 %v57, %v2383
    %v2385 = vpop.f32.mrf.mxu0
    %2386 = vdwg.mxu0
    %v2387 = vtanh.pop %v2384
    %v2389 = vsel %vm388, %v2308, 0
    %2391 = vmatprep.subr.mxu0 0.0
    %2392 = vmatpush1.msra.mxu0 0.0
    %2393 = vmatprep.subr.mxu0 0.0
    %2394 = vmatpush1.msra.mxu0 0.0
    %2395 = vmatprep.subr.mxu0 0.0
    %2396 = vmatpush1.msra.mxu0 0.0
    %2397 = vmatprep.subr.mxu0 0.0
    %2398 = vmatpush1.msra.mxu0 0.0
    %2399 = vmatprep.subr.mxu0 0.0
    %2400 = vmatpush1.msra.mxu0 0.0
    %2401 = vmatprep.subr.mxu0 0.0
    %2402 = vmatpush1.msra.mxu0 0.0
    %2403 = vmatprep.subr.mxu0 0.0
    %2404 = vmatpush1.msra.mxu0 0.0
    %2405 = vmatprep.subr.mxu0 0.0
    %2406 = vmatpush1.msra.mxu0 0.0
    %2407 = vmatprep.subr.mxu0 0.0
    %2408 = vmatpush1.msra.mxu0 0.0
    %2409 = vmatprep.subr.mxu0 0.0
    %2410 = vmatpush1.msra.mxu0 0.0
    %2411 = vmatprep.subr.mxu0 0.0
    %2412 = vmatpush1.msra.mxu0 0.0
    %2413 = vmatprep.subr.mxu0 0.0
    %2414 = vmatpush1.msra.mxu0 0.0
    %2415 = vmatprep.subr.mxu0 0.0
    %2416 = vmatpush1.msra.mxu0 %v43
    %2417 = vmatprep.subr.mxu0 0.0
    %2418 = vmatpush1.msra.mxu0 %v42
    %2419 = vmatprep.subr.mxu0 0.0
    %2420 = vmatpush1.msra.mxu0 %v41
    %2421 = vmatprep.subr.mxu0 0.0
    %2422 = vmatpush1.msra.mxu0 %v40
    %2423 = vmatprep.subr.mxu0 0.0
    %2424 = vmatpush2.msra.mxu0 0.0
    %2425 = vmatprep.subr.mxu0 0.0
    %2426 = vmatpush2.msra.mxu0 0.0
    %2427 = vmatprep.subr.mxu0 0.0
    %2428 = vmatpush2.msra.mxu0 0.0
    %2429 = vmatprep.subr.mxu0 0.0
    %2430 = vmatpush2.msra.mxu0 0.0
    %2431 = vmatprep.subr.mxu0 0.0
    %2432 = vmatpush2.msra.mxu0 0.0
    %2433 = vmatprep.subr.mxu0 0.0
    %2434 = vmatpush2.msra.mxu0 0.0
    %2435 = vmatprep.subr.mxu0 0.0
    %2436 = vmatpush2.msra.mxu0 0.0
    %2437 = vmatprep.subr.mxu0 0.0
    %2438 = vmatpush2.msra.mxu0 0.0
    %2439 = vmatprep.subr.mxu0 0.0
    %2440 = vmatpush2.msra.mxu0 0.0
    %2441 = vmatprep.subr.mxu0 0.0
    %2442 = vmatpush2.msra.mxu0 0.0
    %2443 = vmatprep.subr.mxu0 0.0
    %2444 = vmatpush2.msra.mxu0 0.0
    %2445 = vmatprep.subr.mxu0 0.0
    %2446 = vmatpush2.msra.mxu0 0.0
    %2447 = vmatprep.subr.mxu0 0.0
    %2448 = vmatpush2.msra.mxu0 0.0
    %2449 = vmatprep.subr.mxu0 0.0
    %2450 = vmatpush2.msra.mxu0 0.0
    %2451 = vmatprep.subr.mxu0 0.0
    %2452 = vmatpush2.msra.mxu0 0.0
    %2453 = vmatprep.subr.mxu0 0.0
    %2454 = vmatpush2.msra.mxu0 0.0
    %2455 = vmatprep.mubr.f32.mxu0 0.0
    %2456 = vmatmul.mubr.f32.gmra.mxu0 %v2389
    %v2457 = vpop.f32.mrf.mxu0
    %v2458 = vadd.f32 0.0, %v2457
    %v2459 = vpop.f32.mrf.mxu0
    %2460 = vdwg.mxu0
    %v2461 = vadd.f32 %v315, %v2458
    %v2462 = vtanh.pop %v2461
    %2464 = vrot.lane.b32.xlu0 %v2387, 32
    %v2465 = vpop.permute.xlu0 %2464
    %v2467 = vsel %vm388, %v2462, %v2465
    %v2469 = vsel %vm465, %v2467, 0
    %2471 = vmatprep.subr.mxu0 0.0
    %2472 = vmatpush1.msra.mxu0 0.0
    %2473 = vmatprep.subr.mxu0 0.0
    %2474 = vmatpush1.msra.mxu0 0.0
    %2475 = vmatprep.subr.mxu0 0.0
    %2476 = vmatpush1.msra.mxu0 0.0
    %2477 = vmatprep.subr.mxu0 0.0
    %2478 = vmatpush1.msra.mxu0 0.0
    %2479 = vmatprep.subr.mxu0 0.0
    %2480 = vmatpush1.msra.mxu0 0.0
    %2481 = vmatprep.subr.mxu0 0.0
    %2482 = vmatpush1.msra.mxu0 0.0
    %2483 = vmatprep.subr.mxu0 0.0
    %2484 = vmatpush1.msra.mxu0 0.0
    %2485 = vmatprep.subr.mxu0 0.0
    %2486 = vmatpush1.msra.mxu0 0.0
    %2487 = vmatprep.subr.mxu0 0.0
    %2488 = vmatpush1.msra.mxu0 %v51
    %2489 = vmatprep.subr.mxu0 0.0
    %2490 = vmatpush1.msra.mxu0 %v50
    %2491 = vmatprep.subr.mxu0 0.0
    %2492 = vmatpush1.msra.mxu0 %v49
    %2493 = vmatprep.subr.mxu0 0.0
    %2494 = vmatpush1.msra.mxu0 %v48
    %2495 = vmatprep.subr.mxu0 0.0
    %2496 = vmatpush1.msra.mxu0 %v47
    %2497 = vmatprep.subr.mxu0 0.0
    %2498 = vmatpush1.msra.mxu0 %v46
    %2499 = vmatprep.subr.mxu0 0.0
    %2500 = vmatpush1.msra.mxu0 %v45
    %2501 = vmatprep.subr.mxu0 0.0
    %2502 = vmatpush1.msra.mxu0 %v44
    %2503 = vmatprep.subr.mxu0 0.0
    %2504 = vmatpush2.msra.mxu0 0.0
    %2505 = vmatprep.subr.mxu0 0.0
    %2506 = vmatpush2.msra.mxu0 0.0
    %2507 = vmatprep.subr.mxu0 0.0
    %2508 = vmatpush2.msra.mxu0 0.0
    %2509 = vmatprep.subr.mxu0 0.0
    %2510 = vmatpush2.msra.mxu0 0.0
    %2511 = vmatprep.subr.mxu0 0.0
    %2512 = vmatpush2.msra.mxu0 0.0
    %2513 = vmatprep.subr.mxu0 0.0
    %2514 = vmatpush2.msra.mxu0 0.0
    %2515 = vmatprep.subr.mxu0 0.0
    %2516 = vmatpush2.msra.mxu0 0.0
    %2517 = vmatprep.subr.mxu0 0.0
    %2518 = vmatpush2.msra.mxu0 0.0
    %2519 = vmatprep.subr.mxu0 0.0
    %2520 = vmatpush2.msra.mxu0 0.0
    %2521 = vmatprep.subr.mxu0 0.0
    %2522 = vmatpush2.msra.mxu0 0.0
    %2523 = vmatprep.subr.mxu0 0.0
    %2524 = vmatpush2.msra.mxu0 0.0
    %2525 = vmatprep.subr.mxu0 0.0
    %2526 = vmatpush2.msra.mxu0 0.0
    %2527 = vmatprep.subr.mxu0 0.0
    %2528 = vmatpush2.msra.mxu0 0.0
    %2529 = vmatprep.subr.mxu0 0.0
    %2530 = vmatpush2.msra.mxu0 0.0
    %2531 = vmatprep.subr.mxu0 0.0
    %2532 = vmatpush2.msra.mxu0 0.0
    %2533 = vmatprep.subr.mxu0 0.0
    %2534 = vmatpush2.msra.mxu0 0.0
    %2535 = vmatprep.mubr.f32.mxu0 0.0
    %2536 = vmatmul.mubr.f32.gmra.mxu0 %v2469
    %v2537 = vpop.f32.mrf.mxu0
    %v2538 = vadd.f32 %v57, %v2537
    %v2539 = vpop.f32.mrf.mxu0
    %2540 = vdwg.mxu0
    %v2541 = vtanh.pop %v2538
    %v2543 = vsel %vm388, %v2462, 0
    %2545 = vmatprep.subr.mxu0 0.0
    %2546 = vmatpush1.msra.mxu0 0.0
    %2547 = vmatprep.subr.mxu0 0.0
    %2548 = vmatpush1.msra.mxu0 0.0
    %2549 = vmatprep.subr.mxu0 0.0
    %2550 = vmatpush1.msra.mxu0 0.0
    %2551 = vmatprep.subr.mxu0 0.0
    %2552 = vmatpush1.msra.mxu0 0.0
    %2553 = vmatprep.subr.mxu0 0.0
    %2554 = vmatpush1.msra.mxu0 0.0
    %2555 = vmatprep.subr.mxu0 0.0
    %2556 = vmatpush1.msra.mxu0 0.0
    %2557 = vmatprep.subr.mxu0 0.0
    %2558 = vmatpush1.msra.mxu0 0.0
    %2559 = vmatprep.subr.mxu0 0.0
    %2560 = vmatpush1.msra.mxu0 0.0
    %2561 = vmatprep.subr.mxu0 0.0
    %2562 = vmatpush1.msra.mxu0 0.0
    %2563 = vmatprep.subr.mxu0 0.0
    %2564 = vmatpush1.msra.mxu0 0.0
    %2565 = vmatprep.subr.mxu0 0.0
    %2566 = vmatpush1.msra.mxu0 0.0
    %2567 = vmatprep.subr.mxu0 0.0
    %2568 = vmatpush1.msra.mxu0 0.0
    %2569 = vmatprep.subr.mxu0 0.0
    %2570 = vmatpush1.msra.mxu0 %v43
    %2571 = vmatprep.subr.mxu0 0.0
    %2572 = vmatpush1.msra.mxu0 %v42
    %2573 = vmatprep.subr.mxu0 0.0
    %2574 = vmatpush1.msra.mxu0 %v41
    %2575 = vmatprep.subr.mxu0 0.0
    %2576 = vmatpush1.msra.mxu0 %v40
    %2577 = vmatprep.subr.mxu0 0.0
    %2578 = vmatpush2.msra.mxu0 0.0
    %2579 = vmatprep.subr.mxu0 0.0
    %2580 = vmatpush2.msra.mxu0 0.0
    %2581 = vmatprep.subr.mxu0 0.0
    %2582 = vmatpush2.msra.mxu0 0.0
    %2583 = vmatprep.subr.mxu0 0.0
    %2584 = vmatpush2.msra.mxu0 0.0
    %2585 = vmatprep.subr.mxu0 0.0
    %2586 = vmatpush2.msra.mxu0 0.0
    %2587 = vmatprep.subr.mxu0 0.0
    %2588 = vmatpush2.msra.mxu0 0.0
    %2589 = vmatprep.subr.mxu0 0.0
    %2590 = vmatpush2.msra.mxu0 0.0
    %2591 = vmatprep.subr.mxu0 0.0
    %2592 = vmatpush2.msra.mxu0 0.0
    %2593 = vmatprep.subr.mxu0 0.0
    %2594 = vmatpush2.msra.mxu0 0.0
    %2595 = vmatprep.subr.mxu0 0.0
    %2596 = vmatpush2.msra.mxu0 0.0
    %2597 = vmatprep.subr.mxu0 0.0
    %2598 = vmatpush2.msra.mxu0 0.0
    %2599 = vmatprep.subr.mxu0 0.0
    %2600 = vmatpush2.msra.mxu0 0.0
    %2601 = vmatprep.subr.mxu0 0.0
    %2602 = vmatpush2.msra.mxu0 0.0
    %2603 = vmatprep.subr.mxu0 0.0
    %2604 = vmatpush2.msra.mxu0 0.0
    %2605 = vmatprep.subr.mxu0 0.0
    %2606 = vmatpush2.msra.mxu0 0.0
    %2607 = vmatprep.subr.mxu0 0.0
    %2608 = vmatpush2.msra.mxu0 0.0
    %2609 = vmatprep.mubr.f32.mxu0 0.0
    %2610 = vmatmul.mubr.f32.gmra.mxu0 %v2543
    %v2611 = vpop.f32.mrf.mxu0
    %v2612 = vadd.f32 0.0, %v2611
    %v2613 = vpop.f32.mrf.mxu0
    %2614 = vdwg.mxu0
    %v2615 = vadd.f32 %v320, %v2612
    %v2616 = vtanh.pop %v2615
    %2618 = vrot.lane.b32.xlu0 %v2541, 32
    %v2619 = vpop.permute.xlu0 %2618
    %v2621 = vsel %vm388, %v2616, %v2619
    %v2623 = vsel %vm465, %v2621, 0
    %2625 = vmatprep.subr.mxu0 0.0
    %2626 = vmatpush1.msra.mxu0 0.0
    %2627 = vmatprep.subr.mxu0 0.0
    %2628 = vmatpush1.msra.mxu0 0.0
    %2629 = vmatprep.subr.mxu0 0.0
    %2630 = vmatpush1.msra.mxu0 0.0
    %2631 = vmatprep.subr.mxu0 0.0
    %2632 = vmatpush1.msra.mxu0 0.0
    %2633 = vmatprep.subr.mxu0 0.0
    %2634 = vmatpush1.msra.mxu0 0.0
    %2635 = vmatprep.subr.mxu0 0.0
    %2636 = vmatpush1.msra.mxu0 0.0
    %2637 = vmatprep.subr.mxu0 0.0
    %2638 = vmatpush1.msra.mxu0 0.0
    %2639 = vmatprep.subr.mxu0 0.0
    %2640 = vmatpush1.msra.mxu0 0.0
    %2641 = vmatprep.subr.mxu0 0.0
    %2642 = vmatpush1.msra.mxu0 %v51
    %2643 = vmatprep.subr.mxu0 0.0
    %2644 = vmatpush1.msra.mxu0 %v50
    %2645 = vmatprep.subr.mxu0 0.0
    %2646 = vmatpush1.msra.mxu0 %v49
    %2647 = vmatprep.subr.mxu0 0.0
    %2648 = vmatpush1.msra.mxu0 %v48
    %2649 = vmatprep.subr.mxu0 0.0
    %2650 = vmatpush1.msra.mxu0 %v47
    %2651 = vmatprep.subr.mxu0 0.0
    %2652 = vmatpush1.msra.mxu0 %v46
    %2653 = vmatprep.subr.mxu0 0.0
    %2654 = vmatpush1.msra.mxu0 %v45
    %2655 = vmatprep.subr.mxu0 0.0
    %2656 = vmatpush1.msra.mxu0 %v44
    %2657 = vmatprep.subr.mxu0 0.0
    %2658 = vmatpush2.msra.mxu0 0.0
    %2659 = vmatprep.subr.mxu0 0.0
    %2660 = vmatpush2.msra.mxu0 0.0
    %2661 = vmatprep.subr.mxu0 0.0
    %2662 = vmatpush2.msra.mxu0 0.0
    %2663 = vmatprep.subr.mxu0 0.0
    %2664 = vmatpush2.msra.mxu0 0.0
    %2665 = vmatprep.subr.mxu0 0.0
    %2666 = vmatpush2.msra.mxu0 0.0
    %2667 = vmatprep.subr.mxu0 0.0
    %2668 = vmatpush2.msra.mxu0 0.0
    %2669 = vmatprep.subr.mxu0 0.0
    %2670 = vmatpush2.msra.mxu0 0.0
    %2671 = vmatprep.subr.mxu0 0.0
    %2672 = vmatpush2.msra.mxu0 0.0
    %2673 = vmatprep.subr.mxu0 0.0
    %2674 = vmatpush2.msra.mxu0 0.0
    %2675 = vmatprep.subr.mxu0 0.0
    %2676 = vmatpush2.msra.mxu0 0.0
    %2677 = vmatprep.subr.mxu0 0.0
    %2678 = vmatpush2.msra.mxu0 0.0
    %2679 = vmatprep.subr.mxu0 0.0
    %2680 = vmatpush2.msra.mxu0 0.0
    %2681 = vmatprep.subr.mxu0 0.0
    %2682 = vmatpush2.msra.mxu0 0.0
    %2683 = vmatprep.subr.mxu0 0.0
    %2684 = vmatpush2.msra.mxu0 0.0
    %2685 = vmatprep.subr.mxu0 0.0
    %2686 = vmatpush2.msra.mxu0 0.0
    %2687 = vmatprep.subr.mxu0 0.0
    %2688 = vmatpush2.msra.mxu0 0.0
    %2689 = vmatprep.mubr.f32.mxu0 0.0
    %2690 = vmatmul.mubr.f32.gmra.mxu0 %v2623
    %v2691 = vpop.f32.mrf.mxu0
    %v2692 = vadd.f32 %v57, %v2691
    %v2693 = vpop.f32.mrf.mxu0
    %2694 = vdwg.mxu0
    %v2695 = vtanh.pop %v2692
    %v2697 = vsel %vm388, %v2616, 0
    %2699 = vmatprep.subr.mxu0 0.0
    %2700 = vmatpush1.msra.mxu0 0.0
    %2701 = vmatprep.subr.mxu0 0.0
    %2702 = vmatpush1.msra.mxu0 0.0
    %2703 = vmatprep.subr.mxu0 0.0
    %2704 = vmatpush1.msra.mxu0 0.0
    %2705 = vmatprep.subr.mxu0 0.0
    %2706 = vmatpush1.msra.mxu0 0.0
    %2707 = vmatprep.subr.mxu0 0.0
    %2708 = vmatpush1.msra.mxu0 0.0
    %2709 = vmatprep.subr.mxu0 0.0
    %2710 = vmatpush1.msra.mxu0 0.0
    %2711 = vmatprep.subr.mxu0 0.0
    %2712 = vmatpush1.msra.mxu0 0.0
    %2713 = vmatprep.subr.mxu0 0.0
    %2714 = vmatpush1.msra.mxu0 0.0
    %2715 = vmatprep.subr.mxu0 0.0
    %2716 = vmatpush1.msra.mxu0 0.0
    %2717 = vmatprep.subr.mxu0 0.0
    %2718 = vmatpush1.msra.mxu0 0.0
    %2719 = vmatprep.subr.mxu0 0.0
    %2720 = vmatpush1.msra.mxu0 0.0
    %2721 = vmatprep.subr.mxu0 0.0
    %2722 = vmatpush1.msra.mxu0 0.0
    %2723 = vmatprep.subr.mxu0 0.0
    %2724 = vmatpush1.msra.mxu0 %v43
    %2725 = vmatprep.subr.mxu0 0.0
    %2726 = vmatpush1.msra.mxu0 %v42
    %2727 = vmatprep.subr.mxu0 0.0
    %2728 = vmatpush1.msra.mxu0 %v41
    %2729 = vmatprep.subr.mxu0 0.0
    %2730 = vmatpush1.msra.mxu0 %v40
    %2731 = vmatprep.subr.mxu0 0.0
    %2732 = vmatpush2.msra.mxu0 0.0
    %2733 = vmatprep.subr.mxu0 0.0
    %2734 = vmatpush2.msra.mxu0 0.0
    %2735 = vmatprep.subr.mxu0 0.0
    %2736 = vmatpush2.msra.mxu0 0.0
    %2737 = vmatprep.subr.mxu0 0.0
    %2738 = vmatpush2.msra.mxu0 0.0
    %2739 = vmatprep.subr.mxu0 0.0
    %2740 = vmatpush2.msra.mxu0 0.0
    %2741 = vmatprep.subr.mxu0 0.0
    %2742 = vmatpush2.msra.mxu0 0.0
    %2743 = vmatprep.subr.mxu0 0.0
    %2744 = vmatpush2.msra.mxu0 0.0
    %2745 = vmatprep.subr.mxu0 0.0
    %2746 = vmatpush2.msra.mxu0 0.0
    %2747 = vmatprep.subr.mxu0 0.0
    %2748 = vmatpush2.msra.mxu0 0.0
    %2749 = vmatprep.subr.mxu0 0.0
    %2750 = vmatpush2.msra.mxu0 0.0
    %2751 = vmatprep.subr.mxu0 0.0
    %2752 = vmatpush2.msra.mxu0 0.0
    %2753 = vmatprep.subr.mxu0 0.0
    %2754 = vmatpush2.msra.mxu0 0.0
    %2755 = vmatprep.subr.mxu0 0.0
    %2756 = vmatpush2.msra.mxu0 0.0
    %2757 = vmatprep.subr.mxu0 0.0
    %2758 = vmatpush2.msra.mxu0 0.0
    %2759 = vmatprep.subr.mxu0 0.0
    %2760 = vmatpush2.msra.mxu0 0.0
    %2761 = vmatprep.subr.mxu0 0.0
    %2762 = vmatpush2.msra.mxu0 0.0
    %2763 = vmatprep.mubr.f32.mxu0 0.0
    %2764 = vmatmul.mubr.f32.gmra.mxu0 %v2697
    %v2765 = vpop.f32.mrf.mxu0
    %v2766 = vadd.f32 0.0, %v2765
    %v2767 = vpop.f32.mrf.mxu0
    %2768 = vdwg.mxu0
    %v2769 = vadd.f32 %v325, %v2766
    %v2770 = vtanh.pop %v2769
    %2772 = vrot.lane.b32.xlu0 %v2695, 32
    %v2773 = vpop.permute.xlu0 %2772
    %v2775 = vsel %vm388, %v2770, %v2773
    %v2777 = vsel %vm465, %v2775, 0
    %2779 = vmatprep.subr.mxu0 0.0
    %2780 = vmatpush1.msra.mxu0 0.0
    %2781 = vmatprep.subr.mxu0 0.0
    %2782 = vmatpush1.msra.mxu0 0.0
    %2783 = vmatprep.subr.mxu0 0.0
    %2784 = vmatpush1.msra.mxu0 0.0
    %2785 = vmatprep.subr.mxu0 0.0
    %2786 = vmatpush1.msra.mxu0 0.0
    %2787 = vmatprep.subr.mxu0 0.0
    %2788 = vmatpush1.msra.mxu0 0.0
    %2789 = vmatprep.subr.mxu0 0.0
    %2790 = vmatpush1.msra.mxu0 0.0
    %2791 = vmatprep.subr.mxu0 0.0
    %2792 = vmatpush1.msra.mxu0 0.0
    %2793 = vmatprep.subr.mxu0 0.0
    %2794 = vmatpush1.msra.mxu0 0.0
    %2795 = vmatprep.subr.mxu0 0.0
    %2796 = vmatpush1.msra.mxu0 %v51
    %2797 = vmatprep.subr.mxu0 0.0
    %2798 = vmatpush1.msra.mxu0 %v50
    %2799 = vmatprep.subr.mxu0 0.0
    %2800 = vmatpush1.msra.mxu0 %v49
    %2801 = vmatprep.subr.mxu0 0.0
    %2802 = vmatpush1.msra.mxu0 %v48
    %2803 = vmatprep.subr.mxu0 0.0
    %2804 = vmatpush1.msra.mxu0 %v47
    %2805 = vmatprep.subr.mxu0 0.0
    %2806 = vmatpush1.msra.mxu0 %v46
    %2807 = vmatprep.subr.mxu0 0.0
    %2808 = vmatpush1.msra.mxu0 %v45
    %2809 = vmatprep.subr.mxu0 0.0
    %2810 = vmatpush1.msra.mxu0 %v44
    %2811 = vmatprep.subr.mxu0 0.0
    %2812 = vmatpush2.msra.mxu0 0.0
    %2813 = vmatprep.subr.mxu0 0.0
    %2814 = vmatpush2.msra.mxu0 0.0
    %2815 = vmatprep.subr.mxu0 0.0
    %2816 = vmatpush2.msra.mxu0 0.0
    %2817 = vmatprep.subr.mxu0 0.0
    %2818 = vmatpush2.msra.mxu0 0.0
    %2819 = vmatprep.subr.mxu0 0.0
    %2820 = vmatpush2.msra.mxu0 0.0
    %2821 = vmatprep.subr.mxu0 0.0
    %2822 = vmatpush2.msra.mxu0 0.0
    %2823 = vmatprep.subr.mxu0 0.0
    %2824 = vmatpush2.msra.mxu0 0.0
    %2825 = vmatprep.subr.mxu0 0.0
    %2826 = vmatpush2.msra.mxu0 0.0
    %2827 = vmatprep.subr.mxu0 0.0
    %2828 = vmatpush2.msra.mxu0 0.0
    %2829 = vmatprep.subr.mxu0 0.0
    %2830 = vmatpush2.msra.mxu0 0.0
    %2831 = vmatprep.subr.mxu0 0.0
    %2832 = vmatpush2.msra.mxu0 0.0
    %2833 = vmatprep.subr.mxu0 0.0
    %2834 = vmatpush2.msra.mxu0 0.0
    %2835 = vmatprep.subr.mxu0 0.0
    %2836 = vmatpush2.msra.mxu0 0.0
    %2837 = vmatprep.subr.mxu0 0.0
    %2838 = vmatpush2.msra.mxu0 0.0
    %2839 = vmatprep.subr.mxu0 0.0
    %2840 = vmatpush2.msra.mxu0 0.0
    %2841 = vmatprep.subr.mxu0 0.0
    %2842 = vmatpush2.msra.mxu0 0.0
    %2843 = vmatprep.mubr.f32.mxu0 0.0
    %2844 = vmatmul.mubr.f32.gmra.mxu0 %v2777
    %v2845 = vpop.f32.mrf.mxu0
    %v2846 = vadd.f32 %v57, %v2845
    %v2847 = vpop.f32.mrf.mxu0
    %2848 = vdwg.mxu0
    %v2849 = vtanh.pop %v2846
    %v2851 = vsel %vm388, %v2770, 0
    %2853 = vmatprep.subr.mxu0 0.0
    %2854 = vmatpush1.msra.mxu0 0.0
    %2855 = vmatprep.subr.mxu0 0.0
    %2856 = vmatpush1.msra.mxu0 0.0
    %2857 = vmatprep.subr.mxu0 0.0
    %2858 = vmatpush1.msra.mxu0 0.0
    %2859 = vmatprep.subr.mxu0 0.0
    %2860 = vmatpush1.msra.mxu0 0.0
    %2861 = vmatprep.subr.mxu0 0.0
    %2862 = vmatpush1.msra.mxu0 0.0
    %2863 = vmatprep.subr.mxu0 0.0
    %2864 = vmatpush1.msra.mxu0 0.0
    %2865 = vmatprep.subr.mxu0 0.0
    %2866 = vmatpush1.msra.mxu0 0.0
    %2867 = vmatprep.subr.mxu0 0.0
    %2868 = vmatpush1.msra.mxu0 0.0
    %2869 = vmatprep.subr.mxu0 0.0
    %2870 = vmatpush1.msra.mxu0 0.0
    %2871 = vmatprep.subr.mxu0 0.0
    %2872 = vmatpush1.msra.mxu0 0.0
    %2873 = vmatprep.subr.mxu0 0.0
    %2874 = vmatpush1.msra.mxu0 0.0
    %2875 = vmatprep.subr.mxu0 0.0
    %2876 = vmatpush1.msra.mxu0 0.0
    %2877 = vmatprep.subr.mxu0 0.0
    %2878 = vmatpush1.msra.mxu0 %v43
    %2879 = vmatprep.subr.mxu0 0.0
    %2880 = vmatpush1.msra.mxu0 %v42
    %2881 = vmatprep.subr.mxu0 0.0
    %2882 = vmatpush1.msra.mxu0 %v41
    %2883 = vmatprep.subr.mxu0 0.0
    %2884 = vmatpush1.msra.mxu0 %v40
    %2885 = vmatprep.subr.mxu0 0.0
    %2886 = vmatpush2.msra.mxu0 0.0
    %2887 = vmatprep.subr.mxu0 0.0
    %2888 = vmatpush2.msra.mxu0 0.0
    %2889 = vmatprep.subr.mxu0 0.0
    %2890 = vmatpush2.msra.mxu0 0.0
    %2891 = vmatprep.subr.mxu0 0.0
    %2892 = vmatpush2.msra.mxu0 0.0
    %2893 = vmatprep.subr.mxu0 0.0
    %2894 = vmatpush2.msra.mxu0 0.0
    %2895 = vmatprep.subr.mxu0 0.0
    %2896 = vmatpush2.msra.mxu0 0.0
    %2897 = vmatprep.subr.mxu0 0.0
    %2898 = vmatpush2.msra.mxu0 0.0
    %2899 = vmatprep.subr.mxu0 0.0
    %2900 = vmatpush2.msra.mxu0 0.0
    %2901 = vmatprep.subr.mxu0 0.0
    %2902 = vmatpush2.msra.mxu0 0.0
    %2903 = vmatprep.subr.mxu0 0.0
    %2904 = vmatpush2.msra.mxu0 0.0
    %2905 = vmatprep.subr.mxu0 0.0
    %2906 = vmatpush2.msra.mxu0 0.0
    %2907 = vmatprep.subr.mxu0 0.0
    %2908 = vmatpush2.msra.mxu0 0.0
    %2909 = vmatprep.subr.mxu0 0.0
    %2910 = vmatpush2.msra.mxu0 0.0
    %2911 = vmatprep.subr.mxu0 0.0
    %2912 = vmatpush2.msra.mxu0 0.0
    %2913 = vmatprep.subr.mxu0 0.0
    %2914 = vmatpush2.msra.mxu0 0.0
    %2915 = vmatprep.subr.mxu0 0.0
    %2916 = vmatpush2.msra.mxu0 0.0
    %2917 = vmatprep.mubr.f32.mxu0 0.0
    %2918 = vmatmul.mubr.f32.gmra.mxu0 %v2851
    %v2919 = vpop.f32.mrf.mxu0
    %v2920 = vadd.f32 0.0, %v2919
    %v2921 = vpop.f32.mrf.mxu0
    %2922 = vdwg.mxu0
    %v2923 = vadd.f32 %v330, %v2920
    %v2924 = vtanh.pop %v2923
    %2926 = vrot.lane.b32.xlu0 %v2849, 32
    %v2927 = vpop.permute.xlu0 %2926
    %v2929 = vsel %vm388, %v2924, %v2927
    %v2931 = vsel %vm465, %v2929, 0
    %2933 = vmatprep.subr.mxu0 0.0
    %2934 = vmatpush1.msra.mxu0 0.0
    %2935 = vmatprep.subr.mxu0 0.0
    %2936 = vmatpush1.msra.mxu0 0.0
    %2937 = vmatprep.subr.mxu0 0.0
    %2938 = vmatpush1.msra.mxu0 0.0
    %2939 = vmatprep.subr.mxu0 0.0
    %2940 = vmatpush1.msra.mxu0 0.0
    %2941 = vmatprep.subr.mxu0 0.0
    %2942 = vmatpush1.msra.mxu0 0.0
    %2943 = vmatprep.subr.mxu0 0.0
    %2944 = vmatpush1.msra.mxu0 0.0
    %2945 = vmatprep.subr.mxu0 0.0
    %2946 = vmatpush1.msra.mxu0 0.0
    %2947 = vmatprep.subr.mxu0 0.0
    %2948 = vmatpush1.msra.mxu0 0.0
    %2949 = vmatprep.subr.mxu0 0.0
    %2950 = vmatpush1.msra.mxu0 %v51
    %2951 = vmatprep.subr.mxu0 0.0
    %2952 = vmatpush1.msra.mxu0 %v50
    %2953 = vmatprep.subr.mxu0 0.0
    %2954 = vmatpush1.msra.mxu0 %v49
    %2955 = vmatprep.subr.mxu0 0.0
    %2956 = vmatpush1.msra.mxu0 %v48
    %2957 = vmatprep.subr.mxu0 0.0
    %2958 = vmatpush1.msra.mxu0 %v47
    %2959 = vmatprep.subr.mxu0 0.0
    %2960 = vmatpush1.msra.mxu0 %v46
    %2961 = vmatprep.subr.mxu0 0.0
    %2962 = vmatpush1.msra.mxu0 %v45
    %2963 = vmatprep.subr.mxu0 0.0
    %2964 = vmatpush1.msra.mxu0 %v44
    %2965 = vmatprep.subr.mxu0 0.0
    %2966 = vmatpush2.msra.mxu0 0.0
    %2967 = vmatprep.subr.mxu0 0.0
    %2968 = vmatpush2.msra.mxu0 0.0
    %2969 = vmatprep.subr.mxu0 0.0
    %2970 = vmatpush2.msra.mxu0 0.0
    %2971 = vmatprep.subr.mxu0 0.0
    %2972 = vmatpush2.msra.mxu0 0.0
    %2973 = vmatprep.subr.mxu0 0.0
    %2974 = vmatpush2.msra.mxu0 0.0
    %2975 = vmatprep.subr.mxu0 0.0
    %2976 = vmatpush2.msra.mxu0 0.0
    %2977 = vmatprep.subr.mxu0 0.0
    %2978 = vmatpush2.msra.mxu0 0.0
    %2979 = vmatprep.subr.mxu0 0.0
    %2980 = vmatpush2.msra.mxu0 0.0
    %2981 = vmatprep.subr.mxu0 0.0
    %2982 = vmatpush2.msra.mxu0 0.0
    %2983 = vmatprep.subr.mxu0 0.0
    %2984 = vmatpush2.msra.mxu0 0.0
    %2985 = vmatprep.subr.mxu0 0.0
    %2986 = vmatpush2.msra.mxu0 0.0
    %2987 = vmatprep.subr.mxu0 0.0
    %2988 = vmatpush2.msra.mxu0 0.0
    %2989 = vmatprep.subr.mxu0 0.0
    %2990 = vmatpush2.msra.mxu0 0.0
    %2991 = vmatprep.subr.mxu0 0.0
    %2992 = vmatpush2.msra.mxu0 0.0
    %2993 = vmatprep.subr.mxu0 0.0
    %2994 = vmatpush2.msra.mxu0 0.0
    %2995 = vmatprep.subr.mxu0 0.0
    %2996 = vmatpush2.msra.mxu0 0.0
    %2997 = vmatprep.mubr.f32.mxu0 0.0
    %2998 = vmatmul.mubr.f32.gmra.mxu0 %v2931
    %v2999 = vpop.f32.mrf.mxu0
    %v3000 = vadd.f32 %v57, %v2999
    %v3001 = vpop.f32.mrf.mxu0
    %3002 = vdwg.mxu0
    %v3003 = vtanh.pop %v3000
    %v3005 = vsel %vm388, %v2924, 0
    %3007 = vmatprep.subr.mxu0 0.0
    %3008 = vmatpush1.msra.mxu0 0.0
    %3009 = vmatprep.subr.mxu0 0.0
    %3010 = vmatpush1.msra.mxu0 0.0
    %3011 = vmatprep.subr.mxu0 0.0
    %3012 = vmatpush1.msra.mxu0 0.0
    %3013 = vmatprep.subr.mxu0 0.0
    %3014 = vmatpush1.msra.mxu0 0.0
    %3015 = vmatprep.subr.mxu0 0.0
    %3016 = vmatpush1.msra.mxu0 0.0
    %3017 = vmatprep.subr.mxu0 0.0
    %3018 = vmatpush1.msra.mxu0 0.0
    %3019 = vmatprep.subr.mxu0 0.0
    %3020 = vmatpush1.msra.mxu0 0.0
    %3021 = vmatprep.subr.mxu0 0.0
    %3022 = vmatpush1.msra.mxu0 0.0
    %3023 = vmatprep.subr.mxu0 0.0
    %3024 = vmatpush1.msra.mxu0 0.0
    %3025 = vmatprep.subr.mxu0 0.0
    %3026 = vmatpush1.msra.mxu0 0.0
    %3027 = vmatprep.subr.mxu0 0.0
    %3028 = vmatpush1.msra.mxu0 0.0
    %3029 = vmatprep.subr.mxu0 0.0
    %3030 = vmatpush1.msra.mxu0 0.0
    %3031 = vmatprep.subr.mxu0 0.0
    %3032 = vmatpush1.msra.mxu0 %v43
    %3033 = vmatprep.subr.mxu0 0.0
    %3034 = vmatpush1.msra.mxu0 %v42
    %3035 = vmatprep.subr.mxu0 0.0
    %3036 = vmatpush1.msra.mxu0 %v41
    %3037 = vmatprep.subr.mxu0 0.0
    %3038 = vmatpush1.msra.mxu0 %v40
    %3039 = vmatprep.subr.mxu0 0.0
    %3040 = vmatpush2.msra.mxu0 0.0
    %3041 = vmatprep.subr.mxu0 0.0
    %3042 = vmatpush2.msra.mxu0 0.0
    %3043 = vmatprep.subr.mxu0 0.0
    %3044 = vmatpush2.msra.mxu0 0.0
    %3045 = vmatprep.subr.mxu0 0.0
    %3046 = vmatpush2.msra.mxu0 0.0
    %3047 = vmatprep.subr.mxu0 0.0
    %3048 = vmatpush2.msra.mxu0 0.0
    %3049 = vmatprep.subr.mxu0 0.0
    %3050 = vmatpush2.msra.mxu0 0.0
    %3051 = vmatprep.subr.mxu0 0.0
    %3052 = vmatpush2.msra.mxu0 0.0
    %3053 = vmatprep.subr.mxu0 0.0
    %3054 = vmatpush2.msra.mxu0 0.0
    %3055 = vmatprep.subr.mxu0 0.0
    %3056 = vmatpush2.msra.mxu0 0.0
    %3057 = vmatprep.subr.mxu0 0.0
    %3058 = vmatpush2.msra.mxu0 0.0
    %3059 = vmatprep.subr.mxu0 0.0
    %3060 = vmatpush2.msra.mxu0 0.0
    %3061 = vmatprep.subr.mxu0 0.0
    %3062 = vmatpush2.msra.mxu0 0.0
    %3063 = vmatprep.subr.mxu0 0.0
    %3064 = vmatpush2.msra.mxu0 0.0
    %3065 = vmatprep.subr.mxu0 0.0
    %3066 = vmatpush2.msra.mxu0 0.0
    %3067 = vmatprep.subr.mxu0 0.0
    %3068 = vmatpush2.msra.mxu0 0.0
    %3069 = vmatprep.subr.mxu0 0.0
    %3070 = vmatpush2.msra.mxu0 0.0
    %3071 = vmatprep.mubr.f32.mxu0 0.0
    %3072 = vmatmul.mubr.f32.gmra.mxu0 %v3005
    %v3073 = vpop.f32.mrf.mxu0
    %v3074 = vadd.f32 0.0, %v3073
    %v3075 = vpop.f32.mrf.mxu0
    %3076 = vdwg.mxu0
    %v3077 = vadd.f32 %v335, %v3074
    %v3078 = vtanh.pop %v3077
    %3080 = vrot.lane.b32.xlu0 %v3003, 32
    %v3081 = vpop.permute.xlu0 %3080
    %v3083 = vsel %vm388, %v3078, %v3081
    %v3085 = vsel %vm465, %v3083, 0
    %3087 = vmatprep.subr.mxu0 0.0
    %3088 = vmatpush1.msra.mxu0 0.0
    %3089 = vmatprep.subr.mxu0 0.0
    %3090 = vmatpush1.msra.mxu0 0.0
    %3091 = vmatprep.subr.mxu0 0.0
    %3092 = vmatpush1.msra.mxu0 0.0
    %3093 = vmatprep.subr.mxu0 0.0
    %3094 = vmatpush1.msra.mxu0 0.0
    %3095 = vmatprep.subr.mxu0 0.0
    %3096 = vmatpush1.msra.mxu0 0.0
    %3097 = vmatprep.subr.mxu0 0.0
    %3098 = vmatpush1.msra.mxu0 0.0
    %3099 = vmatprep.subr.mxu0 0.0
    %3100 = vmatpush1.msra.mxu0 0.0
    %3101 = vmatprep.subr.mxu0 0.0
    %3102 = vmatpush1.msra.mxu0 0.0
    %3103 = vmatprep.subr.mxu0 0.0
    %3104 = vmatpush1.msra.mxu0 %v51
    %3105 = vmatprep.subr.mxu0 0.0
    %3106 = vmatpush1.msra.mxu0 %v50
    %3107 = vmatprep.subr.mxu0 0.0
    %3108 = vmatpush1.msra.mxu0 %v49
    %3109 = vmatprep.subr.mxu0 0.0
    %3110 = vmatpush1.msra.mxu0 %v48
    %3111 = vmatprep.subr.mxu0 0.0
    %3112 = vmatpush1.msra.mxu0 %v47
    %3113 = vmatprep.subr.mxu0 0.0
    %3114 = vmatpush1.msra.mxu0 %v46
    %3115 = vmatprep.subr.mxu0 0.0
    %3116 = vmatpush1.msra.mxu0 %v45
    %3117 = vmatprep.subr.mxu0 0.0
    %3118 = vmatpush1.msra.mxu0 %v44
    %3119 = vmatprep.subr.mxu0 0.0
    %3120 = vmatpush2.msra.mxu0 0.0
    %3121 = vmatprep.subr.mxu0 0.0
    %3122 = vmatpush2.msra.mxu0 0.0
    %3123 = vmatprep.subr.mxu0 0.0
    %3124 = vmatpush2.msra.mxu0 0.0
    %3125 = vmatprep.subr.mxu0 0.0
    %3126 = vmatpush2.msra.mxu0 0.0
    %3127 = vmatprep.subr.mxu0 0.0
    %3128 = vmatpush2.msra.mxu0 0.0
    %3129 = vmatprep.subr.mxu0 0.0
    %3130 = vmatpush2.msra.mxu0 0.0
    %3131 = vmatprep.subr.mxu0 0.0
    %3132 = vmatpush2.msra.mxu0 0.0
    %3133 = vmatprep.subr.mxu0 0.0
    %3134 = vmatpush2.msra.mxu0 0.0
    %3135 = vmatprep.subr.mxu0 0.0
    %3136 = vmatpush2.msra.mxu0 0.0
    %3137 = vmatprep.subr.mxu0 0.0
    %3138 = vmatpush2.msra.mxu0 0.0
    %3139 = vmatprep.subr.mxu0 0.0
    %3140 = vmatpush2.msra.mxu0 0.0
    %3141 = vmatprep.subr.mxu0 0.0
    %3142 = vmatpush2.msra.mxu0 0.0
    %3143 = vmatprep.subr.mxu0 0.0
    %3144 = vmatpush2.msra.mxu0 0.0
    %3145 = vmatprep.subr.mxu0 0.0
    %3146 = vmatpush2.msra.mxu0 0.0
    %3147 = vmatprep.subr.mxu0 0.0
    %3148 = vmatpush2.msra.mxu0 0.0
    %3149 = vmatprep.subr.mxu0 0.0
    %3150 = vmatpush2.msra.mxu0 0.0
    %3151 = vmatprep.mubr.f32.mxu0 0.0
    %3152 = vmatmul.mubr.f32.gmra.mxu0 %v3085
    %v3153 = vpop.f32.mrf.mxu0
    %v3154 = vadd.f32 %v57, %v3153
    %v3155 = vpop.f32.mrf.mxu0
    %3156 = vdwg.mxu0
    %v3157 = vtanh.pop %v3154
    %v3159 = vsel %vm388, %v3078, 0
    %3161 = vmatprep.subr.mxu0 0.0
    %3162 = vmatpush1.msra.mxu0 0.0
    %3163 = vmatprep.subr.mxu0 0.0
    %3164 = vmatpush1.msra.mxu0 0.0
    %3165 = vmatprep.subr.mxu0 0.0
    %3166 = vmatpush1.msra.mxu0 0.0
    %3167 = vmatprep.subr.mxu0 0.0
    %3168 = vmatpush1.msra.mxu0 0.0
    %3169 = vmatprep.subr.mxu0 0.0
    %3170 = vmatpush1.msra.mxu0 0.0
    %3171 = vmatprep.subr.mxu0 0.0
    %3172 = vmatpush1.msra.mxu0 0.0
    %3173 = vmatprep.subr.mxu0 0.0
    %3174 = vmatpush1.msra.mxu0 0.0
    %3175 = vmatprep.subr.mxu0 0.0
    %3176 = vmatpush1.msra.mxu0 0.0
    %3177 = vmatprep.subr.mxu0 0.0
    %3178 = vmatpush1.msra.mxu0 0.0
    %3179 = vmatprep.subr.mxu0 0.0
    %3180 = vmatpush1.msra.mxu0 0.0
    %3181 = vmatprep.subr.mxu0 0.0
    %3182 = vmatpush1.msra.mxu0 0.0
    %3183 = vmatprep.subr.mxu0 0.0
    %3184 = vmatpush1.msra.mxu0 0.0
    %3185 = vmatprep.subr.mxu0 0.0
    %3186 = vmatpush1.msra.mxu0 %v43
    %3187 = vmatprep.subr.mxu0 0.0
    %3188 = vmatpush1.msra.mxu0 %v42
    %3189 = vmatprep.subr.mxu0 0.0
    %3190 = vmatpush1.msra.mxu0 %v41
    %3191 = vmatprep.subr.mxu0 0.0
    %3192 = vmatpush1.msra.mxu0 %v40
    %3193 = vmatprep.subr.mxu0 0.0
    %3194 = vmatpush2.msra.mxu0 0.0
    %3195 = vmatprep.subr.mxu0 0.0
    %3196 = vmatpush2.msra.mxu0 0.0
    %3197 = vmatprep.subr.mxu0 0.0
    %3198 = vmatpush2.msra.mxu0 0.0
    %3199 = vmatprep.subr.mxu0 0.0
    %3200 = vmatpush2.msra.mxu0 0.0
    %3201 = vmatprep.subr.mxu0 0.0
    %3202 = vmatpush2.msra.mxu0 0.0
    %3203 = vmatprep.subr.mxu0 0.0
    %3204 = vmatpush2.msra.mxu0 0.0
    %3205 = vmatprep.subr.mxu0 0.0
    %3206 = vmatpush2.msra.mxu0 0.0
    %3207 = vmatprep.subr.mxu0 0.0
    %3208 = vmatpush2.msra.mxu0 0.0
    %3209 = vmatprep.subr.mxu0 0.0
    %3210 = vmatpush2.msra.mxu0 0.0
    %3211 = vmatprep.subr.mxu0 0.0
    %3212 = vmatpush2.msra.mxu0 0.0
    %3213 = vmatprep.subr.mxu0 0.0
    %3214 = vmatpush2.msra.mxu0 0.0
    %3215 = vmatprep.subr.mxu0 0.0
    %3216 = vmatpush2.msra.mxu0 0.0
    %3217 = vmatprep.subr.mxu0 0.0
    %3218 = vmatpush2.msra.mxu0 0.0
    %3219 = vmatprep.subr.mxu0 0.0
    %3220 = vmatpush2.msra.mxu0 0.0
    %3221 = vmatprep.subr.mxu0 0.0
    %3222 = vmatpush2.msra.mxu0 0.0
    %3223 = vmatprep.subr.mxu0 0.0
    %3224 = vmatpush2.msra.mxu0 0.0
    %3225 = vmatprep.mubr.f32.mxu0 0.0
    %3226 = vmatmul.mubr.f32.gmra.mxu0 %v3159
    %v3227 = vpop.f32.mrf.mxu0
    %v3228 = vadd.f32 0.0, %v3227
    %v3229 = vpop.f32.mrf.mxu0
    %3230 = vdwg.mxu0
    %v3231 = vadd.f32 %v340, %v3228
    %v3232 = vtanh.pop %v3231
    %3234 = vrot.lane.b32.xlu0 %v3157, 32
    %v3235 = vpop.permute.xlu0 %3234
    %v3237 = vsel %vm388, %v3232, %v3235
    %v3239 = vsel %vm465, %v3237, 0
    %3241 = vmatprep.subr.mxu0 0.0
    %3242 = vmatpush1.msra.mxu0 0.0
    %3243 = vmatprep.subr.mxu0 0.0
    %3244 = vmatpush1.msra.mxu0 0.0
    %3245 = vmatprep.subr.mxu0 0.0
    %3246 = vmatpush1.msra.mxu0 0.0
    %3247 = vmatprep.subr.mxu0 0.0
    %3248 = vmatpush1.msra.mxu0 0.0
    %3249 = vmatprep.subr.mxu0 0.0
    %3250 = vmatpush1.msra.mxu0 0.0
    %3251 = vmatprep.subr.mxu0 0.0
    %3252 = vmatpush1.msra.mxu0 0.0
    %3253 = vmatprep.subr.mxu0 0.0
    %3254 = vmatpush1.msra.mxu0 0.0
    %3255 = vmatprep.subr.mxu0 0.0
    %3256 = vmatpush1.msra.mxu0 0.0
    %3257 = vmatprep.subr.mxu0 0.0
    %3258 = vmatpush1.msra.mxu0 %v51
    %3259 = vmatprep.subr.mxu0 0.0
    %3260 = vmatpush1.msra.mxu0 %v50
    %3261 = vmatprep.subr.mxu0 0.0
    %3262 = vmatpush1.msra.mxu0 %v49
    %3263 = vmatprep.subr.mxu0 0.0
    %3264 = vmatpush1.msra.mxu0 %v48
    %3265 = vmatprep.subr.mxu0 0.0
    %3266 = vmatpush1.msra.mxu0 %v47
    %3267 = vmatprep.subr.mxu0 0.0
    %3268 = vmatpush1.msra.mxu0 %v46
    %3269 = vmatprep.subr.mxu0 0.0
    %3270 = vmatpush1.msra.mxu0 %v45
    %3271 = vmatprep.subr.mxu0 0.0
    %3272 = vmatpush1.msra.mxu0 %v44
    %3273 = vmatprep.subr.mxu0 0.0
    %3274 = vmatpush2.msra.mxu0 0.0
    %3275 = vmatprep.subr.mxu0 0.0
    %3276 = vmatpush2.msra.mxu0 0.0
    %3277 = vmatprep.subr.mxu0 0.0
    %3278 = vmatpush2.msra.mxu0 0.0
    %3279 = vmatprep.subr.mxu0 0.0
    %3280 = vmatpush2.msra.mxu0 0.0
    %3281 = vmatprep.subr.mxu0 0.0
    %3282 = vmatpush2.msra.mxu0 0.0
    %3283 = vmatprep.subr.mxu0 0.0
    %3284 = vmatpush2.msra.mxu0 0.0
    %3285 = vmatprep.subr.mxu0 0.0
    %3286 = vmatpush2.msra.mxu0 0.0
    %3287 = vmatprep.subr.mxu0 0.0
    %3288 = vmatpush2.msra.mxu0 0.0
    %3289 = vmatprep.subr.mxu0 0.0
    %3290 = vmatpush2.msra.mxu0 0.0
    %3291 = vmatprep.subr.mxu0 0.0
    %3292 = vmatpush2.msra.mxu0 0.0
    %3293 = vmatprep.subr.mxu0 0.0
    %3294 = vmatpush2.msra.mxu0 0.0
    %3295 = vmatprep.subr.mxu0 0.0
    %3296 = vmatpush2.msra.mxu0 0.0
    %3297 = vmatprep.subr.mxu0 0.0
    %3298 = vmatpush2.msra.mxu0 0.0
    %3299 = vmatprep.subr.mxu0 0.0
    %3300 = vmatpush2.msra.mxu0 0.0
    %3301 = vmatprep.subr.mxu0 0.0
    %3302 = vmatpush2.msra.mxu0 0.0
    %3303 = vmatprep.subr.mxu0 0.0
    %3304 = vmatpush2.msra.mxu0 0.0
    %3305 = vmatprep.mubr.f32.mxu0 0.0
    %3306 = vmatmul.mubr.f32.gmra.mxu0 %v3239
    %v3307 = vpop.f32.mrf.mxu0
    %v3308 = vadd.f32 %v57, %v3307
    %v3309 = vpop.f32.mrf.mxu0
    %3310 = vdwg.mxu0
    %v3311 = vtanh.pop %v3308
    %v3313 = vsel %vm388, %v3232, 0
    %3315 = vmatprep.subr.mxu0 0.0
    %3316 = vmatpush1.msra.mxu0 0.0
    %3317 = vmatprep.subr.mxu0 0.0
    %3318 = vmatpush1.msra.mxu0 0.0
    %3319 = vmatprep.subr.mxu0 0.0
    %3320 = vmatpush1.msra.mxu0 0.0
    %3321 = vmatprep.subr.mxu0 0.0
    %3322 = vmatpush1.msra.mxu0 0.0
    %3323 = vmatprep.subr.mxu0 0.0
    %3324 = vmatpush1.msra.mxu0 0.0
    %3325 = vmatprep.subr.mxu0 0.0
    %3326 = vmatpush1.msra.mxu0 0.0
    %3327 = vmatprep.subr.mxu0 0.0
    %3328 = vmatpush1.msra.mxu0 0.0
    %3329 = vmatprep.subr.mxu0 0.0
    %3330 = vmatpush1.msra.mxu0 0.0
    %3331 = vmatprep.subr.mxu0 0.0
    %3332 = vmatpush1.msra.mxu0 0.0
    %3333 = vmatprep.subr.mxu0 0.0
    %3334 = vmatpush1.msra.mxu0 0.0
    %3335 = vmatprep.subr.mxu0 0.0
    %3336 = vmatpush1.msra.mxu0 0.0
    %3337 = vmatprep.subr.mxu0 0.0
    %3338 = vmatpush1.msra.mxu0 0.0
    %3339 = vmatprep.subr.mxu0 0.0
    %3340 = vmatpush1.msra.mxu0 %v43
    %3341 = vmatprep.subr.mxu0 0.0
    %3342 = vmatpush1.msra.mxu0 %v42
    %3343 = vmatprep.subr.mxu0 0.0
    %3344 = vmatpush1.msra.mxu0 %v41
    %3345 = vmatprep.subr.mxu0 0.0
    %3346 = vmatpush1.msra.mxu0 %v40
    %3347 = vmatprep.subr.mxu0 0.0
    %3348 = vmatpush2.msra.mxu0 0.0
    %3349 = vmatprep.subr.mxu0 0.0
    %3350 = vmatpush2.msra.mxu0 0.0
    %3351 = vmatprep.subr.mxu0 0.0
    %3352 = vmatpush2.msra.mxu0 0.0
    %3353 = vmatprep.subr.mxu0 0.0
    %3354 = vmatpush2.msra.mxu0 0.0
    %3355 = vmatprep.subr.mxu0 0.0
    %3356 = vmatpush2.msra.mxu0 0.0
    %3357 = vmatprep.subr.mxu0 0.0
    %3358 = vmatpush2.msra.mxu0 0.0
    %3359 = vmatprep.subr.mxu0 0.0
    %3360 = vmatpush2.msra.mxu0 0.0
    %3361 = vmatprep.subr.mxu0 0.0
    %3362 = vmatpush2.msra.mxu0 0.0
    %3363 = vmatprep.subr.mxu0 0.0
    %3364 = vmatpush2.msra.mxu0 0.0
    %3365 = vmatprep.subr.mxu0 0.0
    %3366 = vmatpush2.msra.mxu0 0.0
    %3367 = vmatprep.subr.mxu0 0.0
    %3368 = vmatpush2.msra.mxu0 0.0
    %3369 = vmatprep.subr.mxu0 0.0
    %3370 = vmatpush2.msra.mxu0 0.0
    %3371 = vmatprep.subr.mxu0 0.0
    %3372 = vmatpush2.msra.mxu0 0.0
    %3373 = vmatprep.subr.mxu0 0.0
    %3374 = vmatpush2.msra.mxu0 0.0
    %3375 = vmatprep.subr.mxu0 0.0
    %3376 = vmatpush2.msra.mxu0 0.0
    %3377 = vmatprep.subr.mxu0 0.0
    %3378 = vmatpush2.msra.mxu0 0.0
    %3379 = vmatprep.mubr.f32.mxu0 0.0
    %3380 = vmatmul.mubr.f32.gmra.mxu0 %v3313
    %v3381 = vpop.f32.mrf.mxu0
    %v3382 = vadd.f32 0.0, %v3381
    %v3383 = vpop.f32.mrf.mxu0
    %3384 = vdwg.mxu0
    %v3385 = vadd.f32 %v345, %v3382
    %v3386 = vtanh.pop %v3385
    %3388 = vrot.lane.b32.xlu0 %v3311, 32
    %v3389 = vpop.permute.xlu0 %3388
    %v3391 = vsel %vm388, %v3386, %v3389
    %v3393 = vsel %vm465, %v3391, 0
    %3395 = vmatprep.subr.mxu0 0.0
    %3396 = vmatpush1.msra.mxu0 0.0
    %3397 = vmatprep.subr.mxu0 0.0
    %3398 = vmatpush1.msra.mxu0 0.0
    %3399 = vmatprep.subr.mxu0 0.0
    %3400 = vmatpush1.msra.mxu0 0.0
    %3401 = vmatprep.subr.mxu0 0.0
    %3402 = vmatpush1.msra.mxu0 0.0
    %3403 = vmatprep.subr.mxu0 0.0
    %3404 = vmatpush1.msra.mxu0 0.0
    %3405 = vmatprep.subr.mxu0 0.0
    %3406 = vmatpush1.msra.mxu0 0.0
    %3407 = vmatprep.subr.mxu0 0.0
    %3408 = vmatpush1.msra.mxu0 0.0
    %3409 = vmatprep.subr.mxu0 0.0
    %3410 = vmatpush1.msra.mxu0 0.0
    %3411 = vmatprep.subr.mxu0 0.0
    %3412 = vmatpush1.msra.mxu0 %v51
    %3413 = vmatprep.subr.mxu0 0.0
    %3414 = vmatpush1.msra.mxu0 %v50
    %3415 = vmatprep.subr.mxu0 0.0
    %3416 = vmatpush1.msra.mxu0 %v49
    %3417 = vmatprep.subr.mxu0 0.0
    %3418 = vmatpush1.msra.mxu0 %v48
    %3419 = vmatprep.subr.mxu0 0.0
    %3420 = vmatpush1.msra.mxu0 %v47
    %3421 = vmatprep.subr.mxu0 0.0
    %3422 = vmatpush1.msra.mxu0 %v46
    %3423 = vmatprep.subr.mxu0 0.0
    %3424 = vmatpush1.msra.mxu0 %v45
    %3425 = vmatprep.subr.mxu0 0.0
    %3426 = vmatpush1.msra.mxu0 %v44
    %3427 = vmatprep.subr.mxu0 0.0
    %3428 = vmatpush2.msra.mxu0 0.0
    %3429 = vmatprep.subr.mxu0 0.0
    %3430 = vmatpush2.msra.mxu0 0.0
    %3431 = vmatprep.subr.mxu0 0.0
    %3432 = vmatpush2.msra.mxu0 0.0
    %3433 = vmatprep.subr.mxu0 0.0
    %3434 = vmatpush2.msra.mxu0 0.0
    %3435 = vmatprep.subr.mxu0 0.0
    %3436 = vmatpush2.msra.mxu0 0.0
    %3437 = vmatprep.subr.mxu0 0.0
    %3438 = vmatpush2.msra.mxu0 0.0
    %3439 = vmatprep.subr.mxu0 0.0
    %3440 = vmatpush2.msra.mxu0 0.0
    %3441 = vmatprep.subr.mxu0 0.0
    %3442 = vmatpush2.msra.mxu0 0.0
    %3443 = vmatprep.subr.mxu0 0.0
    %3444 = vmatpush2.msra.mxu0 0.0
    %3445 = vmatprep.subr.mxu0 0.0
    %3446 = vmatpush2.msra.mxu0 0.0
    %3447 = vmatprep.subr.mxu0 0.0
    %3448 = vmatpush2.msra.mxu0 0.0
    %3449 = vmatprep.subr.mxu0 0.0
    %3450 = vmatpush2.msra.mxu0 0.0
    %3451 = vmatprep.subr.mxu0 0.0
    %3452 = vmatpush2.msra.mxu0 0.0
    %3453 = vmatprep.subr.mxu0 0.0
    %3454 = vmatpush2.msra.mxu0 0.0
    %3455 = vmatprep.subr.mxu0 0.0
    %3456 = vmatpush2.msra.mxu0 0.0
    %3457 = vmatprep.subr.mxu0 0.0
    %3458 = vmatpush2.msra.mxu0 0.0
    %3459 = vmatprep.mubr.f32.mxu0 0.0
    %3460 = vmatmul.mubr.f32.gmra.mxu0 %v3393
    %v3461 = vpop.f32.mrf.mxu0
    %v3462 = vadd.f32 %v57, %v3461
    %v3463 = vpop.f32.mrf.mxu0
    %3464 = vdwg.mxu0
    %v3465 = vtanh.pop %v3462
    %v3467 = vsel %vm388, %v3386, 0
    %3469 = vmatprep.subr.mxu0 0.0
    %3470 = vmatpush1.msra.mxu0 0.0
    %3471 = vmatprep.subr.mxu0 0.0
    %3472 = vmatpush1.msra.mxu0 0.0
    %3473 = vmatprep.subr.mxu0 0.0
    %3474 = vmatpush1.msra.mxu0 0.0
    %3475 = vmatprep.subr.mxu0 0.0
    %3476 = vmatpush1.msra.mxu0 0.0
    %3477 = vmatprep.subr.mxu0 0.0
    %3478 = vmatpush1.msra.mxu0 0.0
    %3479 = vmatprep.subr.mxu0 0.0
    %3480 = vmatpush1.msra.mxu0 0.0
    %3481 = vmatprep.subr.mxu0 0.0
    %3482 = vmatpush1.msra.mxu0 0.0
    %3483 = vmatprep.subr.mxu0 0.0
    %3484 = vmatpush1.msra.mxu0 0.0
    %3485 = vmatprep.subr.mxu0 0.0
    %3486 = vmatpush1.msra.mxu0 0.0
    %3487 = vmatprep.subr.mxu0 0.0
    %3488 = vmatpush1.msra.mxu0 0.0
    %3489 = vmatprep.subr.mxu0 0.0
    %3490 = vmatpush1.msra.mxu0 0.0
    %3491 = vmatprep.subr.mxu0 0.0
    %3492 = vmatpush1.msra.mxu0 0.0
    %3493 = vmatprep.subr.mxu0 0.0
    %3494 = vmatpush1.msra.mxu0 %v43
    %3495 = vmatprep.subr.mxu0 0.0
    %3496 = vmatpush1.msra.mxu0 %v42
    %3497 = vmatprep.subr.mxu0 0.0
    %3498 = vmatpush1.msra.mxu0 %v41
    %3499 = vmatprep.subr.mxu0 0.0
    %3500 = vmatpush1.msra.mxu0 %v40
    %3501 = vmatprep.subr.mxu0 0.0
    %3502 = vmatpush2.msra.mxu0 0.0
    %3503 = vmatprep.subr.mxu0 0.0
    %3504 = vmatpush2.msra.mxu0 0.0
    %3505 = vmatprep.subr.mxu0 0.0
    %3506 = vmatpush2.msra.mxu0 0.0
    %3507 = vmatprep.subr.mxu0 0.0
    %3508 = vmatpush2.msra.mxu0 0.0
    %3509 = vmatprep.subr.mxu0 0.0
    %3510 = vmatpush2.msra.mxu0 0.0
    %3511 = vmatprep.subr.mxu0 0.0
    %3512 = vmatpush2.msra.mxu0 0.0
    %3513 = vmatprep.subr.mxu0 0.0
    %3514 = vmatpush2.msra.mxu0 0.0
    %3515 = vmatprep.subr.mxu0 0.0
    %3516 = vmatpush2.msra.mxu0 0.0
    %3517 = vmatprep.subr.mxu0 0.0
    %3518 = vmatpush2.msra.mxu0 0.0
    %3519 = vmatprep.subr.mxu0 0.0
    %3520 = vmatpush2.msra.mxu0 0.0
    %3521 = vmatprep.subr.mxu0 0.0
    %3522 = vmatpush2.msra.mxu0 0.0
    %3523 = vmatprep.subr.mxu0 0.0
    %3524 = vmatpush2.msra.mxu0 0.0
    %3525 = vmatprep.subr.mxu0 0.0
    %3526 = vmatpush2.msra.mxu0 0.0
    %3527 = vmatprep.subr.mxu0 0.0
    %3528 = vmatpush2.msra.mxu0 0.0
    %3529 = vmatprep.subr.mxu0 0.0
    %3530 = vmatpush2.msra.mxu0 0.0
    %3531 = vmatprep.subr.mxu0 0.0
    %3532 = vmatpush2.msra.mxu0 0.0
    %3533 = vmatprep.mubr.f32.mxu0 0.0
    %3534 = vmatmul.mubr.f32.gmra.mxu0 %v3467
    %v3535 = vpop.f32.mrf.mxu0
    %v3536 = vadd.f32 0.0, %v3535
    %v3537 = vpop.f32.mrf.mxu0
    %3538 = vdwg.mxu0
    %v3539 = vadd.f32 %v350, %v3536
    %v3540 = vtanh.pop %v3539
    %3542 = vrot.lane.b32.xlu0 %v3465, 32
    %v3543 = vpop.permute.xlu0 %3542
    %v3545 = vsel %vm388, %v3540, %v3543
    %v3547 = vsel %vm465, %v3545, 0
    %3549 = vmatprep.subr.mxu0 0.0
    %3550 = vmatpush1.msra.mxu0 0.0
    %3551 = vmatprep.subr.mxu0 0.0
    %3552 = vmatpush1.msra.mxu0 0.0
    %3553 = vmatprep.subr.mxu0 0.0
    %3554 = vmatpush1.msra.mxu0 0.0
    %3555 = vmatprep.subr.mxu0 0.0
    %3556 = vmatpush1.msra.mxu0 0.0
    %3557 = vmatprep.subr.mxu0 0.0
    %3558 = vmatpush1.msra.mxu0 0.0
    %3559 = vmatprep.subr.mxu0 0.0
    %3560 = vmatpush1.msra.mxu0 0.0
    %3561 = vmatprep.subr.mxu0 0.0
    %3562 = vmatpush1.msra.mxu0 0.0
    %3563 = vmatprep.subr.mxu0 0.0
    %3564 = vmatpush1.msra.mxu0 0.0
    %3565 = vmatprep.subr.mxu0 0.0
    %3566 = vmatpush1.msra.mxu0 %v51
    %3567 = vmatprep.subr.mxu0 0.0
    %3568 = vmatpush1.msra.mxu0 %v50
    %3569 = vmatprep.subr.mxu0 0.0
    %3570 = vmatpush1.msra.mxu0 %v49
    %3571 = vmatprep.subr.mxu0 0.0
    %3572 = vmatpush1.msra.mxu0 %v48
    %3573 = vmatprep.subr.mxu0 0.0
    %3574 = vmatpush1.msra.mxu0 %v47
    %3575 = vmatprep.subr.mxu0 0.0
    %3576 = vmatpush1.msra.mxu0 %v46
    %3577 = vmatprep.subr.mxu0 0.0
    %3578 = vmatpush1.msra.mxu0 %v45
    %3579 = vmatprep.subr.mxu0 0.0
    %3580 = vmatpush1.msra.mxu0 %v44
    %3581 = vmatprep.subr.mxu0 0.0
    %3582 = vmatpush2.msra.mxu0 0.0
    %3583 = vmatprep.subr.mxu0 0.0
    %3584 = vmatpush2.msra.mxu0 0.0
    %3585 = vmatprep.subr.mxu0 0.0
    %3586 = vmatpush2.msra.mxu0 0.0
    %3587 = vmatprep.subr.mxu0 0.0
    %3588 = vmatpush2.msra.mxu0 0.0
    %3589 = vmatprep.subr.mxu0 0.0
    %3590 = vmatpush2.msra.mxu0 0.0
    %3591 = vmatprep.subr.mxu0 0.0
    %3592 = vmatpush2.msra.mxu0 0.0
    %3593 = vmatprep.subr.mxu0 0.0
    %3594 = vmatpush2.msra.mxu0 0.0
    %3595 = vmatprep.subr.mxu0 0.0
    %3596 = vmatpush2.msra.mxu0 0.0
    %3597 = vmatprep.subr.mxu0 0.0
    %3598 = vmatpush2.msra.mxu0 0.0
    %3599 = vmatprep.subr.mxu0 0.0
    %3600 = vmatpush2.msra.mxu0 0.0
    %3601 = vmatprep.subr.mxu0 0.0
    %3602 = vmatpush2.msra.mxu0 0.0
    %3603 = vmatprep.subr.mxu0 0.0
    %3604 = vmatpush2.msra.mxu0 0.0
    %3605 = vmatprep.subr.mxu0 0.0
    %3606 = vmatpush2.msra.mxu0 0.0
    %3607 = vmatprep.subr.mxu0 0.0
    %3608 = vmatpush2.msra.mxu0 0.0
    %3609 = vmatprep.subr.mxu0 0.0
    %3610 = vmatpush2.msra.mxu0 0.0
    %3611 = vmatprep.subr.mxu0 0.0
    %3612 = vmatpush2.msra.mxu0 0.0
    %3613 = vmatprep.mubr.f32.mxu0 0.0
    %3614 = vmatmul.mubr.f32.gmra.mxu0 %v3547
    %v3615 = vpop.f32.mrf.mxu0
    %v3616 = vadd.f32 %v57, %v3615
    %v3617 = vpop.f32.mrf.mxu0
    %3618 = vdwg.mxu0
    %v3619 = vtanh.pop %v3616
    %v3621 = vsel %vm388, %v3540, 0
    %3623 = vmatprep.subr.mxu0 0.0
    %3624 = vmatpush1.msra.mxu0 0.0
    %3625 = vmatprep.subr.mxu0 0.0
    %3626 = vmatpush1.msra.mxu0 0.0
    %3627 = vmatprep.subr.mxu0 0.0
    %3628 = vmatpush1.msra.mxu0 0.0
    %3629 = vmatprep.subr.mxu0 0.0
    %3630 = vmatpush1.msra.mxu0 0.0
    %3631 = vmatprep.subr.mxu0 0.0
    %3632 = vmatpush1.msra.mxu0 0.0
    %3633 = vmatprep.subr.mxu0 0.0
    %3634 = vmatpush1.msra.mxu0 0.0
    %3635 = vmatprep.subr.mxu0 0.0
    %3636 = vmatpush1.msra.mxu0 0.0
    %3637 = vmatprep.subr.mxu0 0.0
    %3638 = vmatpush1.msra.mxu0 0.0
    %3639 = vmatprep.subr.mxu0 0.0
    %3640 = vmatpush1.msra.mxu0 0.0
    %3641 = vmatprep.subr.mxu0 0.0
    %3642 = vmatpush1.msra.mxu0 0.0
    %3643 = vmatprep.subr.mxu0 0.0
    %3644 = vmatpush1.msra.mxu0 0.0
    %3645 = vmatprep.subr.mxu0 0.0
    %3646 = vmatpush1.msra.mxu0 0.0
    %3647 = vmatprep.subr.mxu0 0.0
    %3648 = vmatpush1.msra.mxu0 %v43
    %3649 = vmatprep.subr.mxu0 0.0
    %3650 = vmatpush1.msra.mxu0 %v42
    %3651 = vmatprep.subr.mxu0 0.0
    %3652 = vmatpush1.msra.mxu0 %v41
    %3653 = vmatprep.subr.mxu0 0.0
    %3654 = vmatpush1.msra.mxu0 %v40
    %3655 = vmatprep.subr.mxu0 0.0
    %3656 = vmatpush2.msra.mxu0 0.0
    %3657 = vmatprep.subr.mxu0 0.0
    %3658 = vmatpush2.msra.mxu0 0.0
    %3659 = vmatprep.subr.mxu0 0.0
    %3660 = vmatpush2.msra.mxu0 0.0
    %3661 = vmatprep.subr.mxu0 0.0
    %3662 = vmatpush2.msra.mxu0 0.0
    %3663 = vmatprep.subr.mxu0 0.0
    %3664 = vmatpush2.msra.mxu0 0.0
    %3665 = vmatprep.subr.mxu0 0.0
    %3666 = vmatpush2.msra.mxu0 0.0
    %3667 = vmatprep.subr.mxu0 0.0
    %3668 = vmatpush2.msra.mxu0 0.0
    %3669 = vmatprep.subr.mxu0 0.0
    %3670 = vmatpush2.msra.mxu0 0.0
    %3671 = vmatprep.subr.mxu0 0.0
    %3672 = vmatpush2.msra.mxu0 0.0
    %3673 = vmatprep.subr.mxu0 0.0
    %3674 = vmatpush2.msra.mxu0 0.0
    %3675 = vmatprep.subr.mxu0 0.0
    %3676 = vmatpush2.msra.mxu0 0.0
    %3677 = vmatprep.subr.mxu0 0.0
    %3678 = vmatpush2.msra.mxu0 0.0
    %3679 = vmatprep.subr.mxu0 0.0
    %3680 = vmatpush2.msra.mxu0 0.0
    %3681 = vmatprep.subr.mxu0 0.0
    %3682 = vmatpush2.msra.mxu0 0.0
    %3683 = vmatprep.subr.mxu0 0.0
    %3684 = vmatpush2.msra.mxu0 0.0
    %3685 = vmatprep.subr.mxu0 0.0
    %3686 = vmatpush2.msra.mxu0 0.0
    %3687 = vmatprep.mubr.f32.mxu0 0.0
    %3688 = vmatmul.mubr.f32.gmra.mxu0 %v3621
    %v3689 = vpop.f32.mrf.mxu0
    %v3690 = vadd.f32 0.0, %v3689
    %v3691 = vpop.f32.mrf.mxu0
    %3692 = vdwg.mxu0
    %v3693 = vadd.f32 %v355, %v3690
    %v3694 = vtanh.pop %v3693
    %3696 = vrot.lane.b32.xlu0 %v3619, 32
    %v3697 = vpop.permute.xlu0 %3696
    %v3699 = vsel %vm388, %v3694, %v3697
    %v3701 = vsel %vm465, %v3699, 0
    %3703 = vmatprep.subr.mxu0 0.0
    %3704 = vmatpush1.msra.mxu0 0.0
    %3705 = vmatprep.subr.mxu0 0.0
    %3706 = vmatpush1.msra.mxu0 0.0
    %3707 = vmatprep.subr.mxu0 0.0
    %3708 = vmatpush1.msra.mxu0 0.0
    %3709 = vmatprep.subr.mxu0 0.0
    %3710 = vmatpush1.msra.mxu0 0.0
    %3711 = vmatprep.subr.mxu0 0.0
    %3712 = vmatpush1.msra.mxu0 0.0
    %3713 = vmatprep.subr.mxu0 0.0
    %3714 = vmatpush1.msra.mxu0 0.0
    %3715 = vmatprep.subr.mxu0 0.0
    %3716 = vmatpush1.msra.mxu0 0.0
    %3717 = vmatprep.subr.mxu0 0.0
    %3718 = vmatpush1.msra.mxu0 0.0
    %3719 = vmatprep.subr.mxu0 0.0
    %3720 = vmatpush1.msra.mxu0 %v51
    %3721 = vmatprep.subr.mxu0 0.0
    %3722 = vmatpush1.msra.mxu0 %v50
    %3723 = vmatprep.subr.mxu0 0.0
    %3724 = vmatpush1.msra.mxu0 %v49
    %3725 = vmatprep.subr.mxu0 0.0
    %3726 = vmatpush1.msra.mxu0 %v48
    %3727 = vmatprep.subr.mxu0 0.0
    %3728 = vmatpush1.msra.mxu0 %v47
    %3729 = vmatprep.subr.mxu0 0.0
    %3730 = vmatpush1.msra.mxu0 %v46
    %3731 = vmatprep.subr.mxu0 0.0
    %3732 = vmatpush1.msra.mxu0 %v45
    %3733 = vmatprep.subr.mxu0 0.0
    %3734 = vmatpush1.msra.mxu0 %v44
    %3735 = vmatprep.subr.mxu0 0.0
    %3736 = vmatpush2.msra.mxu0 0.0
    %3737 = vmatprep.subr.mxu0 0.0
    %3738 = vmatpush2.msra.mxu0 0.0
    %3739 = vmatprep.subr.mxu0 0.0
    %3740 = vmatpush2.msra.mxu0 0.0
    %3741 = vmatprep.subr.mxu0 0.0
    %3742 = vmatpush2.msra.mxu0 0.0
    %3743 = vmatprep.subr.mxu0 0.0
    %3744 = vmatpush2.msra.mxu0 0.0
    %3745 = vmatprep.subr.mxu0 0.0
    %3746 = vmatpush2.msra.mxu0 0.0
    %3747 = vmatprep.subr.mxu0 0.0
    %3748 = vmatpush2.msra.mxu0 0.0
    %3749 = vmatprep.subr.mxu0 0.0
    %3750 = vmatpush2.msra.mxu0 0.0
    %3751 = vmatprep.subr.mxu0 0.0
    %3752 = vmatpush2.msra.mxu0 0.0
    %3753 = vmatprep.subr.mxu0 0.0
    %3754 = vmatpush2.msra.mxu0 0.0
    %3755 = vmatprep.subr.mxu0 0.0
    %3756 = vmatpush2.msra.mxu0 0.0
    %3757 = vmatprep.subr.mxu0 0.0
    %3758 = vmatpush2.msra.mxu0 0.0
    %3759 = vmatprep.subr.mxu0 0.0
    %3760 = vmatpush2.msra.mxu0 0.0
    %3761 = vmatprep.subr.mxu0 0.0
    %3762 = vmatpush2.msra.mxu0 0.0
    %3763 = vmatprep.subr.mxu0 0.0
    %3764 = vmatpush2.msra.mxu0 0.0
    %3765 = vmatprep.subr.mxu0 0.0
    %3766 = vmatpush2.msra.mxu0 0.0
    %3767 = vmatprep.mubr.f32.mxu0 0.0
    %3768 = vmatmul.mubr.f32.gmra.mxu0 %v3701
    %v3769 = vpop.f32.mrf.mxu0
    %v3770 = vadd.f32 %v57, %v3769
    %v3771 = vpop.f32.mrf.mxu0
    %3772 = vdwg.mxu0
    %v3773 = vtanh.pop %v3770
    %v3775 = vsel %vm388, %v3694, 0
    %3777 = vmatprep.subr.mxu0 0.0
    %3778 = vmatpush1.msra.mxu0 0.0
    %3779 = vmatprep.subr.mxu0 0.0
    %3780 = vmatpush1.msra.mxu0 0.0
    %3781 = vmatprep.subr.mxu0 0.0
    %3782 = vmatpush1.msra.mxu0 0.0
    %3783 = vmatprep.subr.mxu0 0.0
    %3784 = vmatpush1.msra.mxu0 0.0
    %3785 = vmatprep.subr.mxu0 0.0
    %3786 = vmatpush1.msra.mxu0 0.0
    %3787 = vmatprep.subr.mxu0 0.0
    %3788 = vmatpush1.msra.mxu0 0.0
    %3789 = vmatprep.subr.mxu0 0.0
    %3790 = vmatpush1.msra.mxu0 0.0
    %3791 = vmatprep.subr.mxu0 0.0
    %3792 = vmatpush1.msra.mxu0 0.0
    %3793 = vmatprep.subr.mxu0 0.0
    %3794 = vmatpush1.msra.mxu0 0.0
    %3795 = vmatprep.subr.mxu0 0.0
    %3796 = vmatpush1.msra.mxu0 0.0
    %3797 = vmatprep.subr.mxu0 0.0
    %3798 = vmatpush1.msra.mxu0 0.0
    %3799 = vmatprep.subr.mxu0 0.0
    %3800 = vmatpush1.msra.mxu0 0.0
    %3801 = vmatprep.subr.mxu0 0.0
    %3802 = vmatpush1.msra.mxu0 %v43
    %3803 = vmatprep.subr.mxu0 0.0
    %3804 = vmatpush1.msra.mxu0 %v42
    %3805 = vmatprep.subr.mxu0 0.0
    %3806 = vmatpush1.msra.mxu0 %v41
    %3807 = vmatprep.subr.mxu0 0.0
    %3808 = vmatpush1.msra.mxu0 %v40
    %3809 = vmatprep.subr.mxu0 0.0
    %3810 = vmatpush2.msra.mxu0 0.0
    %3811 = vmatprep.subr.mxu0 0.0
    %3812 = vmatpush2.msra.mxu0 0.0
    %3813 = vmatprep.subr.mxu0 0.0
    %3814 = vmatpush2.msra.mxu0 0.0
    %3815 = vmatprep.subr.mxu0 0.0
    %3816 = vmatpush2.msra.mxu0 0.0
    %3817 = vmatprep.subr.mxu0 0.0
    %3818 = vmatpush2.msra.mxu0 0.0
    %3819 = vmatprep.subr.mxu0 0.0
    %3820 = vmatpush2.msra.mxu0 0.0
    %3821 = vmatprep.subr.mxu0 0.0
    %3822 = vmatpush2.msra.mxu0 0.0
    %3823 = vmatprep.subr.mxu0 0.0
    %3824 = vmatpush2.msra.mxu0 0.0
    %3825 = vmatprep.subr.mxu0 0.0
    %3826 = vmatpush2.msra.mxu0 0.0
    %3827 = vmatprep.subr.mxu0 0.0
    %3828 = vmatpush2.msra.mxu0 0.0
    %3829 = vmatprep.subr.mxu0 0.0
    %3830 = vmatpush2.msra.mxu0 0.0
    %3831 = vmatprep.subr.mxu0 0.0
    %3832 = vmatpush2.msra.mxu0 0.0
    %3833 = vmatprep.subr.mxu0 0.0
    %3834 = vmatpush2.msra.mxu0 0.0
    %3835 = vmatprep.subr.mxu0 0.0
    %3836 = vmatpush2.msra.mxu0 0.0
    %3837 = vmatprep.subr.mxu0 0.0
    %3838 = vmatpush2.msra.mxu0 0.0
    %3839 = vmatprep.subr.mxu0 0.0
    %3840 = vmatpush2.msra.mxu0 0.0
    %3841 = vmatprep.mubr.f32.mxu0 0.0
    %3842 = vmatmul.mubr.f32.gmra.mxu0 %v3775
    %v3843 = vpop.f32.mrf.mxu0
    %v3844 = vadd.f32 0.0, %v3843
    %v3845 = vpop.f32.mrf.mxu0
    %3846 = vdwg.mxu0
    %v3847 = vadd.f32 %v360, %v3844
    %v3848 = vtanh.pop %v3847
    %3850 = vrot.lane.b32.xlu0 %v3773, 32
    %v3851 = vpop.permute.xlu0 %3850
    %v3853 = vsel %vm388, %v3848, %v3851
    %v3855 = vsel %vm465, %v3853, 0
    %3857 = vmatprep.subr.mxu0 0.0
    %3858 = vmatpush1.msra.mxu0 0.0
    %3859 = vmatprep.subr.mxu0 0.0
    %3860 = vmatpush1.msra.mxu0 0.0
    %3861 = vmatprep.subr.mxu0 0.0
    %3862 = vmatpush1.msra.mxu0 0.0
    %3863 = vmatprep.subr.mxu0 0.0
    %3864 = vmatpush1.msra.mxu0 0.0
    %3865 = vmatprep.subr.mxu0 0.0
    %3866 = vmatpush1.msra.mxu0 0.0
    %3867 = vmatprep.subr.mxu0 0.0
    %3868 = vmatpush1.msra.mxu0 0.0
    %3869 = vmatprep.subr.mxu0 0.0
    %3870 = vmatpush1.msra.mxu0 0.0
    %3871 = vmatprep.subr.mxu0 0.0
    %3872 = vmatpush1.msra.mxu0 0.0
    %3873 = vmatprep.subr.mxu0 0.0
    %3874 = vmatpush1.msra.mxu0 %v51
    %3875 = vmatprep.subr.mxu0 0.0
    %3876 = vmatpush1.msra.mxu0 %v50
    %3877 = vmatprep.subr.mxu0 0.0
    %3878 = vmatpush1.msra.mxu0 %v49
    %3879 = vmatprep.subr.mxu0 0.0
    %3880 = vmatpush1.msra.mxu0 %v48
    %3881 = vmatprep.subr.mxu0 0.0
    %3882 = vmatpush1.msra.mxu0 %v47
    %3883 = vmatprep.subr.mxu0 0.0
    %3884 = vmatpush1.msra.mxu0 %v46
    %3885 = vmatprep.subr.mxu0 0.0
    %3886 = vmatpush1.msra.mxu0 %v45
    %3887 = vmatprep.subr.mxu0 0.0
    %3888 = vmatpush1.msra.mxu0 %v44
    %3889 = vmatprep.subr.mxu0 0.0
    %3890 = vmatpush2.msra.mxu0 0.0
    %3891 = vmatprep.subr.mxu0 0.0
    %3892 = vmatpush2.msra.mxu0 0.0
    %3893 = vmatprep.subr.mxu0 0.0
    %3894 = vmatpush2.msra.mxu0 0.0
    %3895 = vmatprep.subr.mxu0 0.0
    %3896 = vmatpush2.msra.mxu0 0.0
    %3897 = vmatprep.subr.mxu0 0.0
    %3898 = vmatpush2.msra.mxu0 0.0
    %3899 = vmatprep.subr.mxu0 0.0
    %3900 = vmatpush2.msra.mxu0 0.0
    %3901 = vmatprep.subr.mxu0 0.0
    %3902 = vmatpush2.msra.mxu0 0.0
    %3903 = vmatprep.subr.mxu0 0.0
    %3904 = vmatpush2.msra.mxu0 0.0
    %3905 = vmatprep.subr.mxu0 0.0
    %3906 = vmatpush2.msra.mxu0 0.0
    %3907 = vmatprep.subr.mxu0 0.0
    %3908 = vmatpush2.msra.mxu0 0.0
    %3909 = vmatprep.subr.mxu0 0.0
    %3910 = vmatpush2.msra.mxu0 0.0
    %3911 = vmatprep.subr.mxu0 0.0
    %3912 = vmatpush2.msra.mxu0 0.0
    %3913 = vmatprep.subr.mxu0 0.0
    %3914 = vmatpush2.msra.mxu0 0.0
    %3915 = vmatprep.subr.mxu0 0.0
    %3916 = vmatpush2.msra.mxu0 0.0
    %3917 = vmatprep.subr.mxu0 0.0
    %3918 = vmatpush2.msra.mxu0 0.0
    %3919 = vmatprep.subr.mxu0 0.0
    %3920 = vmatpush2.msra.mxu0 0.0
    %3921 = vmatprep.mubr.f32.mxu0 0.0
    %3922 = vmatmul.mubr.f32.gmra.mxu0 %v3855
    %v3923 = vpop.f32.mrf.mxu0
    %v3924 = vadd.f32 %v57, %v3923
    %v3925 = vpop.f32.mrf.mxu0
    %3926 = vdwg.mxu0
    %v3927 = vtanh.pop %v3924
    %v3929 = vsel %vm388, %v3848, 0
    %3931 = vmatprep.subr.mxu0 0.0
    %3932 = vmatpush1.msra.mxu0 0.0
    %3933 = vmatprep.subr.mxu0 0.0
    %3934 = vmatpush1.msra.mxu0 0.0
    %3935 = vmatprep.subr.mxu0 0.0
    %3936 = vmatpush1.msra.mxu0 0.0
    %3937 = vmatprep.subr.mxu0 0.0
    %3938 = vmatpush1.msra.mxu0 0.0
    %3939 = vmatprep.subr.mxu0 0.0
    %3940 = vmatpush1.msra.mxu0 0.0
    %3941 = vmatprep.subr.mxu0 0.0
    %3942 = vmatpush1.msra.mxu0 0.0
    %3943 = vmatprep.subr.mxu0 0.0
    %3944 = vmatpush1.msra.mxu0 0.0
    %3945 = vmatprep.subr.mxu0 0.0
    %3946 = vmatpush1.msra.mxu0 0.0
    %3947 = vmatprep.subr.mxu0 0.0
    %3948 = vmatpush1.msra.mxu0 0.0
    %3949 = vmatprep.subr.mxu0 0.0
    %3950 = vmatpush1.msra.mxu0 0.0
    %3951 = vmatprep.subr.mxu0 0.0
    %3952 = vmatpush1.msra.mxu0 0.0
    %3953 = vmatprep.subr.mxu0 0.0
    %3954 = vmatpush1.msra.mxu0 0.0
    %3955 = vmatprep.subr.mxu0 0.0
    %3956 = vmatpush1.msra.mxu0 %v43
    %3957 = vmatprep.subr.mxu0 0.0
    %3958 = vmatpush1.msra.mxu0 %v42
    %3959 = vmatprep.subr.mxu0 0.0
    %3960 = vmatpush1.msra.mxu0 %v41
    %3961 = vmatprep.subr.mxu0 0.0
    %3962 = vmatpush1.msra.mxu0 %v40
    %3963 = vmatprep.subr.mxu0 0.0
    %3964 = vmatpush2.msra.mxu0 0.0
    %3965 = vmatprep.subr.mxu0 0.0
    %3966 = vmatpush2.msra.mxu0 0.0
    %3967 = vmatprep.subr.mxu0 0.0
    %3968 = vmatpush2.msra.mxu0 0.0
    %3969 = vmatprep.subr.mxu0 0.0
    %3970 = vmatpush2.msra.mxu0 0.0
    %3971 = vmatprep.subr.mxu0 0.0
    %3972 = vmatpush2.msra.mxu0 0.0
    %3973 = vmatprep.subr.mxu0 0.0
    %3974 = vmatpush2.msra.mxu0 0.0
    %3975 = vmatprep.subr.mxu0 0.0
    %3976 = vmatpush2.msra.mxu0 0.0
    %3977 = vmatprep.subr.mxu0 0.0
    %3978 = vmatpush2.msra.mxu0 0.0
    %3979 = vmatprep.subr.mxu0 0.0
    %3980 = vmatpush2.msra.mxu0 0.0
    %3981 = vmatprep.subr.mxu0 0.0
    %3982 = vmatpush2.msra.mxu0 0.0
    %3983 = vmatprep.subr.mxu0 0.0
    %3984 = vmatpush2.msra.mxu0 0.0
    %3985 = vmatprep.subr.mxu0 0.0
    %3986 = vmatpush2.msra.mxu0 0.0
    %3987 = vmatprep.subr.mxu0 0.0
    %3988 = vmatpush2.msra.mxu0 0.0
    %3989 = vmatprep.subr.mxu0 0.0
    %3990 = vmatpush2.msra.mxu0 0.0
    %3991 = vmatprep.subr.mxu0 0.0
    %3992 = vmatpush2.msra.mxu0 0.0
    %3993 = vmatprep.subr.mxu0 0.0
    %3994 = vmatpush2.msra.mxu0 0.0
    %3995 = vmatprep.mubr.f32.mxu0 0.0
    %3996 = vmatmul.mubr.f32.gmra.mxu0 %v3929
    %v3997 = vpop.f32.mrf.mxu0
    %v3998 = vadd.f32 0.0, %v3997
    %v3999 = vpop.f32.mrf.mxu0
    %4000 = vdwg.mxu0
    %v4001 = vadd.f32 %v365, %v3998
    %v4002 = vtanh.pop %v4001
    %4004 = vrot.lane.b32.xlu0 %v3927, 32
    %v4005 = vpop.permute.xlu0 %4004
    %v4007 = vsel %vm388, %v4002, %v4005
    %v4009 = vsel %vm465, %v4007, 0
    %4011 = vmatprep.subr.mxu0 0.0
    %4012 = vmatpush1.msra.mxu0 0.0
    %4013 = vmatprep.subr.mxu0 0.0
    %4014 = vmatpush1.msra.mxu0 0.0
    %4015 = vmatprep.subr.mxu0 0.0
    %4016 = vmatpush1.msra.mxu0 0.0
    %4017 = vmatprep.subr.mxu0 0.0
    %4018 = vmatpush1.msra.mxu0 0.0
    %4019 = vmatprep.subr.mxu0 0.0
    %4020 = vmatpush1.msra.mxu0 0.0
    %4021 = vmatprep.subr.mxu0 0.0
    %4022 = vmatpush1.msra.mxu0 0.0
    %4023 = vmatprep.subr.mxu0 0.0
    %4024 = vmatpush1.msra.mxu0 0.0
    %4025 = vmatprep.subr.mxu0 0.0
    %4026 = vmatpush1.msra.mxu0 0.0
    %4027 = vmatprep.subr.mxu0 0.0
    %4028 = vmatpush1.msra.mxu0 %v51
    %4029 = vmatprep.subr.mxu0 0.0
    %4030 = vmatpush1.msra.mxu0 %v50
    %4031 = vmatprep.subr.mxu0 0.0
    %4032 = vmatpush1.msra.mxu0 %v49
    %4033 = vmatprep.subr.mxu0 0.0
    %4034 = vmatpush1.msra.mxu0 %v48
    %4035 = vmatprep.subr.mxu0 0.0
    %4036 = vmatpush1.msra.mxu0 %v47
    %4037 = vmatprep.subr.mxu0 0.0
    %4038 = vmatpush1.msra.mxu0 %v46
    %4039 = vmatprep.subr.mxu0 0.0
    %4040 = vmatpush1.msra.mxu0 %v45
    %4041 = vmatprep.subr.mxu0 0.0
    %4042 = vmatpush1.msra.mxu0 %v44
    %4043 = vmatprep.subr.mxu0 0.0
    %4044 = vmatpush2.msra.mxu0 0.0
    %4045 = vmatprep.subr.mxu0 0.0
    %4046 = vmatpush2.msra.mxu0 0.0
    %4047 = vmatprep.subr.mxu0 0.0
    %4048 = vmatpush2.msra.mxu0 0.0
    %4049 = vmatprep.subr.mxu0 0.0
    %4050 = vmatpush2.msra.mxu0 0.0
    %4051 = vmatprep.subr.mxu0 0.0
    %4052 = vmatpush2.msra.mxu0 0.0
    %4053 = vmatprep.subr.mxu0 0.0
    %4054 = vmatpush2.msra.mxu0 0.0
    %4055 = vmatprep.subr.mxu0 0.0
    %4056 = vmatpush2.msra.mxu0 0.0
    %4057 = vmatprep.subr.mxu0 0.0
    %4058 = vmatpush2.msra.mxu0 0.0
    %4059 = vmatprep.subr.mxu0 0.0
    %4060 = vmatpush2.msra.mxu0 0.0
    %4061 = vmatprep.subr.mxu0 0.0
    %4062 = vmatpush2.msra.mxu0 0.0
    %4063 = vmatprep.subr.mxu0 0.0
    %4064 = vmatpush2.msra.mxu0 0.0
    %4065 = vmatprep.subr.mxu0 0.0
    %4066 = vmatpush2.msra.mxu0 0.0
    %4067 = vmatprep.subr.mxu0 0.0
    %4068 = vmatpush2.msra.mxu0 0.0
    %4069 = vmatprep.subr.mxu0 0.0
    %4070 = vmatpush2.msra.mxu0 0.0
    %4071 = vmatprep.subr.mxu0 0.0
    %4072 = vmatpush2.msra.mxu0 0.0
    %4073 = vmatprep.subr.mxu0 0.0
    %4074 = vmatpush2.msra.mxu0 0.0
    %4075 = vmatprep.mubr.f32.mxu0 0.0
    %4076 = vmatmul.mubr.f32.gmra.mxu0 %v4009
    %v4077 = vpop.f32.mrf.mxu0
    %v4078 = vadd.f32 %v57, %v4077
    %v4079 = vpop.f32.mrf.mxu0
    %4080 = vdwg.mxu0
    %v4081 = vtanh.pop %v4078
    %v4083 = vsel %vm388, %v4002, 0
    %4085 = vmatprep.subr.mxu0 0.0
    %4086 = vmatpush1.msra.mxu0 0.0
    %4087 = vmatprep.subr.mxu0 0.0
    %4088 = vmatpush1.msra.mxu0 0.0
    %4089 = vmatprep.subr.mxu0 0.0
    %4090 = vmatpush1.msra.mxu0 0.0
    %4091 = vmatprep.subr.mxu0 0.0
    %4092 = vmatpush1.msra.mxu0 0.0
    %4093 = vmatprep.subr.mxu0 0.0
    %4094 = vmatpush1.msra.mxu0 0.0
    %4095 = vmatprep.subr.mxu0 0.0
    %4096 = vmatpush1.msra.mxu0 0.0
    %4097 = vmatprep.subr.mxu0 0.0
    %4098 = vmatpush1.msra.mxu0 0.0
    %4099 = vmatprep.subr.mxu0 0.0
    %4100 = vmatpush1.msra.mxu0 0.0
    %4101 = vmatprep.subr.mxu0 0.0
    %4102 = vmatpush1.msra.mxu0 0.0
    %4103 = vmatprep.subr.mxu0 0.0
    %4104 = vmatpush1.msra.mxu0 0.0
    %4105 = vmatprep.subr.mxu0 0.0
    %4106 = vmatpush1.msra.mxu0 0.0
    %4107 = vmatprep.subr.mxu0 0.0
    %4108 = vmatpush1.msra.mxu0 0.0
    %4109 = vmatprep.subr.mxu0 0.0
    %4110 = vmatpush1.msra.mxu0 %v43
    %4111 = vmatprep.subr.mxu0 0.0
    %4112 = vmatpush1.msra.mxu0 %v42
    %4113 = vmatprep.subr.mxu0 0.0
    %4114 = vmatpush1.msra.mxu0 %v41
    %4115 = vmatprep.subr.mxu0 0.0
    %4116 = vmatpush1.msra.mxu0 %v40
    %4117 = vmatprep.subr.mxu0 0.0
    %4118 = vmatpush2.msra.mxu0 0.0
    %4119 = vmatprep.subr.mxu0 0.0
    %4120 = vmatpush2.msra.mxu0 0.0
    %4121 = vmatprep.subr.mxu0 0.0
    %4122 = vmatpush2.msra.mxu0 0.0
    %4123 = vmatprep.subr.mxu0 0.0
    %4124 = vmatpush2.msra.mxu0 0.0
    %4125 = vmatprep.subr.mxu0 0.0
    %4126 = vmatpush2.msra.mxu0 0.0
    %4127 = vmatprep.subr.mxu0 0.0
    %4128 = vmatpush2.msra.mxu0 0.0
    %4129 = vmatprep.subr.mxu0 0.0
    %4130 = vmatpush2.msra.mxu0 0.0
    %4131 = vmatprep.subr.mxu0 0.0
    %4132 = vmatpush2.msra.mxu0 0.0
    %4133 = vmatprep.subr.mxu0 0.0
    %4134 = vmatpush2.msra.mxu0 0.0
    %4135 = vmatprep.subr.mxu0 0.0
    %4136 = vmatpush2.msra.mxu0 0.0
    %4137 = vmatprep.subr.mxu0 0.0
    %4138 = vmatpush2.msra.mxu0 0.0
    %4139 = vmatprep.subr.mxu0 0.0
    %4140 = vmatpush2.msra.mxu0 0.0
    %4141 = vmatprep.subr.mxu0 0.0
    %4142 = vmatpush2.msra.mxu0 0.0
    %4143 = vmatprep.subr.mxu0 0.0
    %4144 = vmatpush2.msra.mxu0 0.0
    %4145 = vmatprep.subr.mxu0 0.0
    %4146 = vmatpush2.msra.mxu0 0.0
    %4147 = vmatprep.subr.mxu0 0.0
    %4148 = vmatpush2.msra.mxu0 0.0
    %4149 = vmatprep.mubr.f32.mxu0 0.0
    %4150 = vmatmul.mubr.f32.gmra.mxu0 %v4083
    %v4151 = vpop.f32.mrf.mxu0
    %v4152 = vadd.f32 0.0, %v4151
    %v4153 = vpop.f32.mrf.mxu0
    %4154 = vdwg.mxu0
    %v4155 = vadd.f32 %v370, %v4152
    %v4156 = vtanh.pop %v4155
    %4158 = vrot.lane.b32.xlu0 %v4081, 32
    %v4159 = vpop.permute.xlu0 %4158
    %v4161 = vsel %vm388, %v4156, %v4159
    %v4163 = vsel %vm465, %v4161, 0
    %4165 = vmatprep.subr.mxu0 0.0
    %4166 = vmatpush1.msra.mxu0 0.0
    %4167 = vmatprep.subr.mxu0 0.0
    %4168 = vmatpush1.msra.mxu0 0.0
    %4169 = vmatprep.subr.mxu0 0.0
    %4170 = vmatpush1.msra.mxu0 0.0
    %4171 = vmatprep.subr.mxu0 0.0
    %4172 = vmatpush1.msra.mxu0 0.0
    %4173 = vmatprep.subr.mxu0 0.0
    %4174 = vmatpush1.msra.mxu0 0.0
    %4175 = vmatprep.subr.mxu0 0.0
    %4176 = vmatpush1.msra.mxu0 0.0
    %4177 = vmatprep.subr.mxu0 0.0
    %4178 = vmatpush1.msra.mxu0 0.0
    %4179 = vmatprep.subr.mxu0 0.0
    %4180 = vmatpush1.msra.mxu0 0.0
    %4181 = vmatprep.subr.mxu0 0.0
    %4182 = vmatpush1.msra.mxu0 %v51
    %4183 = vmatprep.subr.mxu0 0.0
    %4184 = vmatpush1.msra.mxu0 %v50
    %4185 = vmatprep.subr.mxu0 0.0
    %4186 = vmatpush1.msra.mxu0 %v49
    %4187 = vmatprep.subr.mxu0 0.0
    %4188 = vmatpush1.msra.mxu0 %v48
    %4189 = vmatprep.subr.mxu0 0.0
    %4190 = vmatpush1.msra.mxu0 %v47
    %4191 = vmatprep.subr.mxu0 0.0
    %4192 = vmatpush1.msra.mxu0 %v46
    %4193 = vmatprep.subr.mxu0 0.0
    %4194 = vmatpush1.msra.mxu0 %v45
    %4195 = vmatprep.subr.mxu0 0.0
    %4196 = vmatpush1.msra.mxu0 %v44
    %4197 = vmatprep.subr.mxu0 0.0
    %4198 = vmatpush2.msra.mxu0 0.0
    %4199 = vmatprep.subr.mxu0 0.0
    %4200 = vmatpush2.msra.mxu0 0.0
    %4201 = vmatprep.subr.mxu0 0.0
    %4202 = vmatpush2.msra.mxu0 0.0
    %4203 = vmatprep.subr.mxu0 0.0
    %4204 = vmatpush2.msra.mxu0 0.0
    %4205 = vmatprep.subr.mxu0 0.0
    %4206 = vmatpush2.msra.mxu0 0.0
    %4207 = vmatprep.subr.mxu0 0.0
    %4208 = vmatpush2.msra.mxu0 0.0
    %4209 = vmatprep.subr.mxu0 0.0
    %4210 = vmatpush2.msra.mxu0 0.0
    %4211 = vmatprep.subr.mxu0 0.0
    %4212 = vmatpush2.msra.mxu0 0.0
    %4213 = vmatprep.subr.mxu0 0.0
    %4214 = vmatpush2.msra.mxu0 0.0
    %4215 = vmatprep.subr.mxu0 0.0
    %4216 = vmatpush2.msra.mxu0 0.0
    %4217 = vmatprep.subr.mxu0 0.0
    %4218 = vmatpush2.msra.mxu0 0.0
    %4219 = vmatprep.subr.mxu0 0.0
    %4220 = vmatpush2.msra.mxu0 0.0
    %4221 = vmatprep.subr.mxu0 0.0
    %4222 = vmatpush2.msra.mxu0 0.0
    %4223 = vmatprep.subr.mxu0 0.0
    %4224 = vmatpush2.msra.mxu0 0.0
    %4225 = vmatprep.subr.mxu0 0.0
    %4226 = vmatpush2.msra.mxu0 0.0
    %4227 = vmatprep.subr.mxu0 0.0
    %4228 = vmatpush2.msra.mxu0 0.0
    %4229 = vmatprep.mubr.f32.mxu0 0.0
    %4230 = vmatmul.mubr.f32.gmra.mxu0 %v4163
    %v4231 = vpop.f32.mrf.mxu0
    %v4232 = vadd.f32 %v57, %v4231
    %v4233 = vpop.f32.mrf.mxu0
    %4234 = vdwg.mxu0
    %v4235 = vtanh.pop %v4232
    %v4237 = vsel %vm388, %v4156, 0
    %4239 = vmatprep.subr.mxu0 0.0
    %4240 = vmatpush1.msra.mxu0 0.0
    %4241 = vmatprep.subr.mxu0 0.0
    %4242 = vmatpush1.msra.mxu0 0.0
    %4243 = vmatprep.subr.mxu0 0.0
    %4244 = vmatpush1.msra.mxu0 0.0
    %4245 = vmatprep.subr.mxu0 0.0
    %4246 = vmatpush1.msra.mxu0 0.0
    %4247 = vmatprep.subr.mxu0 0.0
    %4248 = vmatpush1.msra.mxu0 0.0
    %4249 = vmatprep.subr.mxu0 0.0
    %4250 = vmatpush1.msra.mxu0 0.0
    %4251 = vmatprep.subr.mxu0 0.0
    %4252 = vmatpush1.msra.mxu0 0.0
    %4253 = vmatprep.subr.mxu0 0.0
    %4254 = vmatpush1.msra.mxu0 0.0
    %4255 = vmatprep.subr.mxu0 0.0
    %4256 = vmatpush1.msra.mxu0 0.0
    %4257 = vmatprep.subr.mxu0 0.0
    %4258 = vmatpush1.msra.mxu0 0.0
    %4259 = vmatprep.subr.mxu0 0.0
    %4260 = vmatpush1.msra.mxu0 0.0
    %4261 = vmatprep.subr.mxu0 0.0
    %4262 = vmatpush1.msra.mxu0 0.0
    %4263 = vmatprep.subr.mxu0 0.0
    %4264 = vmatpush1.msra.mxu0 %v43
    %4265 = vmatprep.subr.mxu0 0.0
    %4266 = vmatpush1.msra.mxu0 %v42
    %4267 = vmatprep.subr.mxu0 0.0
    %4268 = vmatpush1.msra.mxu0 %v41
    %4269 = vmatprep.subr.mxu0 0.0
    %4270 = vmatpush1.msra.mxu0 %v40
    %4271 = vmatprep.subr.mxu0 0.0
    %4272 = vmatpush2.msra.mxu0 0.0
    %4273 = vmatprep.subr.mxu0 0.0
    %4274 = vmatpush2.msra.mxu0 0.0
    %4275 = vmatprep.subr.mxu0 0.0
    %4276 = vmatpush2.msra.mxu0 0.0
    %4277 = vmatprep.subr.mxu0 0.0
    %4278 = vmatpush2.msra.mxu0 0.0
    %4279 = vmatprep.subr.mxu0 0.0
    %4280 = vmatpush2.msra.mxu0 0.0
    %4281 = vmatprep.subr.mxu0 0.0
    %4282 = vmatpush2.msra.mxu0 0.0
    %4283 = vmatprep.subr.mxu0 0.0
    %4284 = vmatpush2.msra.mxu0 0.0
    %4285 = vmatprep.subr.mxu0 0.0
    %4286 = vmatpush2.msra.mxu0 0.0
    %4287 = vmatprep.subr.mxu0 0.0
    %4288 = vmatpush2.msra.mxu0 0.0
    %4289 = vmatprep.subr.mxu0 0.0
    %4290 = vmatpush2.msra.mxu0 0.0
    %4291 = vmatprep.subr.mxu0 0.0
    %4292 = vmatpush2.msra.mxu0 0.0
    %4293 = vmatprep.subr.mxu0 0.0
    %4294 = vmatpush2.msra.mxu0 0.0
    %4295 = vmatprep.subr.mxu0 0.0
    %4296 = vmatpush2.msra.mxu0 0.0
    %4297 = vmatprep.subr.mxu0 0.0
    %4298 = vmatpush2.msra.mxu0 0.0
    %4299 = vmatprep.subr.mxu0 0.0
    %4300 = vmatpush2.msra.mxu0 0.0
    %4301 = vmatprep.subr.mxu0 0.0
    %4302 = vmatpush2.msra.mxu0 0.0
    %4303 = vmatprep.mubr.f32.mxu0 0.0
    %4304 = vmatmul.mubr.f32.gmra.mxu0 %v4237
    %v4305 = vpop.f32.mrf.mxu0
    %v4306 = vadd.f32 0.0, %v4305
    %v4307 = vpop.f32.mrf.mxu0
    %4308 = vdwg.mxu0
    %v4309 = vadd.f32 %v375, %v4306
    %v4310 = vtanh.pop %v4309
    %4312 = vrot.lane.b32.xlu0 %v4235, 32
    %v4313 = vpop.permute.xlu0 %4312
    %v4315 = vsel %vm388, %v4310, %v4313
    %v4317 = vsel %vm465, %v4315, 0
    %4319 = vmatprep.subr.mxu0 0.0
    %4320 = vmatpush1.msra.mxu0 0.0
    %4321 = vmatprep.subr.mxu0 0.0
    %4322 = vmatpush1.msra.mxu0 0.0
    %4323 = vmatprep.subr.mxu0 0.0
    %4324 = vmatpush1.msra.mxu0 0.0
    %4325 = vmatprep.subr.mxu0 0.0
    %4326 = vmatpush1.msra.mxu0 0.0
    %4327 = vmatprep.subr.mxu0 0.0
    %4328 = vmatpush1.msra.mxu0 0.0
    %4329 = vmatprep.subr.mxu0 0.0
    %4330 = vmatpush1.msra.mxu0 0.0
    %4331 = vmatprep.subr.mxu0 0.0
    %4332 = vmatpush1.msra.mxu0 0.0
    %4333 = vmatprep.subr.mxu0 0.0
    %4334 = vmatpush1.msra.mxu0 0.0
    %4335 = vmatprep.subr.mxu0 0.0
    %4336 = vmatpush1.msra.mxu0 %v51
    %4337 = vmatprep.subr.mxu0 0.0
    %4338 = vmatpush1.msra.mxu0 %v50
    %4339 = vmatprep.subr.mxu0 0.0
    %4340 = vmatpush1.msra.mxu0 %v49
    %4341 = vmatprep.subr.mxu0 0.0
    %4342 = vmatpush1.msra.mxu0 %v48
    %4343 = vmatprep.subr.mxu0 0.0
    %4344 = vmatpush1.msra.mxu0 %v47
    %4345 = vmatprep.subr.mxu0 0.0
    %4346 = vmatpush1.msra.mxu0 %v46
    %4347 = vmatprep.subr.mxu0 0.0
    %4348 = vmatpush1.msra.mxu0 %v45
    %4349 = vmatprep.subr.mxu0 0.0
    %4350 = vmatpush1.msra.mxu0 %v44
    %4351 = vmatprep.subr.mxu0 0.0
    %4352 = vmatpush2.msra.mxu0 0.0
    %4353 = vmatprep.subr.mxu0 0.0
    %4354 = vmatpush2.msra.mxu0 0.0
    %4355 = vmatprep.subr.mxu0 0.0
    %4356 = vmatpush2.msra.mxu0 0.0
    %4357 = vmatprep.subr.mxu0 0.0
    %4358 = vmatpush2.msra.mxu0 0.0
    %4359 = vmatprep.subr.mxu0 0.0
    %4360 = vmatpush2.msra.mxu0 0.0
    %4361 = vmatprep.subr.mxu0 0.0
    %4362 = vmatpush2.msra.mxu0 0.0
    %4363 = vmatprep.subr.mxu0 0.0
    %4364 = vmatpush2.msra.mxu0 0.0
    %4365 = vmatprep.subr.mxu0 0.0
    %4366 = vmatpush2.msra.mxu0 0.0
    %4367 = vmatprep.subr.mxu0 0.0
    %4368 = vmatpush2.msra.mxu0 0.0
    %4369 = vmatprep.subr.mxu0 0.0
    %4370 = vmatpush2.msra.mxu0 0.0
    %4371 = vmatprep.subr.mxu0 0.0
    %4372 = vmatpush2.msra.mxu0 0.0
    %4373 = vmatprep.subr.mxu0 0.0
    %4374 = vmatpush2.msra.mxu0 0.0
    %4375 = vmatprep.subr.mxu0 0.0
    %4376 = vmatpush2.msra.mxu0 0.0
    %4377 = vmatprep.subr.mxu0 0.0
    %4378 = vmatpush2.msra.mxu0 0.0
    %4379 = vmatprep.subr.mxu0 0.0
    %4380 = vmatpush2.msra.mxu0 0.0
    %4381 = vmatprep.subr.mxu0 0.0
    %4382 = vmatpush2.msra.mxu0 0.0
    %4383 = vmatprep.mubr.f32.mxu0 0.0
    %4384 = vmatmul.mubr.f32.gmra.mxu0 %v4317
    %v4385 = vpop.f32.mrf.mxu0
    %v4386 = vadd.f32 %v57, %v4385
    %v4387 = vpop.f32.mrf.mxu0
    %4388 = vdwg.mxu0
    %v4389 = vtanh.pop %v4386
    %v4391 = vsel %vm388, %v4310, 0
    %4393 = vmatprep.subr.mxu0 0.0
    %4394 = vmatpush1.msra.mxu0 0.0
    %4395 = vmatprep.subr.mxu0 0.0
    %4396 = vmatpush1.msra.mxu0 0.0
    %4397 = vmatprep.subr.mxu0 0.0
    %4398 = vmatpush1.msra.mxu0 0.0
    %4399 = vmatprep.subr.mxu0 0.0
    %4400 = vmatpush1.msra.mxu0 0.0
    %4401 = vmatprep.subr.mxu0 0.0
    %4402 = vmatpush1.msra.mxu0 0.0
    %4403 = vmatprep.subr.mxu0 0.0
    %4404 = vmatpush1.msra.mxu0 0.0
    %4405 = vmatprep.subr.mxu0 0.0
    %4406 = vmatpush1.msra.mxu0 0.0
    %4407 = vmatprep.subr.mxu0 0.0
    %4408 = vmatpush1.msra.mxu0 0.0
    %4409 = vmatprep.subr.mxu0 0.0
    %4410 = vmatpush1.msra.mxu0 0.0
    %4411 = vmatprep.subr.mxu0 0.0
    %4412 = vmatpush1.msra.mxu0 0.0
    %4413 = vmatprep.subr.mxu0 0.0
    %4414 = vmatpush1.msra.mxu0 0.0
    %4415 = vmatprep.subr.mxu0 0.0
    %4416 = vmatpush1.msra.mxu0 0.0
    %4417 = vmatprep.subr.mxu0 0.0
    %4418 = vmatpush1.msra.mxu0 %v43
    %4419 = vmatprep.subr.mxu0 0.0
    %4420 = vmatpush1.msra.mxu0 %v42
    %4421 = vmatprep.subr.mxu0 0.0
    %4422 = vmatpush1.msra.mxu0 %v41
    %4423 = vmatprep.subr.mxu0 0.0
    %4424 = vmatpush1.msra.mxu0 %v40
    %4425 = vmatprep.subr.mxu0 0.0
    %4426 = vmatpush2.msra.mxu0 0.0
    %4427 = vmatprep.subr.mxu0 0.0
    %4428 = vmatpush2.msra.mxu0 0.0
    %4429 = vmatprep.subr.mxu0 0.0
    %4430 = vmatpush2.msra.mxu0 0.0
    %4431 = vmatprep.subr.mxu0 0.0
    %4432 = vmatpush2.msra.mxu0 0.0
    %4433 = vmatprep.subr.mxu0 0.0
    %4434 = vmatpush2.msra.mxu0 0.0
    %4435 = vmatprep.subr.mxu0 0.0
    %4436 = vmatpush2.msra.mxu0 0.0
    %4437 = vmatprep.subr.mxu0 0.0
    %4438 = vmatpush2.msra.mxu0 0.0
    %4439 = vmatprep.subr.mxu0 0.0
    %4440 = vmatpush2.msra.mxu0 0.0
    %4441 = vmatprep.subr.mxu0 0.0
    %4442 = vmatpush2.msra.mxu0 0.0
    %4443 = vmatprep.subr.mxu0 0.0
    %4444 = vmatpush2.msra.mxu0 0.0
    %4445 = vmatprep.subr.mxu0 0.0
    %4446 = vmatpush2.msra.mxu0 0.0
    %4447 = vmatprep.subr.mxu0 0.0
    %4448 = vmatpush2.msra.mxu0 0.0
    %4449 = vmatprep.subr.mxu0 0.0
    %4450 = vmatpush2.msra.mxu0 0.0
    %4451 = vmatprep.subr.mxu0 0.0
    %4452 = vmatpush2.msra.mxu0 0.0
    %4453 = vmatprep.subr.mxu0 0.0
    %4454 = vmatpush2.msra.mxu0 0.0
    %4455 = vmatprep.subr.mxu0 0.0
    %4456 = vmatpush2.msra.mxu0 0.0
    %4457 = vmatprep.mubr.f32.mxu0 0.0
    %4458 = vmatmul.mubr.f32.gmra.mxu0 %v4391
    %v4459 = vpop.f32.mrf.mxu0
    %v4460 = vadd.f32 0.0, %v4459
    %v4461 = vpop.f32.mrf.mxu0
    %4462 = vdwg.mxu0
    %v4463 = vadd.f32 %v380, %v4460
    %v4464 = vtanh.pop %v4463
    %4466 = vrot.lane.b32.xlu0 %v4389, 32
    %v4467 = vpop.permute.xlu0 %4466
    %v4469 = vsel %vm388, %v4464, %v4467
    %v4471 = vsel %vm465, %v4469, 0
    %4473 = vmatprep.subr.mxu0 0.0
    %4474 = vmatpush1.msra.mxu0 0.0
    %4475 = vmatprep.subr.mxu0 0.0
    %4476 = vmatpush1.msra.mxu0 0.0
    %4477 = vmatprep.subr.mxu0 0.0
    %4478 = vmatpush1.msra.mxu0 0.0
    %4479 = vmatprep.subr.mxu0 0.0
    %4480 = vmatpush1.msra.mxu0 0.0
    %4481 = vmatprep.subr.mxu0 0.0
    %4482 = vmatpush1.msra.mxu0 0.0
    %4483 = vmatprep.subr.mxu0 0.0
    %4484 = vmatpush1.msra.mxu0 0.0
    %4485 = vmatprep.subr.mxu0 0.0
    %4486 = vmatpush1.msra.mxu0 0.0
    %4487 = vmatprep.subr.mxu0 0.0
    %4488 = vmatpush1.msra.mxu0 0.0
    %4489 = vmatprep.subr.mxu0 0.0
    %4490 = vmatpush1.msra.mxu0 %v51
    %4491 = vmatprep.subr.mxu0 0.0
    %4492 = vmatpush1.msra.mxu0 %v50
    %4493 = vmatprep.subr.mxu0 0.0
    %4494 = vmatpush1.msra.mxu0 %v49
    %4495 = vmatprep.subr.mxu0 0.0
    %4496 = vmatpush1.msra.mxu0 %v48
    %4497 = vmatprep.subr.mxu0 0.0
    %4498 = vmatpush1.msra.mxu0 %v47
    %4499 = vmatprep.subr.mxu0 0.0
    %4500 = vmatpush1.msra.mxu0 %v46
    %4501 = vmatprep.subr.mxu0 0.0
    %4502 = vmatpush1.msra.mxu0 %v45
    %4503 = vmatprep.subr.mxu0 0.0
    %4504 = vmatpush1.msra.mxu0 %v44
    %4505 = vmatprep.subr.mxu0 0.0
    %4506 = vmatpush2.msra.mxu0 0.0
    %4507 = vmatprep.subr.mxu0 0.0
    %4508 = vmatpush2.msra.mxu0 0.0
    %4509 = vmatprep.subr.mxu0 0.0
    %4510 = vmatpush2.msra.mxu0 0.0
    %4511 = vmatprep.subr.mxu0 0.0
    %4512 = vmatpush2.msra.mxu0 0.0
    %4513 = vmatprep.subr.mxu0 0.0
    %4514 = vmatpush2.msra.mxu0 0.0
    %4515 = vmatprep.subr.mxu0 0.0
    %4516 = vmatpush2.msra.mxu0 0.0
    %4517 = vmatprep.subr.mxu0 0.0
    %4518 = vmatpush2.msra.mxu0 0.0
    %4519 = vmatprep.subr.mxu0 0.0
    %4520 = vmatpush2.msra.mxu0 0.0
    %4521 = vmatprep.subr.mxu0 0.0
    %4522 = vmatpush2.msra.mxu0 0.0
    %4523 = vmatprep.subr.mxu0 0.0
    %4524 = vmatpush2.msra.mxu0 0.0
    %4525 = vmatprep.subr.mxu0 0.0
    %4526 = vmatpush2.msra.mxu0 0.0
    %4527 = vmatprep.subr.mxu0 0.0
    %4528 = vmatpush2.msra.mxu0 0.0
    %4529 = vmatprep.subr.mxu0 0.0
    %4530 = vmatpush2.msra.mxu0 0.0
    %4531 = vmatprep.subr.mxu0 0.0
    %4532 = vmatpush2.msra.mxu0 0.0
    %4533 = vmatprep.subr.mxu0 0.0
    %4534 = vmatpush2.msra.mxu0 0.0
    %4535 = vmatprep.subr.mxu0 0.0
    %4536 = vmatpush2.msra.mxu0 0.0
    %4537 = vmatprep.mubr.f32.mxu0 0.0
    %4538 = vmatmul.mubr.f32.gmra.mxu0 %v4471
    %v4539 = vpop.f32.mrf.mxu0
    %v4540 = vadd.f32 %v57, %v4539
    %v4541 = vpop.f32.mrf.mxu0
    %4542 = vdwg.mxu0
    %v4543 = vtanh.pop %v4540
    %v4545 = vsel %vm388, %v4464, 0
    %4547 = vmatprep.subr.mxu0 0.0
    %4548 = vmatpush1.msra.mxu0 0.0
    %4549 = vmatprep.subr.mxu0 0.0
    %4550 = vmatpush1.msra.mxu0 0.0
    %4551 = vmatprep.subr.mxu0 0.0
    %4552 = vmatpush1.msra.mxu0 0.0
    %4553 = vmatprep.subr.mxu0 0.0
    %4554 = vmatpush1.msra.mxu0 0.0
    %4555 = vmatprep.subr.mxu0 0.0
    %4556 = vmatpush1.msra.mxu0 0.0
    %4557 = vmatprep.subr.mxu0 0.0
    %4558 = vmatpush1.msra.mxu0 0.0
    %4559 = vmatprep.subr.mxu0 0.0
    %4560 = vmatpush1.msra.mxu0 0.0
    %4561 = vmatprep.subr.mxu0 0.0
    %4562 = vmatpush1.msra.mxu0 0.0
    %4563 = vmatprep.subr.mxu0 0.0
    %4564 = vmatpush1.msra.mxu0 0.0
    %4565 = vmatprep.subr.mxu0 0.0
    %4566 = vmatpush1.msra.mxu0 0.0
    %4567 = vmatprep.subr.mxu0 0.0
    %4568 = vmatpush1.msra.mxu0 0.0
    %4569 = vmatprep.subr.mxu0 0.0
    %4570 = vmatpush1.msra.mxu0 0.0
    %4571 = vmatprep.subr.mxu0 0.0
    %4572 = vmatpush1.msra.mxu0 %v43
    %4573 = vmatprep.subr.mxu0 0.0
    %4574 = vmatpush1.msra.mxu0 %v42
    %4575 = vmatprep.subr.mxu0 0.0
    %4576 = vmatpush1.msra.mxu0 %v41
    %4577 = vmatprep.subr.mxu0 0.0
    %4578 = vmatpush1.msra.mxu0 %v40
    %4579 = vmatprep.subr.mxu0 0.0
    %4580 = vmatpush2.msra.mxu0 0.0
    %4581 = vmatprep.subr.mxu0 0.0
    %4582 = vmatpush2.msra.mxu0 0.0
    %4583 = vmatprep.subr.mxu0 0.0
    %4584 = vmatpush2.msra.mxu0 0.0
    %4585 = vmatprep.subr.mxu0 0.0
    %4586 = vmatpush2.msra.mxu0 0.0
    %4587 = vmatprep.subr.mxu0 0.0
    %4588 = vmatpush2.msra.mxu0 0.0
    %4589 = vmatprep.subr.mxu0 0.0
    %4590 = vmatpush2.msra.mxu0 0.0
    %4591 = vmatprep.subr.mxu0 0.0
    %4592 = vmatpush2.msra.mxu0 0.0
    %4593 = vmatprep.subr.mxu0 0.0
    %4594 = vmatpush2.msra.mxu0 0.0
    %4595 = vmatprep.subr.mxu0 0.0
    %4596 = vmatpush2.msra.mxu0 0.0
    %4597 = vmatprep.subr.mxu0 0.0
    %4598 = vmatpush2.msra.mxu0 0.0
    %4599 = vmatprep.subr.mxu0 0.0
    %4600 = vmatpush2.msra.mxu0 0.0
    %4601 = vmatprep.subr.mxu0 0.0
    %4602 = vmatpush2.msra.mxu0 0.0
    %4603 = vmatprep.subr.mxu0 0.0
    %4604 = vmatpush2.msra.mxu0 0.0
    %4605 = vmatprep.subr.mxu0 0.0
    %4606 = vmatpush2.msra.mxu0 0.0
    %4607 = vmatprep.subr.mxu0 0.0
    %4608 = vmatpush2.msra.mxu0 0.0
    %4609 = vmatprep.subr.mxu0 0.0
    %4610 = vmatpush2.msra.mxu0 0.0
    %4611 = vmatprep.mubr.f32.mxu0 0.0
    %4612 = vmatmul.mubr.f32.gmra.mxu0 %v4545
    %v4613 = vpop.f32.mrf.mxu0
    %v4614 = vadd.f32 0.0, %v4613
    %v4615 = vpop.f32.mrf.mxu0
    %4616 = vdwg.mxu0
    %v4617 = vadd.f32 %v385, %v4614
    %v4618 = vtanh.pop %v4617
    %4620 = vrot.lane.b32.xlu0 %v4543, 32
    %v4621 = vpop.permute.xlu0 %4620
    %v4623 = vsel %vm388, %v4618, %v4621
    %v4625 = vsel %vm465, %v4623, 0
    %4627 = vmatprep.subr.mxu0 0.0
    %4628 = vmatpush1.msra.mxu0 0.0
    %4629 = vmatprep.subr.mxu0 0.0
    %4630 = vmatpush1.msra.mxu0 0.0
    %4631 = vmatprep.subr.mxu0 0.0
    %4632 = vmatpush1.msra.mxu0 0.0
    %4633 = vmatprep.subr.mxu0 0.0
    %4634 = vmatpush1.msra.mxu0 0.0
    %4635 = vmatprep.subr.mxu0 0.0
    %4636 = vmatpush1.msra.mxu0 0.0
    %4637 = vmatprep.subr.mxu0 0.0
    %4638 = vmatpush1.msra.mxu0 0.0
    %4639 = vmatprep.subr.mxu0 0.0
    %4640 = vmatpush1.msra.mxu0 0.0
    %4641 = vmatprep.subr.mxu0 0.0
    %4642 = vmatpush1.msra.mxu0 0.0
    %4643 = vmatprep.subr.mxu0 0.0
    %4644 = vmatpush1.msra.mxu0 %v51
    %4645 = vmatprep.subr.mxu0 0.0
    %4646 = vmatpush1.msra.mxu0 %v50
    %4647 = vmatprep.subr.mxu0 0.0
    %4648 = vmatpush1.msra.mxu0 %v49
    %4649 = vmatprep.subr.mxu0 0.0
    %4650 = vmatpush1.msra.mxu0 %v48
    %4651 = vmatprep.subr.mxu0 0.0
    %4652 = vmatpush1.msra.mxu0 %v47
    %4653 = vmatprep.subr.mxu0 0.0
    %4654 = vmatpush1.msra.mxu0 %v46
    %4655 = vmatprep.subr.mxu0 0.0
    %4656 = vmatpush1.msra.mxu0 %v45
    %4657 = vmatprep.subr.mxu0 0.0
    %4658 = vmatpush1.msra.mxu0 %v44
    %4659 = vmatprep.subr.mxu0 0.0
    %4660 = vmatpush2.msra.mxu0 0.0
    %4661 = vmatprep.subr.mxu0 0.0
    %4662 = vmatpush2.msra.mxu0 0.0
    %4663 = vmatprep.subr.mxu0 0.0
    %4664 = vmatpush2.msra.mxu0 0.0
    %4665 = vmatprep.subr.mxu0 0.0
    %4666 = vmatpush2.msra.mxu0 0.0
    %4667 = vmatprep.subr.mxu0 0.0
    %4668 = vmatpush2.msra.mxu0 0.0
    %4669 = vmatprep.subr.mxu0 0.0
    %4670 = vmatpush2.msra.mxu0 0.0
    %4671 = vmatprep.subr.mxu0 0.0
    %4672 = vmatpush2.msra.mxu0 0.0
    %4673 = vmatprep.subr.mxu0 0.0
    %4674 = vmatpush2.msra.mxu0 0.0
    %4675 = vmatprep.subr.mxu0 0.0
    %4676 = vmatpush2.msra.mxu0 0.0
    %4677 = vmatprep.subr.mxu0 0.0
    %4678 = vmatpush2.msra.mxu0 0.0
    %4679 = vmatprep.subr.mxu0 0.0
    %4680 = vmatpush2.msra.mxu0 0.0
    %4681 = vmatprep.subr.mxu0 0.0
    %4682 = vmatpush2.msra.mxu0 0.0
    %4683 = vmatprep.subr.mxu0 0.0
    %4684 = vmatpush2.msra.mxu0 0.0
    %4685 = vmatprep.subr.mxu0 0.0
    %4686 = vmatpush2.msra.mxu0 0.0
    %4687 = vmatprep.subr.mxu0 0.0
    %4688 = vmatpush2.msra.mxu0 0.0
    %4689 = vmatprep.subr.mxu0 0.0
    %4690 = vmatpush2.msra.mxu0 0.0
    %4691 = vmatprep.mubr.f32.mxu0 0.0
    %4692 = vmatmul.mubr.f32.gmra.mxu0 %v4625
    %v4693 = vpop.f32.mrf.mxu0
    %v4694 = vadd.f32 %v57, %v4693
    %v4695 = vpop.f32.mrf.mxu0
    %4696 = vdwg.mxu0
    %v4697 = vtanh.pop %v4694
    %4698 = vrot.lane.b32.xlu0 %v847, 64
    %v4699 = vpop.permute.xlu0 %4698
    %4701 = vrot.lane.b32.xlu0 %v1001, 96
    %v4702 = vpop.permute.xlu0 %4701
    %4704 = vrot.lane.b32.xlu0 %v1463, 64
    %v4705 = vpop.permute.xlu0 %4704
    %4707 = vrot.lane.b32.xlu0 %v1617, 96
    %v4708 = vpop.permute.xlu0 %4707
    %4710 = vrot.lane.b32.xlu0 %v2079, 64
    %v4711 = vpop.permute.xlu0 %4710
    %4713 = vrot.lane.b32.xlu0 %v2233, 96
    %v4714 = vpop.permute.xlu0 %4713
    %4716 = vrot.lane.b32.xlu0 %v2695, 64
    %v4717 = vpop.permute.xlu0 %4716
    %4719 = vrot.lane.b32.xlu0 %v2849, 96
    %v4720 = vpop.permute.xlu0 %4719
    %v4722 = vsel %vm388, %v539, %v771
    %v4723 = vsel %vm465, %v4722, %v4699
    %vm4724 = vcmask 785408
    %v4725 = vsel %vm4724, %v4723, %v4702
    %v4726 = vsel %vm388, %v1155, %v1387
    %v4727 = vsel %vm465, %v4726, %v4705
    %v4728 = vsel %vm4724, %v4727, %v4708
    %v4729 = vsel %vm388, %v1771, %v2003
    %v4730 = vsel %vm465, %v4729, %v4711
    %v4731 = vsel %vm4724, %v4730, %v4714
    %v4732 = vsel %vm388, %v2387, %v2619
    %v4733 = vsel %vm465, %v4732, %v4717
    %v4734 = vsel %vm4724, %v4733, %v4720
    %4735 = vrot.lane.b32.xlu0 %v3311, 64
    %v4736 = vpop.permute.xlu0 %4735
    %4738 = vrot.lane.b32.xlu0 %v3465, 96
    %v4739 = vpop.permute.xlu0 %4738
    %4741 = vrot.lane.b32.xlu0 %v3927, 64
    %v4742 = vpop.permute.xlu0 %4741
    %4744 = vrot.lane.b32.xlu0 %v4081, 96
    %v4745 = vpop.permute.xlu0 %4744
    %4747 = vrot.lane.b32.xlu0 %v4543, 64
    %v4748 = vpop.permute.xlu0 %4747
    %4751 = vrot.lane.b32.xlu0 %v4697, 96
    %v4752 = vpop.permute.xlu0 %4751
    %v4754 = vsel %vm388, %v3003, %v3235
    %v4755 = vsel %vm465, %v4754, %v4736
    %v4756 = vsel %vm4724, %v4755, %v4739
    %v4757 = vsel %vm388, %v3619, %v3851
    %v4758 = vsel %vm465, %v4757, %v4742
    %v4759 = vsel %vm4724, %v4758, %v4745
    %v4760 = vsel %vm388, %v4235, %v4467
    %v4761 = vsel %vm465, %v4760, %v4748
    %v4762 = vsel %vm4724, %v4761, %v4752
    %v4763 = vld [vmem:[%s6] sm:$0xff]
    %v4764 = vld [vmem:[%s6 + $0x8] sm:$0xff]
    %v4765 = vld [vmem:[%s6 + $0x10] sm:$0xff]
    %v4766 = vld [vmem:[%s6 + $0x18] sm:$0xff]
    %v4767 = vld [vmem:[%s6 + $0x20] sm:$0xff]
    %v4768 = vld [vmem:[%s6 + $0x28] sm:$0xff]
    %v4769 = vld [vmem:[%s6 + $0x30] sm:$0xff]
    %v4770 = vld [vmem:[%s6 + $0x38] sm:$0xff]
    %v4771 = vld [vmem:[%s6 + $0x40] sm:$0xff]
    %v4772 = vld [vmem:[%s6 + $0x48] sm:$0xff]
    %v4773 = vld [vmem:[%s6 + $0x50] sm:$0xff]
    %v4774 = vld [vmem:[%s6 + $0x58] sm:$0xff]
    %v4775 = vld [vmem:[%s6 + $0x60] sm:$0xff]
    %v4776 = vld [vmem:[%s6 + $0x68] sm:$0xff]
    %v4777 = vld [vmem:[%s6 + $0x70] sm:$0xff]
    %v4778 = vld [vmem:[%s6 + $0x78] sm:$0xff]
    %v4779 = vld [vmem:[%s6 + $0x80] sm:$0xff]
    %v4780 = vld [vmem:[%s6 + $0x88] sm:$0xff]
    %v4781 = vld [vmem:[%s6 + $0x90] sm:$0xff]
    %v4782 = vld [vmem:[%s6 + $0x98] sm:$0xff]
    %v4783 = vld [vmem:[%s6 + $0xa0] sm:$0xff]
    %v4784 = vld [vmem:[%s6 + $0xa8] sm:$0xff]
    %v4785 = vld [vmem:[%s6 + $0xb0] sm:$0xff]
    %v4786 = vld [vmem:[%s6 + $0xb8] sm:$0xff]
    %v4787 = vld [vmem:[%s6 + $0xc0] sm:$0xff]
    %v4788 = vld [vmem:[%s6 + $0xc8] sm:$0xff]
    %v4789 = vld [vmem:[%s6 + $0xd0] sm:$0xff]
    %v4790 = vld [vmem:[%s6 + $0xd8] sm:$0xff]
    %v4791 = vld [vmem:[%s6 + $0xe0] sm:$0xff]
    %v4792 = vld [vmem:[%s6 + $0xe8] sm:$0xff]
    %v4793 = vld [vmem:[%s6 + $0xf0] sm:$0xff]
    %v4794 = vld [vmem:[%s6 + $0xf8] sm:$0xff]
    %v4795 = vld [vmem:[%s6 + $0x100] sm:$0xff]
    %v4796 = vld [vmem:[%s6 + $0x108] sm:$0xff]
    %v4797 = vld [vmem:[%s6 + $0x110] sm:$0xff]
    %v4798 = vld [vmem:[%s6 + $0x118] sm:$0xff]
    %v4799 = vld [vmem:[%s6 + $0x120] sm:$0xff]
    %v4800 = vld [vmem:[%s6 + $0x128] sm:$0xff]
    %v4801 = vld [vmem:[%s6 + $0x130] sm:$0xff]
    %v4802 = vld [vmem:[%s6 + $0x138] sm:$0xff]
    %v4803 = vld [vmem:[%s6 + $0x140] sm:$0xff]
    %v4804 = vld [vmem:[%s6 + $0x148] sm:$0xff]
    %v4805 = vld [vmem:[%s6 + $0x150] sm:$0xff]
    %v4806 = vld [vmem:[%s6 + $0x158] sm:$0xff]
    %v4807 = vld [vmem:[%s6 + $0x160] sm:$0xff]
    %v4808 = vld [vmem:[%s6 + $0x168] sm:$0xff]
    %v4809 = vld [vmem:[%s6 + $0x170] sm:$0xff]
    %v4810 = vld [vmem:[%s6 + $0x178] sm:$0xff]
    %v4811 = vld [vmem:[%s6 + $0x180] sm:$0xff]
    %v4812 = vld [vmem:[%s6 + $0x188] sm:$0xff]
    %v4813 = vld [vmem:[%s6 + $0x190] sm:$0xff]
    %v4814 = vld [vmem:[%s6 + $0x198] sm:$0xff]
    %v4815 = vld [vmem:[%s6 + $0x1a0] sm:$0xff]
    %v4816 = vld [vmem:[%s6 + $0x1a8] sm:$0xff]
    %v4817 = vld [vmem:[%s6 + $0x1b0] sm:$0xff]
    %v4818 = vld [vmem:[%s6 + $0x1b8] sm:$0xff]
    %v4819 = vld [vmem:[%s6 + $0x1c0] sm:$0xff]
    %v4820 = vld [vmem:[%s6 + $0x1c8] sm:$0xff]
    %v4821 = vld [vmem:[%s6 + $0x1d0] sm:$0xff]
    %v4822 = vld [vmem:[%s6 + $0x1d8] sm:$0xff]
    %v4823 = vld [vmem:[%s6 + $0x1e0] sm:$0xff]
    %v4824 = vld [vmem:[%s6 + $0x1e8] sm:$0xff]
    %v4825 = vld [vmem:[%s6 + $0x1f0] sm:$0xff]
    %v4826 = vld [vmem:[%s6 + $0x1f8] sm:$0xff]
    %v4827 = vld [vmem:[%s6 + $0x200] sm:$0xff]
    %v4828 = vld [vmem:[%s6 + $0x208] sm:$0xff]
    %v4829 = vld [vmem:[%s6 + $0x210] sm:$0xff]
    %v4830 = vld [vmem:[%s6 + $0x218] sm:$0xff]
    %v4831 = vld [vmem:[%s6 + $0x220] sm:$0xff]
    %v4832 = vld [vmem:[%s6 + $0x228] sm:$0xff]
    %v4833 = vld [vmem:[%s6 + $0x230] sm:$0xff]
    %v4834 = vld [vmem:[%s6 + $0x238] sm:$0xff]
    %v4835 = vld [vmem:[%s6 + $0x240] sm:$0xff]
    %v4836 = vld [vmem:[%s6 + $0x248] sm:$0xff]
    %v4837 = vld [vmem:[%s6 + $0x250] sm:$0xff]
    %v4838 = vld [vmem:[%s6 + $0x258] sm:$0xff]
    %v4839 = vld [vmem:[%s6 + $0x260] sm:$0xff]
    %v4840 = vld [vmem:[%s6 + $0x268] sm:$0xff]
    %v4841 = vld [vmem:[%s6 + $0x270] sm:$0xff]
    %v4842 = vld [vmem:[%s6 + $0x278] sm:$0xff]
    %v4843 = vld [vmem:[%s6 + $0x280] sm:$0xff]
    %v4844 = vld [vmem:[%s6 + $0x288] sm:$0xff]
    %v4845 = vld [vmem:[%s6 + $0x290] sm:$0xff]
    %v4846 = vld [vmem:[%s6 + $0x298] sm:$0xff]
    %v4847 = vld [vmem:[%s6 + $0x2a0] sm:$0xff]
    %v4848 = vld [vmem:[%s6 + $0x2a8] sm:$0xff]
    %v4849 = vld [vmem:[%s6 + $0x2b0] sm:$0xff]
    %v4850 = vld [vmem:[%s6 + $0x2b8] sm:$0xff]
    %v4851 = vld [vmem:[%s6 + $0x2c0] sm:$0xff]
    %v4852 = vld [vmem:[%s6 + $0x2c8] sm:$0xff]
    %v4853 = vld [vmem:[%s6 + $0x2d0] sm:$0xff]
    %v4854 = vld [vmem:[%s6 + $0x2d8] sm:$0xff]
    %v4855 = vld [vmem:[%s6 + $0x2e0] sm:$0xff]
    %v4856 = vld [vmem:[%s6 + $0x2e8] sm:$0xff]
    %v4857 = vld [vmem:[%s6 + $0x2f0] sm:$0xff]
    %v4858 = vld [vmem:[%s6 + $0x2f8] sm:$0xff]
    %v4859 = vld [vmem:[%s6 + $0x300] sm:$0xff]
    %v4860 = vld [vmem:[%s6 + $0x308] sm:$0xff]
    %v4861 = vld [vmem:[%s6 + $0x310] sm:$0xff]
    %v4862 = vld [vmem:[%s6 + $0x318] sm:$0xff]
    %v4863 = vld [vmem:[%s6 + $0x320] sm:$0xff]
    %v4864 = vld [vmem:[%s6 + $0x328] sm:$0xff]
    %v4865 = vld [vmem:[%s6 + $0x330] sm:$0xff]
    %v4866 = vld [vmem:[%s6 + $0x338] sm:$0xff]
    %v4867 = vld [vmem:[%s6 + $0x340] sm:$0xff]
    %v4868 = vld [vmem:[%s6 + $0x348] sm:$0xff]
    %v4869 = vld [vmem:[%s6 + $0x350] sm:$0xff]
    %v4870 = vld [vmem:[%s6 + $0x358] sm:$0xff]
    %v4871 = vld [vmem:[%s6 + $0x360] sm:$0xff]
    %v4872 = vld [vmem:[%s6 + $0x368] sm:$0xff]
    %v4873 = vld [vmem:[%s6 + $0x370] sm:$0xff]
    %v4874 = vld [vmem:[%s6 + $0x378] sm:$0xff]
    %v4875 = vld [vmem:[%s7] sm:$0x1]
    %v4877 = vlaneseq
    %v4878 = vshrl.u32 %v4877, 7
    %v4879 = vsub.s32 0, %v4878
    %v4880 = vrot.slane %v4875, %v4879
    %4882 = vmatprep.subr.mxu0 0.0
    %4883 = vmatpush1.msra.mxu0 %v4778
    %4884 = vmatprep.subr.mxu0 0.0
    %4885 = vmatpush1.msra.mxu0 %v4777
    %4886 = vmatprep.subr.mxu0 0.0
    %4887 = vmatpush1.msra.mxu0 %v4776
    %4888 = vmatprep.subr.mxu0 0.0
    %4889 = vmatpush1.msra.mxu0 %v4775
    %4890 = vmatprep.subr.mxu0 0.0
    %4891 = vmatpush1.msra.mxu0 %v4774
    %4892 = vmatprep.subr.mxu0 0.0
    %4893 = vmatpush1.msra.mxu0 %v4773
    %4894 = vmatprep.subr.mxu0 0.0
    %4895 = vmatpush1.msra.mxu0 %v4772
    %4896 = vmatprep.subr.mxu0 0.0
    %4897 = vmatpush1.msra.mxu0 %v4771
    %4898 = vmatprep.subr.mxu0 0.0
    %4899 = vmatpush1.msra.mxu0 %v4770
    %4900 = vmatprep.subr.mxu0 0.0
    %4901 = vmatpush1.msra.mxu0 %v4769
    %4902 = vmatprep.subr.mxu0 0.0
    %4903 = vmatpush1.msra.mxu0 %v4768
    %4904 = vmatprep.subr.mxu0 0.0
    %4905 = vmatpush1.msra.mxu0 %v4767
    %4906 = vmatprep.subr.mxu0 0.0
    %4907 = vmatpush1.msra.mxu0 %v4766
    %4908 = vmatprep.subr.mxu0 0.0
    %4909 = vmatpush1.msra.mxu0 %v4765
    %4910 = vmatprep.subr.mxu0 0.0
    %4911 = vmatpush1.msra.mxu0 %v4764
    %4912 = vmatprep.subr.mxu0 0.0
    %4913 = vmatpush1.msra.mxu0 %v4763
    %4914 = vmatprep.subr.mxu0 0.0
    %4915 = vmatpush2.msra.mxu0 %v4794
    %4916 = vmatprep.subr.mxu0 0.0
    %4917 = vmatpush2.msra.mxu0 %v4793
    %4918 = vmatprep.subr.mxu0 0.0
    %4919 = vmatpush2.msra.mxu0 %v4792
    %4920 = vmatprep.subr.mxu0 0.0
    %4921 = vmatpush2.msra.mxu0 %v4791
    %4922 = vmatprep.subr.mxu0 0.0
    %4923 = vmatpush2.msra.mxu0 %v4790
    %4924 = vmatprep.subr.mxu0 0.0
    %4925 = vmatpush2.msra.mxu0 %v4789
    %4926 = vmatprep.subr.mxu0 0.0
    %4927 = vmatpush2.msra.mxu0 %v4788
    %4928 = vmatprep.subr.mxu0 0.0
    %4929 = vmatpush2.msra.mxu0 %v4787
    %4930 = vmatprep.subr.mxu0 0.0
    %4931 = vmatpush2.msra.mxu0 %v4786
    %4932 = vmatprep.subr.mxu0 0.0
    %4933 = vmatpush2.msra.mxu0 %v4785
    %4934 = vmatprep.subr.mxu0 0.0
    %4935 = vmatpush2.msra.mxu0 %v4784
    %4936 = vmatprep.subr.mxu0 0.0
    %4937 = vmatpush2.msra.mxu0 %v4783
    %4938 = vmatprep.subr.mxu0 0.0
    %4939 = vmatpush2.msra.mxu0 %v4782
    %4940 = vmatprep.subr.mxu0 0.0
    %4941 = vmatpush2.msra.mxu0 %v4781
    %4942 = vmatprep.subr.mxu0 0.0
    %4943 = vmatpush2.msra.mxu0 %v4780
    %4944 = vmatprep.subr.mxu0 0.0
    %4945 = vmatpush2.msra.mxu0 %v4779
    %4946 = vmatprep.mubr.f32.mxu0 %v4728
    %4947 = vmatmul.mubr.f32.gmra.mxu0 %v4725
    %v4948 = vpop.f32.mrf.mxu0
    %v4949 = vadd.f32 %v4880, %v4948
    %v4950 = vpop.f32.mrf.mxu0
    %4951 = vdwg.mxu0
    %4952 = vmatprep.subr.mxu0 0.0
    %4953 = vmatpush1.msra.mxu0 %v4810
    %4954 = vmatprep.subr.mxu0 0.0
    %4955 = vmatpush1.msra.mxu0 %v4809
    %4956 = vmatprep.subr.mxu0 0.0
    %4957 = vmatpush1.msra.mxu0 %v4808
    %4958 = vmatprep.subr.mxu0 0.0
    %4959 = vmatpush1.msra.mxu0 %v4807
    %4960 = vmatprep.subr.mxu0 0.0
    %4961 = vmatpush1.msra.mxu0 %v4806
    %4962 = vmatprep.subr.mxu0 0.0
    %4963 = vmatpush1.msra.mxu0 %v4805
    %4964 = vmatprep.subr.mxu0 0.0
    %4965 = vmatpush1.msra.mxu0 %v4804
    %4966 = vmatprep.subr.mxu0 0.0
    %4967 = vmatpush1.msra.mxu0 %v4803
    %4968 = vmatprep.subr.mxu0 0.0
    %4969 = vmatpush1.msra.mxu0 %v4802
    %4970 = vmatprep.subr.mxu0 0.0
    %4971 = vmatpush1.msra.mxu0 %v4801
    %4972 = vmatprep.subr.mxu0 0.0
    %4973 = vmatpush1.msra.mxu0 %v4800
    %4974 = vmatprep.subr.mxu0 0.0
    %4975 = vmatpush1.msra.mxu0 %v4799
    %4976 = vmatprep.subr.mxu0 0.0
    %4977 = vmatpush1.msra.mxu0 %v4798
    %4978 = vmatprep.subr.mxu0 0.0
    %4979 = vmatpush1.msra.mxu0 %v4797
    %4980 = vmatprep.subr.mxu0 0.0
    %4981 = vmatpush1.msra.mxu0 %v4796
    %4982 = vmatprep.subr.mxu0 0.0
    %4983 = vmatpush1.msra.mxu0 %v4795
    %4984 = vmatprep.subr.mxu0 0.0
    %4985 = vmatpush2.msra.mxu0 %v4826
    %4986 = vmatprep.subr.mxu0 0.0
    %4987 = vmatpush2.msra.mxu0 %v4825
    %4988 = vmatprep.subr.mxu0 0.0
    %4989 = vmatpush2.msra.mxu0 %v4824
    %4990 = vmatprep.subr.mxu0 0.0
    %4991 = vmatpush2.msra.mxu0 %v4823
    %4992 = vmatprep.subr.mxu0 0.0
    %4993 = vmatpush2.msra.mxu0 %v4822
    %4994 = vmatprep.subr.mxu0 0.0
    %4995 = vmatpush2.msra.mxu0 %v4821
    %4996 = vmatprep.subr.mxu0 0.0
    %4997 = vmatpush2.msra.mxu0 %v4820
    %4998 = vmatprep.subr.mxu0 0.0
    %4999 = vmatpush2.msra.mxu0 %v4819
    %5000 = vmatprep.subr.mxu0 0.0
    %5001 = vmatpush2.msra.mxu0 %v4818
    %5002 = vmatprep.subr.mxu0 0.0
    %5003 = vmatpush2.msra.mxu0 %v4817
    %5004 = vmatprep.subr.mxu0 0.0
    %5005 = vmatpush2.msra.mxu0 %v4816
    %5006 = vmatprep.subr.mxu0 0.0
    %5007 = vmatpush2.msra.mxu0 %v4815
    %5008 = vmatprep.subr.mxu0 0.0
    %5009 = vmatpush2.msra.mxu0 %v4814
    %5010 = vmatprep.subr.mxu0 0.0
    %5011 = vmatpush2.msra.mxu0 %v4813
    %5012 = vmatprep.subr.mxu0 0.0
    %5013 = vmatpush2.msra.mxu0 %v4812
    %5014 = vmatprep.subr.mxu0 0.0
    %5015 = vmatpush2.msra.mxu0 %v4811
    %5016 = vmatprep.mubr.f32.mxu0 %v4734
    %5017 = vmatmul.mubr.f32.gmra.mxu0 %v4731
    %v5018 = vpop.f32.mrf.mxu0
    %v5019 = vadd.f32 %v4949, %v5018
    %v5020 = vpop.f32.mrf.mxu0
    %5021 = vdwg.mxu0
    %5022 = vmatprep.subr.mxu0 0.0
    %5023 = vmatpush1.msra.mxu0 %v4842
    %5024 = vmatprep.subr.mxu0 0.0
    %5025 = vmatpush1.msra.mxu0 %v4841
    %5026 = vmatprep.subr.mxu0 0.0
    %5027 = vmatpush1.msra.mxu0 %v4840
    %5028 = vmatprep.subr.mxu0 0.0
    %5029 = vmatpush1.msra.mxu0 %v4839
    %5030 = vmatprep.subr.mxu0 0.0
    %5031 = vmatpush1.msra.mxu0 %v4838
    %5032 = vmatprep.subr.mxu0 0.0
    %5033 = vmatpush1.msra.mxu0 %v4837
    %5034 = vmatprep.subr.mxu0 0.0
    %5035 = vmatpush1.msra.mxu0 %v4836
    %5036 = vmatprep.subr.mxu0 0.0
    %5037 = vmatpush1.msra.mxu0 %v4835
    %5038 = vmatprep.subr.mxu0 0.0
    %5039 = vmatpush1.msra.mxu0 %v4834
    %5040 = vmatprep.subr.mxu0 0.0
    %5041 = vmatpush1.msra.mxu0 %v4833
    %5042 = vmatprep.subr.mxu0 0.0
    %5043 = vmatpush1.msra.mxu0 %v4832
    %5044 = vmatprep.subr.mxu0 0.0
    %5045 = vmatpush1.msra.mxu0 %v4831
    %5046 = vmatprep.subr.mxu0 0.0
    %5047 = vmatpush1.msra.mxu0 %v4830
    %5048 = vmatprep.subr.mxu0 0.0
    %5049 = vmatpush1.msra.mxu0 %v4829
    %5050 = vmatprep.subr.mxu0 0.0
    %5051 = vmatpush1.msra.mxu0 %v4828
    %5052 = vmatprep.subr.mxu0 0.0
    %5053 = vmatpush1.msra.mxu0 %v4827
    %5054 = vmatprep.subr.mxu0 0.0
    %5055 = vmatpush2.msra.mxu0 %v4858
    %5056 = vmatprep.subr.mxu0 0.0
    %5057 = vmatpush2.msra.mxu0 %v4857
    %5058 = vmatprep.subr.mxu0 0.0
    %5059 = vmatpush2.msra.mxu0 %v4856
    %5060 = vmatprep.subr.mxu0 0.0
    %5061 = vmatpush2.msra.mxu0 %v4855
    %5062 = vmatprep.subr.mxu0 0.0
    %5063 = vmatpush2.msra.mxu0 %v4854
    %5064 = vmatprep.subr.mxu0 0.0
    %5065 = vmatpush2.msra.mxu0 %v4853
    %5066 = vmatprep.subr.mxu0 0.0
    %5067 = vmatpush2.msra.mxu0 %v4852
    %5068 = vmatprep.subr.mxu0 0.0
    %5069 = vmatpush2.msra.mxu0 %v4851
    %5070 = vmatprep.subr.mxu0 0.0
    %5071 = vmatpush2.msra.mxu0 %v4850
    %5072 = vmatprep.subr.mxu0 0.0
    %5073 = vmatpush2.msra.mxu0 %v4849
    %5074 = vmatprep.subr.mxu0 0.0
    %5075 = vmatpush2.msra.mxu0 %v4848
    %5076 = vmatprep.subr.mxu0 0.0
    %5077 = vmatpush2.msra.mxu0 %v4847
    %5078 = vmatprep.subr.mxu0 0.0
    %5079 = vmatpush2.msra.mxu0 %v4846
    %5080 = vmatprep.subr.mxu0 0.0
    %5081 = vmatpush2.msra.mxu0 %v4845
    %5082 = vmatprep.subr.mxu0 0.0
    %5083 = vmatpush2.msra.mxu0 %v4844
    %5084 = vmatprep.subr.mxu0 0.0
    %5085 = vmatpush2.msra.mxu0 %v4843
    %5086 = vmatprep.mubr.f32.mxu0 %v4759
    %5087 = vmatmul.mubr.f32.gmra.mxu0 %v4756
    %v5088 = vpop.f32.mrf.mxu0
    %v5089 = vadd.f32 %v5019, %v5088
    %v5090 = vpop.f32.mrf.mxu0
    %5091 = vdwg.mxu0
    %5092 = vmatprep.subr.mxu0 0.0
    %5093 = vmatpush1.msra.mxu0 %v4874
    %5094 = vmatprep.subr.mxu0 0.0
    %5095 = vmatpush1.msra.mxu0 %v4873
    %5096 = vmatprep.subr.mxu0 0.0
    %5097 = vmatpush1.msra.mxu0 %v4872
    %5098 = vmatprep.subr.mxu0 0.0
    %5099 = vmatpush1.msra.mxu0 %v4871
    %5100 = vmatprep.subr.mxu0 0.0
    %5101 = vmatpush1.msra.mxu0 %v4870
    %5102 = vmatprep.subr.mxu0 0.0
    %5103 = vmatpush1.msra.mxu0 %v4869
    %5104 = vmatprep.subr.mxu0 0.0
    %5105 = vmatpush1.msra.mxu0 %v4868
    %5106 = vmatprep.subr.mxu0 0.0
    %5107 = vmatpush1.msra.mxu0 %v4867
    %5108 = vmatprep.subr.mxu0 0.0
    %5109 = vmatpush1.msra.mxu0 %v4866
    %5110 = vmatprep.subr.mxu0 0.0
    %5111 = vmatpush1.msra.mxu0 %v4865
    %5112 = vmatprep.subr.mxu0 0.0
    %5113 = vmatpush1.msra.mxu0 %v4864
    %5114 = vmatprep.subr.mxu0 0.0
    %5115 = vmatpush1.msra.mxu0 %v4863
    %5116 = vmatprep.subr.mxu0 0.0
    %5117 = vmatpush1.msra.mxu0 %v4862
    %5118 = vmatprep.subr.mxu0 0.0
    %5119 = vmatpush1.msra.mxu0 %v4861
    %5120 = vmatprep.subr.mxu0 0.0
    %5121 = vmatpush1.msra.mxu0 %v4860
    %5122 = vmatprep.subr.mxu0 0.0
    %5123 = vmatpush1.msra.mxu0 %v4859
    %5124 = vmatprep.subr.mxu0 0.0
    %5125 = vmatpush2.msra.mxu0 0.0
    %5126 = vmatprep.subr.mxu0 0.0
    %5127 = vmatpush2.msra.mxu0 0.0
    %5128 = vmatprep.subr.mxu0 0.0
    %5129 = vmatpush2.msra.mxu0 0.0
    %5130 = vmatprep.subr.mxu0 0.0
    %5131 = vmatpush2.msra.mxu0 0.0
    %5132 = vmatprep.subr.mxu0 0.0
    %5133 = vmatpush2.msra.mxu0 0.0
    %5134 = vmatprep.subr.mxu0 0.0
    %5135 = vmatpush2.msra.mxu0 0.0
    %5136 = vmatprep.subr.mxu0 0.0
    %5137 = vmatpush2.msra.mxu0 0.0
    %5138 = vmatprep.subr.mxu0 0.0
    %5139 = vmatpush2.msra.mxu0 0.0
    %5140 = vmatprep.subr.mxu0 0.0
    %5141 = vmatpush2.msra.mxu0 0.0
    %5142 = vmatprep.subr.mxu0 0.0
    %5143 = vmatpush2.msra.mxu0 0.0
    %5144 = vmatprep.subr.mxu0 0.0
    %5145 = vmatpush2.msra.mxu0 0.0
    %5146 = vmatprep.subr.mxu0 0.0
    %5147 = vmatpush2.msra.mxu0 0.0
    %5148 = vmatprep.subr.mxu0 0.0
    %5149 = vmatpush2.msra.mxu0 0.0
    %5150 = vmatprep.subr.mxu0 0.0
    %5151 = vmatpush2.msra.mxu0 0.0
    %5152 = vmatprep.subr.mxu0 0.0
    %5153 = vmatpush2.msra.mxu0 0.0
    %5154 = vmatprep.subr.mxu0 0.0
    %5155 = vmatpush2.msra.mxu0 0.0
    %5156 = vmatprep.mubr.f32.mxu0 0.0
    %5157 = vmatmul.mubr.f32.gmra.mxu0 %v4762
    %v5158 = vpop.f32.mrf.mxu0
    %v5159 = vadd.f32 %v5089, %v5158
    %v5160 = vpop.f32.mrf.mxu0
    %5161 = vdwg.mxu0
    %v5162 = vld [vmem:[%s8] sm:$0xff]
    %v5163 = vld [vmem:[%s8 + $0x8] sm:$0xff]
    %v5164 = vld [vmem:[%s8 + $0x10] sm:$0xf]
    %v5165 = vld [vmem:[%s9] sm:$0x1]
    %v5167 = vlaneseq
    %v5168 = vshrl.u32 %v5167, 7
    %v5169 = vsub.s32 0, %v5168
    %v5170 = vrot.slane %v5165, %v5169
    %vm5172 = vcmask 162816
    %v5174 = vsel %vm5172, %v5159, 0
    %v5177 = vsel %vm179, %v5164, 0
    %5179 = vmatprep.subr.mxu0 0.0
    %5180 = vmatpush1.msra.mxu0 0.0
    %5181 = vmatprep.subr.mxu0 0.0
    %5182 = vmatpush1.msra.mxu0 0.0
    %5183 = vmatprep.subr.mxu0 0.0
    %5184 = vmatpush1.msra.mxu0 0.0
    %5185 = vmatprep.subr.mxu0 0.0
    %5186 = vmatpush1.msra.mxu0 0.0
    %5187 = vmatprep.subr.mxu0 0.0
    %5188 = vmatpush1.msra.mxu0 0.0
    %5189 = vmatprep.subr.mxu0 0.0
    %5190 = vmatpush1.msra.mxu0 0.0
    %5191 = vmatprep.subr.mxu0 0.0
    %5192 = vmatpush1.msra.mxu0 0.0
    %5193 = vmatprep.subr.mxu0 0.0
    %5194 = vmatpush1.msra.mxu0 0.0
    %5195 = vmatprep.subr.mxu0 0.0
    %5196 = vmatpush1.msra.mxu0 0.0
    %5197 = vmatprep.subr.mxu0 0.0
    %5198 = vmatpush1.msra.mxu0 0.0
    %5199 = vmatprep.subr.mxu0 0.0
    %5200 = vmatpush1.msra.mxu0 0.0
    %5201 = vmatprep.subr.mxu0 0.0
    %5202 = vmatpush1.msra.mxu0 0.0
    %5203 = vmatprep.subr.mxu0 0.0
    %5204 = vmatpush1.msra.mxu0 0.0
    %5205 = vmatprep.subr.mxu0 0.0
    %5206 = vmatpush1.msra.mxu0 %v5177
    %5207 = vmatprep.subr.mxu0 0.0
    %5208 = vmatpush1.msra.mxu0 %v5163
    %5209 = vmatprep.subr.mxu0 0.0
    %5210 = vmatpush1.msra.mxu0 %v5162
    %5211 = vmatprep.subr.mxu0 0.0
    %5212 = vmatpush2.msra.mxu0 0.0
    %5213 = vmatprep.subr.mxu0 0.0
    %5214 = vmatpush2.msra.mxu0 0.0
    %5215 = vmatprep.subr.mxu0 0.0
    %5216 = vmatpush2.msra.mxu0 0.0
    %5217 = vmatprep.subr.mxu0 0.0
    %5218 = vmatpush2.msra.mxu0 0.0
    %5219 = vmatprep.subr.mxu0 0.0
    %5220 = vmatpush2.msra.mxu0 0.0
    %5221 = vmatprep.subr.mxu0 0.0
    %5222 = vmatpush2.msra.mxu0 0.0
    %5223 = vmatprep.subr.mxu0 0.0
    %5224 = vmatpush2.msra.mxu0 0.0
    %5225 = vmatprep.subr.mxu0 0.0
    %5226 = vmatpush2.msra.mxu0 0.0
    %5227 = vmatprep.subr.mxu0 0.0
    %5228 = vmatpush2.msra.mxu0 0.0
    %5229 = vmatprep.subr.mxu0 0.0
    %5230 = vmatpush2.msra.mxu0 0.0
    %5231 = vmatprep.subr.mxu0 0.0
    %5232 = vmatpush2.msra.mxu0 0.0
    %5233 = vmatprep.subr.mxu0 0.0
    %5234 = vmatpush2.msra.mxu0 0.0
    %5235 = vmatprep.subr.mxu0 0.0
    %5236 = vmatpush2.msra.mxu0 0.0
    %5237 = vmatprep.subr.mxu0 0.0
    %5238 = vmatpush2.msra.mxu0 0.0
    %5239 = vmatprep.subr.mxu0 0.0
    %5240 = vmatpush2.msra.mxu0 0.0
    %5241 = vmatprep.subr.mxu0 0.0
    %5242 = vmatpush2.msra.mxu0 0.0
    %5243 = vmatprep.mubr.f32.mxu0 0.0
    %5244 = vmatmul.mubr.f32.gmra.mxu0 %v5174
    %v5245 = vpop.f32.mrf.mxu0
    %v5246 = vadd.f32 %v5170, %v5245
    %v5247 = vpop.f32.mrf.mxu0
    %5248 = vdwg.mxu0
    %vm5249 = vcmask 80896
    %5250 = vst.msk [vmem:[#allocation2] sm:$0xff] %vm5249, %v5246
    // Predicated region
    $region42: #{rnn_forward.1} parent=1 // pred_check
      _
    $region43: #{rnn_forward.1} parent=1 // pred_check_branch
      %5252 = sbr.rel (0) target = $region45
    $region44: #{rnn_forward.1} parent=1 // pred_region
      %s5254 = ssub.s32 128, 128
      %5255 = vsyncadd [#allocation3], %s5254
      %s5257 = sshll.u32 [#allocation2], 4
      %s5258 = int_to_ptr.vmem [resolvable:$true] %s5257
      %5260 = dma.vmem_to_hbm [thread:$0]  %s5258, 128, %s10, [#allocation3]
    $region45: #{rnn_forward.1} parent=1 // pred_fallthru
      _
    // Predicated region
    $region46: #{rnn_forward.1} parent=1 // pred_check
      _
    $region47: #{rnn_forward.1} parent=1 // pred_check_branch
      %5262 = sbr.rel (0) target = $region49
    $region48: #{rnn_forward.1} parent=1 // pred_region
      %5263 = dma.done [#allocation3], 128
    $region49: #{rnn_forward.1} parent=1 // pred_fallthru
      _
    %5264 = vsyncpa [#allocation3], 1

</llo_original>
